<compile_context>
chip_gen: v5e
topology: v5e:2x2
jax: 0.10.0
libtpu: 0.0.40
codegen_flags: <defaults>
</compile_context>

<pallas_src>
import math
import functools

import jax
import jax.numpy as jnp
from jax import lax
from jax.experimental import pallas as pl
from jax.experimental.pallas import tpu as pltpu

NUM_HEADS = 4
LN_EPS = 1e-5
_INV_SQRT2 = 1.0 / math.sqrt(2.0)


def _self_attention_kernel(
    x_ref,        # (bb, C, S)   input block, channel-major (as stored in HBM)
    ln_w_ref,     # (1, C)
    ln_b_ref,     # (1, C)
    wqkv_ref,     # (C, 3C)      fused in-projection (scale folded into Q part)
    bqkv_ref,     # (1, 3C)
    wo_ref,       # (C, C)
    bo_ref,       # (1, C)
    wl_ref,       # (C, C)       shared Linear
    bl_ref,       # (1, C)
    o_ref,        # (bb, C, S)   output block, channel-major
    xbuf_ref,     # VMEM (bb*S, C) scratch: transposed input slab
    attn_ref,     # VMEM (bb*S, C) scratch: per-head attention assembly slab
):
    bb, C, S = x_ref.shape
    hd = C // NUM_HEADS

    # ---- in-kernel (C,S) -> (S,C) transpose of each batch into one row slab ----
    for i in range(bb):
        xbuf_ref[i * S:(i + 1) * S, :] = x_ref[i].T          # (S, C)

    x = xbuf_ref[...]                                        # (bb*S, C)
    ln_w = ln_w_ref[...]
    ln_b = ln_b_ref[...]

    def layernorm(v):
        # single-pass stats: var = E[v^2] - mu^2 (biased, matches nn.LayerNorm)
        mu = jnp.mean(v, axis=-1, keepdims=True)
        msq = jnp.mean(v * v, axis=-1, keepdims=True)
        var = msq - mu * mu
        return (v - mu) * lax.rsqrt(var + LN_EPS) * ln_w + ln_b

    # ---- first LayerNorm ----
    x_ln = layernorm(x)

    # ---- fused QKV in-projection (single MXU push; 1/sqrt(hd) already folded) ----
    qkv = jnp.dot(x_ln, wqkv_ref[...],
                  preferred_element_type=jnp.float32) + bqkv_ref[...]   # (bb*S, 3C)

    # ---- per (batch, head) attention; heads written straight into the slab ----
    for i in range(bb):
        r0 = i * S
        for h in range(NUM_HEADS):
            lo = h * hd
            qh = qkv[r0:r0 + S, lo:lo + hd]                  # (S, hd)  already scaled
            kh = qkv[r0:r0 + S, C + lo:C + lo + hd]          # (S, hd)
            vh = qkv[r0:r0 + S, 2 * C + lo:2 * C + lo + hd]  # (S, hd)
            sc = jnp.dot(qh, kh.T, preferred_element_type=jnp.float32)  # (S, S)
            sc = sc - jnp.max(sc, axis=-1, keepdims=True)
            p = jnp.exp(sc)
            p = p * pl.reciprocal(jnp.sum(p, axis=-1, keepdims=True), approx=True)
            attn_ref[r0:r0 + S, lo:lo + hd] = jnp.dot(
                p, vh, preferred_element_type=jnp.float32)

    # ---- output projection + residual ----
    attn = jnp.dot(attn_ref[...], wo_ref[...],
                   preferred_element_type=jnp.float32) + bo_ref[...]
    attn_val = attn + x

    # ---- second LayerNorm (shared params) ----
    y = layernorm(attn_val)

    # ---- Linear -> GELU(exact) -> Linear (shared weights) + residual ----
    y = jnp.dot(y, wl_ref[...], preferred_element_type=jnp.float32) + bl_ref[...]
    y = 0.5 * y * (1.0 + lax.erf(y * _INV_SQRT2))            # exact GELU (PyTorch default)
    y = jnp.dot(y, wl_ref[...], preferred_element_type=jnp.float32) + bl_ref[...]
    out = y + attn_val                                       # (bb*S, C)

    # ---- store directly in channel-major (C, S) layout; no wrapper transpose ----
    for i in range(bb):
        o_ref[i] = out[i * S:(i + 1) * S, :].T               # (C, S)


def _prepare_params(params):
    """Fuse QKV weights and fold the 1/sqrt(head_dim) scale (trace-time only)."""
    (ln_w, ln_b, wq, wk, wv, bq, bk, bv, wo, bo, wl, bl) = params
    c = wq.shape[0]
    scale = 1.0 / math.sqrt(c // NUM_HEADS)
    w_qkv = jnp.concatenate([wq * scale, wk, wv], axis=1)    # (C, 3C)
    b_qkv = jnp.concatenate([bq * scale, bk, bv], axis=1)    # (1, 3C)
    return ln_w, ln_b, w_qkv, b_qkv, wo, bo, wl, bl


def self_attention_pallas(x_nchw, params):
    """x_nchw: (b, c, h, w) float32 -> (b, c, h, w) float32."""
    b, c, h, w = x_nchw.shape
    s = h * w
    assert c % NUM_HEADS == 0
    x_bcs = x_nchw.reshape(b, c, s)          # contiguous reshape: no data movement

    ln_w, ln_b, w_qkv, b_qkv, wo, bo, wl, bl = _prepare_params(params)

    # Largest batch block (divisor of b) with at most ~256 flattened rows per step.
    bb = 1
    for cand in range(1, b + 1):
        if b % cand == 0 and cand * s <= 256:
            bb = cand
    grid = (b // bb,)

    def _rep(shape):
        n = len(shape)
        return pl.BlockSpec(shape, lambda i: (0,) * n)

    out_bcs = pl.pallas_call(
        _self_attention_kernel,
        out_shape=jax.ShapeDtypeStruct((b, c, s), jnp.float32),
        grid_spec=pltpu.PrefetchScalarGridSpec(
            num_scalar_prefetch=0,
            grid=grid,
            in_specs=[
                pl.BlockSpec((bb, c, s), lambda i: (i, 0, 0)),   # x
                _rep((1, c)), _rep((1, c)),                      # ln_w, ln_b
                _rep((c, 3 * c)), _rep((1, 3 * c)),              # w_qkv, b_qkv
                _rep((c, c)), _rep((1, c)),                      # wo, bo
                _rep((c, c)), _rep((1, c)),                      # wl, bl
            ],
            out_specs=pl.BlockSpec((bb, c, s), lambda i: (i, 0, 0)),
            scratch_shapes=[
                pltpu.VMEM((bb * s, c), jnp.float32),            # transposed-x slab
                pltpu.VMEM((bb * s, c), jnp.float32),            # attention slab
            ],
        ),
        compiler_params=pltpu.CompilerParams(
            dimension_semantics=("parallel",)),
    )(x_bcs, ln_w, ln_b, w_qkv, b_qkv, wo, bo, wl, bl)

    return out_bcs.reshape(b, c, h, w)       # contiguous reshape: no data movement


def init_params(key, channels):
    """Deterministic synthetic parameters matching the nn.Module shapes."""
    c = channels
    keys = jax.random.split(key, 8)
    # MultiheadAttention in_proj: (3C, C) weight + (3C,) bias, split into q/k/v.
    in_proj_w = jax.random.normal(keys[0], (3 * c, c), jnp.float32) * 0.05
    in_proj_b = jax.random.normal(keys[1], (3 * c,), jnp.float32) * 0.02
    wq = in_proj_w[0 * c:1 * c].T            # transpose so kernel does x @ W
    wk = in_proj_w[1 * c:2 * c].T
    wv = in_proj_w[2 * c:3 * c].T
    bq = in_proj_b[0 * c:1 * c].reshape(1, c)
    bk = in_proj_b[1 * c:2 * c].reshape(1, c)
    bv = in_proj_b[2 * c:3 * c].reshape(1, c)
    # out_proj: Linear(C, C)
    wo = (jax.random.normal(keys[2], (c, c), jnp.float32) * 0.05).T
    bo = (jax.random.normal(keys[3], (c,), jnp.float32) * 0.02).reshape(1, c)
    # LayerNorm([C]) default-style init
    ln_w = jnp.ones((1, c), jnp.float32)
    ln_b = jnp.zeros((1, c), jnp.float32)
    # shared Linear(C, C)
    wl = (jax.random.normal(keys[4], (c, c), jnp.float32) * 0.05).T
    bl = (jax.random.normal(keys[5], (c,), jnp.float32) * 0.02).reshape(1, c)
    return (ln_w, ln_b, wq, wk, wv, bq, bk, bv, wo, bo, wl, bl)


if __name__ == "__main__":
    batch, channels, size = 2, 32, 8         # channels divisible by 4 heads; seq = 64
    key = jax.random.PRNGKey(0)
    kx, kp = jax.random.split(key)
    x = jax.random.normal(kx, (batch, channels, size, size), jnp.float32)
    params = init_params(kp, channels)

    fn = jax.jit(functools.partial(self_attention_pallas))
    out = fn(x, params)
    jax.block_until_ready(out)
    assert out.shape == (batch, channels, size, size)
    assert jnp.all(jnp.isfinite(out))
    print("KERNEL_OK")
</pallas_src>

<mosaic_0001>
module attributes {stable_mosaic.version = 11 : i64} {
  func.func @_self_attention_kernel(%arg0: i32, %arg1: memref<2x32x64xf32, #tpu.memory_space<vmem>>, %arg2: memref<1x32xf32, #tpu.memory_space<vmem>>, %arg3: memref<1x32xf32, #tpu.memory_space<vmem>>, %arg4: memref<32x96xf32, #tpu.memory_space<vmem>>, %arg5: memref<1x96xf32, #tpu.memory_space<vmem>>, %arg6: memref<32x32xf32, #tpu.memory_space<vmem>>, %arg7: memref<1x32xf32, #tpu.memory_space<vmem>>, %arg8: memref<32x32xf32, #tpu.memory_space<vmem>>, %arg9: memref<1x32xf32, #tpu.memory_space<vmem>>, %arg10: memref<2x32x64xf32, #tpu.memory_space<vmem>>, %arg11: memref<128x32xf32, #tpu.memory_space<vmem>>, %arg12: memref<128x32xf32, #tpu.memory_space<vmem>>) attributes {dimension_semantics = [#tpu.dimension_semantics<parallel>], iteration_bounds = array<i64: 1>, scalar_prefetch = 0 : i64, scratch_operands = 2 : i64, tpu.core_type = #tpu.core_type<tc>, window_params = [{transform_indices = @transform_0, window_bounds = array<i64: 2, 32, 64>}, {pipeline_mode = #tpu.pipeline_mode<synchronous>, transform_indices = @transform_1, window_bounds = array<i64: 1, 32>}, {pipeline_mode = #tpu.pipeline_mode<synchronous>, transform_indices = @transform_2, window_bounds = array<i64: 1, 32>}, {pipeline_mode = #tpu.pipeline_mode<synchronous>, transform_indices = @transform_3, window_bounds = array<i64: 32, 96>}, {pipeline_mode = #tpu.pipeline_mode<synchronous>, transform_indices = @transform_4, window_bounds = array<i64: 1, 96>}, {pipeline_mode = #tpu.pipeline_mode<synchronous>, transform_indices = @transform_5, window_bounds = array<i64: 32, 32>}, {pipeline_mode = #tpu.pipeline_mode<synchronous>, transform_indices = @transform_6, window_bounds = array<i64: 1, 32>}, {pipeline_mode = #tpu.pipeline_mode<synchronous>, transform_indices = @transform_7, window_bounds = array<i64: 32, 32>}, {pipeline_mode = #tpu.pipeline_mode<synchronous>, transform_indices = @transform_8, window_bounds = array<i64: 1, 32>}, {transform_indices = @transform_9, window_bounds = array<i64: 2, 32, 64>}]} {
    %c0 = arith.constant 0 : index
    %c0_0 = arith.constant 0 : index
    %c0_1 = arith.constant 0 : index
    %0 = vector.load %arg1[%c0, %c0_0, %c0_1] : memref<2x32x64xf32, #tpu.memory_space<vmem>>, vector<1x32x64xf32>
    %1 = vector.shape_cast %0 : vector<1x32x64xf32> to vector<32x64xf32>
    %2 = tpu.transpose %1, [1, 0] : vector<32x64xf32> -> vector<64x32xf32>
    %c0_2 = arith.constant 0 : index
    %c0_3 = arith.constant 0 : index
    %3 = vector.load %arg11[%c0_2, %c0_3] : memref<128x32xf32, #tpu.memory_space<vmem>>, vector<64x32xf32>
    tpu.vector_store %arg11[%c0_2, %c0_3], %2 {strides = array<i32>} : memref<128x32xf32, #tpu.memory_space<vmem>>, vector<64x32xf32>,
    %c1 = arith.constant 1 : index
    %c0_4 = arith.constant 0 : index
    %c0_5 = arith.constant 0 : index
    %4 = vector.load %arg1[%c1, %c0_4, %c0_5] : memref<2x32x64xf32, #tpu.memory_space<vmem>>, vector<1x32x64xf32>
    %5 = vector.shape_cast %4 : vector<1x32x64xf32> to vector<32x64xf32>
    %6 = tpu.transpose %5, [1, 0] : vector<32x64xf32> -> vector<64x32xf32>
    %c64 = arith.constant 64 : index
    %c0_6 = arith.constant 0 : index
    %7 = vector.load %arg11[%c64, %c0_6] : memref<128x32xf32, #tpu.memory_space<vmem>>, vector<64x32xf32>
    tpu.vector_store %arg11[%c64, %c0_6], %6 {strides = array<i32>} : memref<128x32xf32, #tpu.memory_space<vmem>>, vector<64x32xf32>,
    %c0_7 = arith.constant 0 : index
    %c0_8 = arith.constant 0 : index
    %8 = vector.load %arg11[%c0_7, %c0_8] : memref<128x32xf32, #tpu.memory_space<vmem>>, vector<128x32xf32>
    %c0_9 = arith.constant 0 : index
    %c0_10 = arith.constant 0 : index
    %9 = vector.load %arg2[%c0_9, %c0_10] : memref<1x32xf32, #tpu.memory_space<vmem>>, vector<1x32xf32>
    %c0_11 = arith.constant 0 : index
    %c0_12 = arith.constant 0 : index
    %10 = vector.load %arg3[%c0_11, %c0_12] : memref<1x32xf32, #tpu.memory_space<vmem>>, vector<1x32xf32>
    %cst = arith.constant dense<0.000000e+00> : vector<128xf32>
    %11 = vector.multi_reduction <add>, %8, %cst [1] : vector<128x32xf32> to vector<128xf32>
    %12 = vector.shape_cast %11 : vector<128xf32> to vector<128x1xf32>
    %cst_13 = arith.constant 3.200000e+01 : f32
    %13 = vector.broadcast %cst_13 : f32 to vector<128x1xf32>
    %14 = arith.divf %12, %13 : vector<128x1xf32>
    %15 = arith.mulf %8, %8 : vector<128x32xf32>
    %cst_14 = arith.constant dense<0.000000e+00> : vector<128xf32>
    %16 = vector.multi_reduction <add>, %15, %cst_14 [1] : vector<128x32xf32> to vector<128xf32>
    %17 = vector.shape_cast %16 : vector<128xf32> to vector<128x1xf32>
    %cst_15 = arith.constant 3.200000e+01 : f32
    %18 = vector.broadcast %cst_15 : f32 to vector<128x1xf32>
    %19 = arith.divf %17, %18 : vector<128x1xf32>
    %20 = arith.mulf %14, %14 : vector<128x1xf32>
    %21 = arith.subf %19, %20 : vector<128x1xf32>
    %22 = vector.broadcast %14 : vector<128x1xf32> to vector<128x32xf32>
    %23 = arith.subf %8, %22 : vector<128x32xf32>
    %cst_16 = arith.constant 9.99999974E-6 : f32
    %24 = vector.broadcast %cst_16 : f32 to vector<128x1xf32>
    %25 = arith.addf %21, %24 : vector<128x1xf32>
    %26 = math.rsqrt %25 : vector<128x1xf32>
    %27 = vector.broadcast %26 : vector<128x1xf32> to vector<128x32xf32>
    %28 = arith.mulf %23, %27 : vector<128x32xf32>
    %29 = vector.broadcast %9 : vector<1x32xf32> to vector<128x32xf32>
    %30 = arith.mulf %28, %29 : vector<128x32xf32>
    %31 = vector.broadcast %10 : vector<1x32xf32> to vector<128x32xf32>
    %32 = arith.addf %30, %31 : vector<128x32xf32>
    %c0_17 = arith.constant 0 : index
    %c0_18 = arith.constant 0 : index
    %33 = vector.load %arg4[%c0_17, %c0_18] : memref<32x96xf32, #tpu.memory_space<vmem>>, vector<32x96xf32>
    %cst_19 = arith.constant dense<0.000000e+00> : vector<128x96xf32>
    %34 = tpu.matmul %32, %33, %cst_19 {dimension_numbers = #tpu.dot_dimension_numbers<[1], [0], [0], [1], [0, 0, 1, 1], [], []>} : vector<128x32xf32>, vector<32x96xf32>, vector<128x96xf32> -> vector<128x96xf32>
    %c0_20 = arith.constant 0 : index
    %c0_21 = arith.constant 0 : index
    %35 = vector.load %arg5[%c0_20, %c0_21] : memref<1x96xf32, #tpu.memory_space<vmem>>, vector<1x96xf32>
    %36 = vector.broadcast %35 : vector<1x96xf32> to vector<128x96xf32>
    %37 = arith.addf %34, %36 : vector<128x96xf32>
    %38 = vector.extract_strided_slice %37 {offsets = [0, 0], sizes = [64, 8], strides = [1, 1]} : vector<128x96xf32> to vector<64x8xf32>
    %39 = vector.extract_strided_slice %37 {offsets = [0, 32], sizes = [64, 8], strides = [1, 1]} : vector<128x96xf32> to vector<64x8xf32>
    %40 = vector.extract_strided_slice %37 {offsets = [0, 64], sizes = [64, 8], strides = [1, 1]} : vector<128x96xf32> to vector<64x8xf32>
    %41 = tpu.transpose %39, [1, 0] : vector<64x8xf32> -> vector<8x64xf32>
    %cst_22 = arith.constant dense<0.000000e+00> : vector<64x64xf32>
    %42 = tpu.matmul %38, %41, %cst_22 {dimension_numbers = #tpu.dot_dimension_numbers<[1], [0], [0], [1], [0, 0, 1, 1], [], []>} : vector<64x8xf32>, vector<8x64xf32>, vector<64x64xf32> -> vector<64x64xf32>
    %cst_23 = arith.constant dense<0xFF800000> : vector<64xf32>
    %43 = vector.multi_reduction <maximumf>, %42, %cst_23 [1] : vector<64x64xf32> to vector<64xf32>
    %44 = vector.shape_cast %43 : vector<64xf32> to vector<64x1xf32>
    %45 = vector.broadcast %44 : vector<64x1xf32> to vector<64x64xf32>
    %46 = arith.subf %42, %45 : vector<64x64xf32>
    %47 = math.exp %46 : vector<64x64xf32>
    %cst_24 = arith.constant dense<0.000000e+00> : vector<64xf32>
    %48 = vector.multi_reduction <add>, %47, %cst_24 [1] : vector<64x64xf32> to vector<64xf32>
    %49 = vector.shape_cast %48 : vector<64xf32> to vector<64x1xf32>
    %50 = tpu.reciprocal %49 {approx = true} : vector<64x1xf32> -> vector<64x1xf32>
    %51 = vector.broadcast %50 : vector<64x1xf32> to vector<64x64xf32>
    %52 = arith.mulf %47, %51 : vector<64x64xf32>
    %cst_25 = arith.constant dense<0.000000e+00> : vector<64x8xf32>
    %53 = tpu.matmul %52, %40, %cst_25 {dimension_numbers = #tpu.dot_dimension_numbers<[1], [0], [0], [1], [0, 0, 1, 1], [], []>} : vector<64x64xf32>, vector<64x8xf32>, vector<64x8xf32> -> vector<64x8xf32>
    %c0_26 = arith.constant 0 : index
    %c0_27 = arith.constant 0 : index
    %54 = vector.load %arg12[%c0_26, %c0_27] : memref<128x32xf32, #tpu.memory_space<vmem>>, vector<64x8xf32>
    tpu.vector_store %arg12[%c0_26, %c0_27], %53 {strides = array<i32>} : memref<128x32xf32, #tpu.memory_space<vmem>>, vector<64x8xf32>,
    %55 = vector.extract_strided_slice %37 {offsets = [0, 8], sizes = [64, 8], strides = [1, 1]} : vector<128x96xf32> to vector<64x8xf32>
    %56 = vector.extract_strided_slice %37 {offsets = [0, 40], sizes = [64, 8], strides = [1, 1]} : vector<128x96xf32> to vector<64x8xf32>
    %57 = vector.extract_strided_slice %37 {offsets = [0, 72], sizes = [64, 8], strides = [1, 1]} : vector<128x96xf32> to vector<64x8xf32>
    %58 = tpu.transpose %56, [1, 0] : vector<64x8xf32> -> vector<8x64xf32>
    %cst_28 = arith.constant dense<0.000000e+00> : vector<64x64xf32>
    %59 = tpu.matmul %55, %58, %cst_28 {dimension_numbers = #tpu.dot_dimension_numbers<[1], [0], [0], [1], [0, 0, 1, 1], [], []>} : vector<64x8xf32>, vector<8x64xf32>, vector<64x64xf32> -> vector<64x64xf32>
    %cst_29 = arith.constant dense<0xFF800000> : vector<64xf32>
    %60 = vector.multi_reduction <maximumf>, %59, %cst_29 [1] : vector<64x64xf32> to vector<64xf32>
    %61 = vector.shape_cast %60 : vector<64xf32> to vector<64x1xf32>
    %62 = vector.broadcast %61 : vector<64x1xf32> to vector<64x64xf32>
    %63 = arith.subf %59, %62 : vector<64x64xf32>
    %64 = math.exp %63 : vector<64x64xf32>
    %cst_30 = arith.constant dense<0.000000e+00> : vector<64xf32>
    %65 = vector.multi_reduction <add>, %64, %cst_30 [1] : vector<64x64xf32> to vector<64xf32>
    %66 = vector.shape_cast %65 : vector<64xf32> to vector<64x1xf32>
    %67 = tpu.reciprocal %66 {approx = true} : vector<64x1xf32> -> vector<64x1xf32>
    %68 = vector.broadcast %67 : vector<64x1xf32> to vector<64x64xf32>
    %69 = arith.mulf %64, %68 : vector<64x64xf32>
    %cst_31 = arith.constant dense<0.000000e+00> : vector<64x8xf32>
    %70 = tpu.matmul %69, %57, %cst_31 {dimension_numbers = #tpu.dot_dimension_numbers<[1], [0], [0], [1], [0, 0, 1, 1], [], []>} : vector<64x64xf32>, vector<64x8xf32>, vector<64x8xf32> -> vector<64x8xf32>
    %c0_32 = arith.constant 0 : index
    %c8 = arith.constant 8 : index
    %71 = vector.load %arg12[%c0_32, %c8] : memref<128x32xf32, #tpu.memory_space<vmem>>, vector<64x8xf32>
    tpu.vector_store %arg12[%c0_32, %c8], %70 {strides = array<i32>} : memref<128x32xf32, #tpu.memory_space<vmem>>, vector<64x8xf32>,
    %72 = vector.extract_strided_slice %37 {offsets = [0, 16], sizes = [64, 8], strides = [1, 1]} : vector<128x96xf32> to vector<64x8xf32>
    %73 = vector.extract_strided_slice %37 {offsets = [0, 48], sizes = [64, 8], strides = [1, 1]} : vector<128x96xf32> to vector<64x8xf32>
    %74 = vector.extract_strided_slice %37 {offsets = [0, 80], sizes = [64, 8], strides = [1, 1]} : vector<128x96xf32> to vector<64x8xf32>
    %75 = tpu.transpose %73, [1, 0] : vector<64x8xf32> -> vector<8x64xf32>
    %cst_33 = arith.constant dense<0.000000e+00> : vector<64x64xf32>
    %76 = tpu.matmul %72, %75, %cst_33 {dimension_numbers = #tpu.dot_dimension_numbers<[1], [0], [0], [1], [0, 0, 1, 1], [], []>} : vector<64x8xf32>, vector<8x64xf32>, vector<64x64xf32> -> vector<64x64xf32>
    %cst_34 = arith.constant dense<0xFF800000> : vector<64xf32>
    %77 = vector.multi_reduction <maximumf>, %76, %cst_34 [1] : vector<64x64xf32> to vector<64xf32>
    %78 = vector.shape_cast %77 : vector<64xf32> to vector<64x1xf32>
    %79 = vector.broadcast %78 : vector<64x1xf32> to vector<64x64xf32>
    %80 = arith.subf %76, %79 : vector<64x64xf32>
    %81 = math.exp %80 : vector<64x64xf32>
    %cst_35 = arith.constant dense<0.000000e+00> : vector<64xf32>
    %82 = vector.multi_reduction <add>, %81, %cst_35 [1] : vector<64x64xf32> to vector<64xf32>
    %83 = vector.shape_cast %82 : vector<64xf32> to vector<64x1xf32>
    %84 = tpu.reciprocal %83 {approx = true} : vector<64x1xf32> -> vector<64x1xf32>
    %85 = vector.broadcast %84 : vector<64x1xf32> to vector<64x64xf32>
    %86 = arith.mulf %81, %85 : vector<64x64xf32>
    %cst_36 = arith.constant dense<0.000000e+00> : vector<64x8xf32>
    %87 = tpu.matmul %86, %74, %cst_36 {dimension_numbers = #tpu.dot_dimension_numbers<[1], [0], [0], [1], [0, 0, 1, 1], [], []>} : vector<64x64xf32>, vector<64x8xf32>, vector<64x8xf32> -> vector<64x8xf32>
    %c0_37 = arith.constant 0 : index
    %c16 = arith.constant 16 : index
    %88 = vector.load %arg12[%c0_37, %c16] : memref<128x32xf32, #tpu.memory_space<vmem>>, vector<64x8xf32>
    tpu.vector_store %arg12[%c0_37, %c16], %87 {strides = array<i32>} : memref<128x32xf32, #tpu.memory_space<vmem>>, vector<64x8xf32>,
    %89 = vector.extract_strided_slice %37 {offsets = [0, 24], sizes = [64, 8], strides = [1, 1]} : vector<128x96xf32> to vector<64x8xf32>
    %90 = vector.extract_strided_slice %37 {offsets = [0, 56], sizes = [64, 8], strides = [1, 1]} : vector<128x96xf32> to vector<64x8xf32>
    %91 = vector.extract_strided_slice %37 {offsets = [0, 88], sizes = [64, 8], strides = [1, 1]} : vector<128x96xf32> to vector<64x8xf32>
    %92 = tpu.transpose %90, [1, 0] : vector<64x8xf32> -> vector<8x64xf32>
    %cst_38 = arith.constant dense<0.000000e+00> : vector<64x64xf32>
    %93 = tpu.matmul %89, %92, %cst_38 {dimension_numbers = #tpu.dot_dimension_numbers<[1], [0], [0], [1], [0, 0, 1, 1], [], []>} : vector<64x8xf32>, vector<8x64xf32>, vector<64x64xf32> -> vector<64x64xf32>
    %cst_39 = arith.constant dense<0xFF800000> : vector<64xf32>
    %94 = vector.multi_reduction <maximumf>, %93, %cst_39 [1] : vector<64x64xf32> to vector<64xf32>
    %95 = vector.shape_cast %94 : vector<64xf32> to vector<64x1xf32>
    %96 = vector.broadcast %95 : vector<64x1xf32> to vector<64x64xf32>
    %97 = arith.subf %93, %96 : vector<64x64xf32>
    %98 = math.exp %97 : vector<64x64xf32>
    %cst_40 = arith.constant dense<0.000000e+00> : vector<64xf32>
    %99 = vector.multi_reduction <add>, %98, %cst_40 [1] : vector<64x64xf32> to vector<64xf32>
    %100 = vector.shape_cast %99 : vector<64xf32> to vector<64x1xf32>
    %101 = tpu.reciprocal %100 {approx = true} : vector<64x1xf32> -> vector<64x1xf32>
    %102 = vector.broadcast %101 : vector<64x1xf32> to vector<64x64xf32>
    %103 = arith.mulf %98, %102 : vector<64x64xf32>
    %cst_41 = arith.constant dense<0.000000e+00> : vector<64x8xf32>
    %104 = tpu.matmul %103, %91, %cst_41 {dimension_numbers = #tpu.dot_dimension_numbers<[1], [0], [0], [1], [0, 0, 1, 1], [], []>} : vector<64x64xf32>, vector<64x8xf32>, vector<64x8xf32> -> vector<64x8xf32>
    %c0_42 = arith.constant 0 : index
    %c24 = arith.constant 24 : index
    %105 = vector.load %arg12[%c0_42, %c24] : memref<128x32xf32, #tpu.memory_space<vmem>>, vector<64x8xf32>
    tpu.vector_store %arg12[%c0_42, %c24], %104 {strides = array<i32>} : memref<128x32xf32, #tpu.memory_space<vmem>>, vector<64x8xf32>,
    %106 = vector.extract_strided_slice %37 {offsets = [64, 0], sizes = [64, 8], strides = [1, 1]} : vector<128x96xf32> to vector<64x8xf32>
    %107 = vector.extract_strided_slice %37 {offsets = [64, 32], sizes = [64, 8], strides = [1, 1]} : vector<128x96xf32> to vector<64x8xf32>
    %108 = vector.extract_strided_slice %37 {offsets = [64, 64], sizes = [64, 8], strides = [1, 1]} : vector<128x96xf32> to vector<64x8xf32>
    %109 = tpu.transpose %107, [1, 0] : vector<64x8xf32> -> vector<8x64xf32>
    %cst_43 = arith.constant dense<0.000000e+00> : vector<64x64xf32>
    %110 = tpu.matmul %106, %109, %cst_43 {dimension_numbers = #tpu.dot_dimension_numbers<[1], [0], [0], [1], [0, 0, 1, 1], [], []>} : vector<64x8xf32>, vector<8x64xf32>, vector<64x64xf32> -> vector<64x64xf32>
    %cst_44 = arith.constant dense<0xFF800000> : vector<64xf32>
    %111 = vector.multi_reduction <maximumf>, %110, %cst_44 [1] : vector<64x64xf32> to vector<64xf32>
    %112 = vector.shape_cast %111 : vector<64xf32> to vector<64x1xf32>
    %113 = vector.broadcast %112 : vector<64x1xf32> to vector<64x64xf32>
    %114 = arith.subf %110, %113 : vector<64x64xf32>
    %115 = math.exp %114 : vector<64x64xf32>
    %cst_45 = arith.constant dense<0.000000e+00> : vector<64xf32>
    %116 = vector.multi_reduction <add>, %115, %cst_45 [1] : vector<64x64xf32> to vector<64xf32>
    %117 = vector.shape_cast %116 : vector<64xf32> to vector<64x1xf32>
    %118 = tpu.reciprocal %117 {approx = true} : vector<64x1xf32> -> vector<64x1xf32>
    %119 = vector.broadcast %118 : vector<64x1xf32> to vector<64x64xf32>
    %120 = arith.mulf %115, %119 : vector<64x64xf32>
    %cst_46 = arith.constant dense<0.000000e+00> : vector<64x8xf32>
    %121 = tpu.matmul %120, %108, %cst_46 {dimension_numbers = #tpu.dot_dimension_numbers<[1], [0], [0], [1], [0, 0, 1, 1], [], []>} : vector<64x64xf32>, vector<64x8xf32>, vector<64x8xf32> -> vector<64x8xf32>
    %c64_47 = arith.constant 64 : index
    %c0_48 = arith.constant 0 : index
    %122 = vector.load %arg12[%c64_47, %c0_48] : memref<128x32xf32, #tpu.memory_space<vmem>>, vector<64x8xf32>
    tpu.vector_store %arg12[%c64_47, %c0_48], %121 {strides = array<i32>} : memref<128x32xf32, #tpu.memory_space<vmem>>, vector<64x8xf32>,
    %123 = vector.extract_strided_slice %37 {offsets = [64, 8], sizes = [64, 8], strides = [1, 1]} : vector<128x96xf32> to vector<64x8xf32>
    %124 = vector.extract_strided_slice %37 {offsets = [64, 40], sizes = [64, 8], strides = [1, 1]} : vector<128x96xf32> to vector<64x8xf32>
    %125 = vector.extract_strided_slice %37 {offsets = [64, 72], sizes = [64, 8], strides = [1, 1]} : vector<128x96xf32> to vector<64x8xf32>
    %126 = tpu.transpose %124, [1, 0] : vector<64x8xf32> -> vector<8x64xf32>
    %cst_49 = arith.constant dense<0.000000e+00> : vector<64x64xf32>
    %127 = tpu.matmul %123, %126, %cst_49 {dimension_numbers = #tpu.dot_dimension_numbers<[1], [0], [0], [1], [0, 0, 1, 1], [], []>} : vector<64x8xf32>, vector<8x64xf32>, vector<64x64xf32> -> vector<64x64xf32>
    %cst_50 = arith.constant dense<0xFF800000> : vector<64xf32>
    %128 = vector.multi_reduction <maximumf>, %127, %cst_50 [1] : vector<64x64xf32> to vector<64xf32>
    %129 = vector.shape_cast %128 : vector<64xf32> to vector<64x1xf32>
    %130 = vector.broadcast %129 : vector<64x1xf32> to vector<64x64xf32>
    %131 = arith.subf %127, %130 : vector<64x64xf32>
    %132 = math.exp %131 : vector<64x64xf32>
    %cst_51 = arith.constant dense<0.000000e+00> : vector<64xf32>
    %133 = vector.multi_reduction <add>, %132, %cst_51 [1] : vector<64x64xf32> to vector<64xf32>
    %134 = vector.shape_cast %133 : vector<64xf32> to vector<64x1xf32>
    %135 = tpu.reciprocal %134 {approx = true} : vector<64x1xf32> -> vector<64x1xf32>
    %136 = vector.broadcast %135 : vector<64x1xf32> to vector<64x64xf32>
    %137 = arith.mulf %132, %136 : vector<64x64xf32>
    %cst_52 = arith.constant dense<0.000000e+00> : vector<64x8xf32>
    %138 = tpu.matmul %137, %125, %cst_52 {dimension_numbers = #tpu.dot_dimension_numbers<[1], [0], [0], [1], [0, 0, 1, 1], [], []>} : vector<64x64xf32>, vector<64x8xf32>, vector<64x8xf32> -> vector<64x8xf32>
    %c64_53 = arith.constant 64 : index
    %c8_54 = arith.constant 8 : index
    %139 = vector.load %arg12[%c64_53, %c8_54] : memref<128x32xf32, #tpu.memory_space<vmem>>, vector<64x8xf32>
    tpu.vector_store %arg12[%c64_53, %c8_54], %138 {strides = array<i32>} : memref<128x32xf32, #tpu.memory_space<vmem>>, vector<64x8xf32>,
    %140 = vector.extract_strided_slice %37 {offsets = [64, 16], sizes = [64, 8], strides = [1, 1]} : vector<128x96xf32> to vector<64x8xf32>
    %141 = vector.extract_strided_slice %37 {offsets = [64, 48], sizes = [64, 8], strides = [1, 1]} : vector<128x96xf32> to vector<64x8xf32>
    %142 = vector.extract_strided_slice %37 {offsets = [64, 80], sizes = [64, 8], strides = [1, 1]} : vector<128x96xf32> to vector<64x8xf32>
    %143 = tpu.transpose %141, [1, 0] : vector<64x8xf32> -> vector<8x64xf32>
    %cst_55 = arith.constant dense<0.000000e+00> : vector<64x64xf32>
    %144 = tpu.matmul %140, %143, %cst_55 {dimension_numbers = #tpu.dot_dimension_numbers<[1], [0], [0], [1], [0, 0, 1, 1], [], []>} : vector<64x8xf32>, vector<8x64xf32>, vector<64x64xf32> -> vector<64x64xf32>
    %cst_56 = arith.constant dense<0xFF800000> : vector<64xf32>
    %145 = vector.multi_reduction <maximumf>, %144, %cst_56 [1] : vector<64x64xf32> to vector<64xf32>
    %146 = vector.shape_cast %145 : vector<64xf32> to vector<64x1xf32>
    %147 = vector.broadcast %146 : vector<64x1xf32> to vector<64x64xf32>
    %148 = arith.subf %144, %147 : vector<64x64xf32>
    %149 = math.exp %148 : vector<64x64xf32>
    %cst_57 = arith.constant dense<0.000000e+00> : vector<64xf32>
    %150 = vector.multi_reduction <add>, %149, %cst_57 [1] : vector<64x64xf32> to vector<64xf32>
    %151 = vector.shape_cast %150 : vector<64xf32> to vector<64x1xf32>
    %152 = tpu.reciprocal %151 {approx = true} : vector<64x1xf32> -> vector<64x1xf32>
    %153 = vector.broadcast %152 : vector<64x1xf32> to vector<64x64xf32>
    %154 = arith.mulf %149, %153 : vector<64x64xf32>
    %cst_58 = arith.constant dense<0.000000e+00> : vector<64x8xf32>
    %155 = tpu.matmul %154, %142, %cst_58 {dimension_numbers = #tpu.dot_dimension_numbers<[1], [0], [0], [1], [0, 0, 1, 1], [], []>} : vector<64x64xf32>, vector<64x8xf32>, vector<64x8xf32> -> vector<64x8xf32>
    %c64_59 = arith.constant 64 : index
    %c16_60 = arith.constant 16 : index
    %156 = vector.load %arg12[%c64_59, %c16_60] : memref<128x32xf32, #tpu.memory_space<vmem>>, vector<64x8xf32>
    tpu.vector_store %arg12[%c64_59, %c16_60], %155 {strides = array<i32>} : memref<128x32xf32, #tpu.memory_space<vmem>>, vector<64x8xf32>,
    %157 = vector.extract_strided_slice %37 {offsets = [64, 24], sizes = [64, 8], strides = [1, 1]} : vector<128x96xf32> to vector<64x8xf32>
    %158 = vector.extract_strided_slice %37 {offsets = [64, 56], sizes = [64, 8], strides = [1, 1]} : vector<128x96xf32> to vector<64x8xf32>
    %159 = vector.extract_strided_slice %37 {offsets = [64, 88], sizes = [64, 8], strides = [1, 1]} : vector<128x96xf32> to vector<64x8xf32>
    %160 = tpu.transpose %158, [1, 0] : vector<64x8xf32> -> vector<8x64xf32>
    %cst_61 = arith.constant dense<0.000000e+00> : vector<64x64xf32>
    %161 = tpu.matmul %157, %160, %cst_61 {dimension_numbers = #tpu.dot_dimension_numbers<[1], [0], [0], [1], [0, 0, 1, 1], [], []>} : vector<64x8xf32>, vector<8x64xf32>, vector<64x64xf32> -> vector<64x64xf32>
    %cst_62 = arith.constant dense<0xFF800000> : vector<64xf32>
    %162 = vector.multi_reduction <maximumf>, %161, %cst_62 [1] : vector<64x64xf32> to vector<64xf32>
    %163 = vector.shape_cast %162 : vector<64xf32> to vector<64x1xf32>
    %164 = vector.broadcast %163 : vector<64x1xf32> to vector<64x64xf32>
    %165 = arith.subf %161, %164 : vector<64x64xf32>
    %166 = math.exp %165 : vector<64x64xf32>
    %cst_63 = arith.constant dense<0.000000e+00> : vector<64xf32>
    %167 = vector.multi_reduction <add>, %166, %cst_63 [1] : vector<64x64xf32> to vector<64xf32>
    %168 = vector.shape_cast %167 : vector<64xf32> to vector<64x1xf32>
    %169 = tpu.reciprocal %168 {approx = true} : vector<64x1xf32> -> vector<64x1xf32>
    %170 = vector.broadcast %169 : vector<64x1xf32> to vector<64x64xf32>
    %171 = arith.mulf %166, %170 : vector<64x64xf32>
    %cst_64 = arith.constant dense<0.000000e+00> : vector<64x8xf32>
    %172 = tpu.matmul %171, %159, %cst_64 {dimension_numbers = #tpu.dot_dimension_numbers<[1], [0], [0], [1], [0, 0, 1, 1], [], []>} : vector<64x64xf32>, vector<64x8xf32>, vector<64x8xf32> -> vector<64x8xf32>
    %c64_65 = arith.constant 64 : index
    %c24_66 = arith.constant 24 : index
    %173 = vector.load %arg12[%c64_65, %c24_66] : memref<128x32xf32, #tpu.memory_space<vmem>>, vector<64x8xf32>
    tpu.vector_store %arg12[%c64_65, %c24_66], %172 {strides = array<i32>} : memref<128x32xf32, #tpu.memory_space<vmem>>, vector<64x8xf32>,
    %c0_67 = arith.constant 0 : index
    %c0_68 = arith.constant 0 : index
    %174 = vector.load %arg12[%c0_67, %c0_68] : memref<128x32xf32, #tpu.memory_space<vmem>>, vector<128x32xf32>
    %c0_69 = arith.constant 0 : index
    %c0_70 = arith.constant 0 : index
    %175 = vector.load %arg6[%c0_69, %c0_70] : memref<32x32xf32, #tpu.memory_space<vmem>>, vector<32x32xf32>
    %cst_71 = arith.constant dense<0.000000e+00> : vector<128x32xf32>
    %176 = tpu.matmul %174, %175, %cst_71 {dimension_numbers = #tpu.dot_dimension_numbers<[1], [0], [0], [1], [0, 0, 1, 1], [], []>} : vector<128x32xf32>, vector<32x32xf32>, vector<128x32xf32> -> vector<128x32xf32>
    %c0_72 = arith.constant 0 : index
    %c0_73 = arith.constant 0 : index
    %177 = vector.load %arg7[%c0_72, %c0_73] : memref<1x32xf32, #tpu.memory_space<vmem>>, vector<1x32xf32>
    %178 = vector.broadcast %177 : vector<1x32xf32> to vector<128x32xf32>
    %179 = arith.addf %176, %178 : vector<128x32xf32>
    %180 = arith.addf %179, %8 : vector<128x32xf32>
    %cst_74 = arith.constant dense<0.000000e+00> : vector<128xf32>
    %181 = vector.multi_reduction <add>, %180, %cst_74 [1] : vector<128x32xf32> to vector<128xf32>
    %182 = vector.shape_cast %181 : vector<128xf32> to vector<128x1xf32>
    %cst_75 = arith.constant 3.200000e+01 : f32
    %183 = vector.broadcast %cst_75 : f32 to vector<128x1xf32>
    %184 = arith.divf %182, %183 : vector<128x1xf32>
    %185 = arith.mulf %180, %180 : vector<128x32xf32>
    %cst_76 = arith.constant dense<0.000000e+00> : vector<128xf32>
    %186 = vector.multi_reduction <add>, %185, %cst_76 [1] : vector<128x32xf32> to vector<128xf32>
    %187 = vector.shape_cast %186 : vector<128xf32> to vector<128x1xf32>
    %cst_77 = arith.constant 3.200000e+01 : f32
    %188 = vector.broadcast %cst_77 : f32 to vector<128x1xf32>
    %189 = arith.divf %187, %188 : vector<128x1xf32>
    %190 = arith.mulf %184, %184 : vector<128x1xf32>
    %191 = arith.subf %189, %190 : vector<128x1xf32>
    %192 = vector.broadcast %184 : vector<128x1xf32> to vector<128x32xf32>
    %193 = arith.subf %180, %192 : vector<128x32xf32>
    %cst_78 = arith.constant 9.99999974E-6 : f32
    %194 = vector.broadcast %cst_78 : f32 to vector<128x1xf32>
    %195 = arith.addf %191, %194 : vector<128x1xf32>
    %196 = math.rsqrt %195 : vector<128x1xf32>
    %197 = vector.broadcast %196 : vector<128x1xf32> to vector<128x32xf32>
    %198 = arith.mulf %193, %197 : vector<128x32xf32>
    %199 = vector.broadcast %9 : vector<1x32xf32> to vector<128x32xf32>
    %200 = arith.mulf %198, %199 : vector<128x32xf32>
    %201 = vector.broadcast %10 : vector<1x32xf32> to vector<128x32xf32>
    %202 = arith.addf %200, %201 : vector<128x32xf32>
    %c0_79 = arith.constant 0 : index
    %c0_80 = arith.constant 0 : index
    %203 = vector.load %arg8[%c0_79, %c0_80] : memref<32x32xf32, #tpu.memory_space<vmem>>, vector<32x32xf32>
    %cst_81 = arith.constant dense<0.000000e+00> : vector<128x32xf32>
    %204 = tpu.matmul %202, %203, %cst_81 {dimension_numbers = #tpu.dot_dimension_numbers<[1], [0], [0], [1], [0, 0, 1, 1], [], []>} : vector<128x32xf32>, vector<32x32xf32>, vector<128x32xf32> -> vector<128x32xf32>
    %c0_82 = arith.constant 0 : index
    %c0_83 = arith.constant 0 : index
    %205 = vector.load %arg9[%c0_82, %c0_83] : memref<1x32xf32, #tpu.memory_space<vmem>>, vector<1x32xf32>
    %206 = vector.broadcast %205 : vector<1x32xf32> to vector<128x32xf32>
    %207 = arith.addf %204, %206 : vector<128x32xf32>
    %cst_84 = arith.constant 5.000000e-01 : f32
    %208 = vector.broadcast %cst_84 : f32 to vector<128x32xf32>
    %209 = arith.mulf %208, %207 : vector<128x32xf32>
    %cst_85 = arith.constant 0.707106769 : f32
    %210 = vector.broadcast %cst_85 : f32 to vector<128x32xf32>
    %211 = arith.mulf %207, %210 : vector<128x32xf32>
    %212 = math.erf %211 : vector<128x32xf32>
    %cst_86 = arith.constant 1.000000e+00 : f32
    %213 = vector.broadcast %cst_86 : f32 to vector<128x32xf32>
    %214 = arith.addf %213, %212 : vector<128x32xf32>
    %215 = arith.mulf %209, %214 : vector<128x32xf32>
    %c0_87 = arith.constant 0 : index
    %c0_88 = arith.constant 0 : index
    %216 = vector.load %arg8[%c0_87, %c0_88] : memref<32x32xf32, #tpu.memory_space<vmem>>, vector<32x32xf32>
    %cst_89 = arith.constant dense<0.000000e+00> : vector<128x32xf32>
    %217 = tpu.matmul %215, %216, %cst_89 {dimension_numbers = #tpu.dot_dimension_numbers<[1], [0], [0], [1], [0, 0, 1, 1], [], []>} : vector<128x32xf32>, vector<32x32xf32>, vector<128x32xf32> -> vector<128x32xf32>
    %c0_90 = arith.constant 0 : index
    %c0_91 = arith.constant 0 : index
    %218 = vector.load %arg9[%c0_90, %c0_91] : memref<1x32xf32, #tpu.memory_space<vmem>>, vector<1x32xf32>
    %219 = vector.broadcast %218 : vector<1x32xf32> to vector<128x32xf32>
    %220 = arith.addf %217, %219 : vector<128x32xf32>
    %221 = arith.addf %220, %180 : vector<128x32xf32>
    %222 = vector.extract_strided_slice %221 {offsets = [0, 0], sizes = [64, 32], strides = [1, 1]} : vector<128x32xf32> to vector<64x32xf32>
    %223 = tpu.transpose %222, [1, 0] : vector<64x32xf32> -> vector<32x64xf32>
    %c0_92 = arith.constant 0 : index
    %c0_93 = arith.constant 0 : index
    %c0_94 = arith.constant 0 : index
    %224 = vector.load %arg10[%c0_92, %c0_93, %c0_94] : memref<2x32x64xf32, #tpu.memory_space<vmem>>, vector<1x32x64xf32>
    %225 = vector.shape_cast %224 : vector<1x32x64xf32> to vector<32x64xf32>
    %226 = vector.shape_cast %223 : vector<32x64xf32> to vector<1x32x64xf32>
    tpu.vector_store %arg10[%c0_92, %c0_93, %c0_94], %226 {strides = array<i32>} : memref<2x32x64xf32, #tpu.memory_space<vmem>>, vector<1x32x64xf32>,
    %227 = vector.extract_strided_slice %221 {offsets = [64, 0], sizes = [64, 32], strides = [1, 1]} : vector<128x32xf32> to vector<64x32xf32>
    %228 = tpu.transpose %227, [1, 0] : vector<64x32xf32> -> vector<32x64xf32>
    %c1_95 = arith.constant 1 : index
    %c0_96 = arith.constant 0 : index
    %c0_97 = arith.constant 0 : index
    %229 = vector.load %arg10[%c1_95, %c0_96, %c0_97] : memref<2x32x64xf32, #tpu.memory_space<vmem>>, vector<1x32x64xf32>
    %230 = vector.shape_cast %229 : vector<1x32x64xf32> to vector<32x64xf32>
    %231 = vector.shape_cast %228 : vector<32x64xf32> to vector<1x32x64xf32>
    tpu.vector_store %arg10[%c1_95, %c0_96, %c0_97], %231 {strides = array<i32>} : memref<2x32x64xf32, #tpu.memory_space<vmem>>, vector<1x32x64xf32>,
    return
  }
  func.func @transform_0(%arg0: i32) -> (i32, i32, i32) {
    %c0_i32 = arith.constant 0 : i32
    %c0_i32_0 = arith.constant 0 : i32
    %c0_i32_1 = arith.constant 0 : i32
    return %arg0, %c0_i32, %c0_i32_0 : i32, i32, i32
  }
  func.func @transform_1(%arg0: i32) -> (i32, i32) {
    %c0_i32 = arith.constant 0 : i32
    %c0_i32_0 = arith.constant 0 : i32
    %c0_i32_1 = arith.constant 0 : i32
    return %c0_i32, %c0_i32_0 : i32, i32
  }
  func.func @transform_2(%arg0: i32) -> (i32, i32) {
    %c0_i32 = arith.constant 0 : i32
    %c0_i32_0 = arith.constant 0 : i32
    %c0_i32_1 = arith.constant 0 : i32
    return %c0_i32, %c0_i32_0 : i32, i32
  }
  func.func @transform_3(%arg0: i32) -> (i32, i32) {
    %c0_i32 = arith.constant 0 : i32
    %c0_i32_0 = arith.constant 0 : i32
    %c0_i32_1 = arith.constant 0 : i32
    return %c0_i32, %c0_i32_0 : i32, i32
  }
  func.func @transform_4(%arg0: i32) -> (i32, i32) {
    %c0_i32 = arith.constant 0 : i32
    %c0_i32_0 = arith.constant 0 : i32
    %c0_i32_1 = arith.constant 0 : i32
    return %c0_i32, %c0_i32_0 : i32, i32
  }
  func.func @transform_5(%arg0: i32) -> (i32, i32) {
    %c0_i32 = arith.constant 0 : i32
    %c0_i32_0 = arith.constant 0 : i32
    %c0_i32_1 = arith.constant 0 : i32
    return %c0_i32, %c0_i32_0 : i32, i32
  }
  func.func @transform_6(%arg0: i32) -> (i32, i32) {
    %c0_i32 = arith.constant 0 : i32
    %c0_i32_0 = arith.constant 0 : i32
    %c0_i32_1 = arith.constant 0 : i32
    return %c0_i32, %c0_i32_0 : i32, i32
  }
  func.func @transform_7(%arg0: i32) -> (i32, i32) {
    %c0_i32 = arith.constant 0 : i32
    %c0_i32_0 = arith.constant 0 : i32
    %c0_i32_1 = arith.constant 0 : i32
    return %c0_i32, %c0_i32_0 : i32, i32
  }
  func.func @transform_8(%arg0: i32) -> (i32, i32) {
    %c0_i32 = arith.constant 0 : i32
    %c0_i32_0 = arith.constant 0 : i32
    %c0_i32_1 = arith.constant 0 : i32
    return %c0_i32, %c0_i32_0 : i32, i32
  }
  func.func @transform_9(%arg0: i32) -> (i32, i32, i32) {
    %c0_i32 = arith.constant 0 : i32
    %c0_i32_0 = arith.constant 0 : i32
    %c0_i32_1 = arith.constant 0 : i32
    return %arg0, %c0_i32, %c0_i32_0 : i32, i32, i32
  }
}

</mosaic_0001>

<llo_original>
// kernel: self_attention_pallas.1
$region0: #{self_attention_pallas.1}
  #allocation0 [shape = 'u32[]', space=smem, size = 0x4, offset = 0x4, fixed_abs, tag = 'smem constant byte address 0x4 - core index']
  #allocation1 [shape = 'u32[72,128]{1,0:T(1,128)}', space=vmem, size = 0x9000, scoped, tag = 'internal scratch']
  #allocation2 [shape = 'f32[128,32]{1,0:T(8,128)}', space=vmem, size = 0x10000, scoped, tag = 'scratch operand']
  #allocation3 [shape = 'f32[128,32]{1,0:T(8,128)}', space=vmem, size = 0x10000, scoped, tag = 'scratch operand']
  %s0 = inlined_call_operand.vmem [shape: f32[2,32,64], index: 0, kind: input, shape index: {}]
  %s1 = inlined_call_operand.vmem [shape: f32[1,32], index: 1, kind: input, shape index: {}]
  %s2 = inlined_call_operand.vmem [shape: f32[1,32], index: 2, kind: input, shape index: {}]
  %s3 = inlined_call_operand.vmem [shape: f32[32,96], index: 3, kind: input, shape index: {}]
  %s4 = inlined_call_operand.vmem [shape: f32[1,96], index: 4, kind: input, shape index: {}]
  %s5 = inlined_call_operand.vmem [shape: f32[32,32], index: 5, kind: input, shape index: {}]
  %s6 = inlined_call_operand.vmem [shape: f32[1,32], index: 6, kind: input, shape index: {}]
  %s7 = inlined_call_operand.vmem [shape: f32[32,32], index: 7, kind: input, shape index: {}]
  %s8 = inlined_call_operand.vmem [shape: f32[1,32], index: 8, kind: input, shape index: {}]
  %s9 = inlined_call_operand.vmem [shape: f32[2,32,64], index: 9, kind: output, shape index: {}]
  %s10 = sld [smem:[#allocation0]]
  $region46: #{self_attention_pallas.1} parent=0
    _
  %s12 = ssub.s32 1, %s10
  %s13 = scalar_select 0, %s12, %s10
  // Predicated region
  $region2: #{self_attention_pallas.1} parent=0 // pred_check
    _
  $region3: #{self_attention_pallas.1} parent=0 // pred_check_branch
    %15 = sbr.rel (0) target = $region5
  $region4: #{self_attention_pallas.1} parent=0 // pred_region
    _
  $region5: #{self_attention_pallas.1} parent=0 // pred_fallthru
    _
  // Predicated region
  $region6: #{self_attention_pallas.1} parent=0 // pred_check
    _
  $region7: #{self_attention_pallas.1} parent=0 // pred_check_branch
    %17 = sbr.rel (0) target = $region9
  $region8: #{self_attention_pallas.1} parent=0 // pred_region
    _
  $region9: #{self_attention_pallas.1} parent=0 // pred_fallthru
    _
  // Predicated region
  $region10: #{self_attention_pallas.1} parent=0 // pred_check
    _
  $region11: #{self_attention_pallas.1} parent=0 // pred_check_branch
    %19 = sbr.rel (0) target = $region13
  $region12: #{self_attention_pallas.1} parent=0 // pred_region
    _
  $region13: #{self_attention_pallas.1} parent=0 // pred_fallthru
    _
  // Predicated region
  $region14: #{self_attention_pallas.1} parent=0 // pred_check
    _
  $region15: #{self_attention_pallas.1} parent=0 // pred_check_branch
    %21 = sbr.rel (0) target = $region17
  $region16: #{self_attention_pallas.1} parent=0 // pred_region
    _
  $region17: #{self_attention_pallas.1} parent=0 // pred_fallthru
    _
  // Predicated region
  $region18: #{self_attention_pallas.1} parent=0 // pred_check
    _
  $region19: #{self_attention_pallas.1} parent=0 // pred_check_branch
    %23 = sbr.rel (0) target = $region21
  $region20: #{self_attention_pallas.1} parent=0 // pred_region
    _
  $region21: #{self_attention_pallas.1} parent=0 // pred_fallthru
    _
  // Predicated region
  $region22: #{self_attention_pallas.1} parent=0 // pred_check
    _
  $region23: #{self_attention_pallas.1} parent=0 // pred_check_branch
    %25 = sbr.rel (0) target = $region25
  $region24: #{self_attention_pallas.1} parent=0 // pred_region
    _
  $region25: #{self_attention_pallas.1} parent=0 // pred_fallthru
    _
  // Predicated region
  $region26: #{self_attention_pallas.1} parent=0 // pred_check
    _
  $region27: #{self_attention_pallas.1} parent=0 // pred_check_branch
    %27 = sbr.rel (0) target = $region29
  $region28: #{self_attention_pallas.1} parent=0 // pred_region
    _
  $region29: #{self_attention_pallas.1} parent=0 // pred_fallthru
    _
  // Predicated region
  $region30: #{self_attention_pallas.1} parent=0 // pred_check
    _
  $region31: #{self_attention_pallas.1} parent=0 // pred_check_branch
    %29 = sbr.rel (0) target = $region33
  $region32: #{self_attention_pallas.1} parent=0 // pred_region
    _
  $region33: #{self_attention_pallas.1} parent=0 // pred_fallthru
    _
  // Predicated region
  $region34: #{self_attention_pallas.1} parent=0 // pred_check
    _
  $region35: #{self_attention_pallas.1} parent=0 // pred_check_branch
    %31 = sbr.rel (0) target = $region37
  $region36: #{self_attention_pallas.1} parent=0 // pred_region
    _
  $region37: #{self_attention_pallas.1} parent=0 // pred_fallthru
    _
  %v32 = vld [vmem:[%s0] sm:$0xff]
  %v33 = vld [vmem:[%s0 + $0x8] sm:$0xff]
  %v34 = vld [vmem:[%s0 + $0x10] sm:$0xff]
  %v35 = vld [vmem:[%s0 + $0x18] sm:$0xff]
  %36 = vxpose.xlu0.b32.start [1/16] %v32, 128
  %37 = vxpose.xlu0.b32.cont [2/16] %v33, 128
  %38 = vxpose.xlu0.b32.cont [3/16] %v34, 128
  %39 = vxpose.xlu0.b32.cont [4/16] %v35, 128
  %40 = vxpose.xlu0.b32.cont [5/16] 0.0, 128
  %41 = vxpose.xlu0.b32.cont [6/16] 0.0, 128
  %42 = vxpose.xlu0.b32.cont [7/16] 0.0, 128
  %43 = vxpose.xlu0.b32.cont [8/16] 0.0, 128
  %44 = vxpose.xlu0.b32.cont [9/16] 0.0, 128
  %45 = vxpose.xlu0.b32.cont [10/16] 0.0, 128
  %46 = vxpose.xlu0.b32.cont [11/16] 0.0, 128
  %47 = vxpose.xlu0.b32.cont [12/16] 0.0, 128
  %48 = vxpose.xlu0.b32.cont [13/16] 0.0, 128
  %49 = vxpose.xlu0.b32.cont [14/16] 0.0, 128
  %50 = vxpose.xlu0.b32.cont [15/16] 0.0, 128
  %51 = vxpose.xlu0.b32.end [16/16] 0.0, 128
  %v52 = vpop.trf.xlu0
  %v53 = vpop.trf.xlu0
  %v54 = vpop.trf.xlu0
  %v55 = vpop.trf.xlu0
  %v56 = vpop.trf.xlu0
  %v57 = vpop.trf.xlu0
  %v58 = vpop.trf.xlu0
  %v59 = vpop.trf.xlu0
  %v60 = vpop.trf.xlu0
  %v61 = vpop.trf.xlu0
  %v62 = vpop.trf.xlu0
  %v63 = vpop.trf.xlu0
  %v64 = vpop.trf.xlu0
  %v65 = vpop.trf.xlu0
  %v66 = vpop.trf.xlu0
  %v67 = vpop.trf.xlu0
  %vm68 = vcmask 261120
  %69 = vst.msk [vmem:[#allocation2] sm:$0xff] %vm68, %v52
  %70 = vst.msk [vmem:[#allocation2 + $0x8] sm:$0xff] %vm68, %v53
  %71 = vst.msk [vmem:[#allocation2 + $0x10] sm:$0xff] %vm68, %v54
  %72 = vst.msk [vmem:[#allocation2 + $0x18] sm:$0xff] %vm68, %v55
  %73 = vst.msk [vmem:[#allocation2 + $0x20] sm:$0xff] %vm68, %v56
  %74 = vst.msk [vmem:[#allocation2 + $0x28] sm:$0xff] %vm68, %v57
  %75 = vst.msk [vmem:[#allocation2 + $0x30] sm:$0xff] %vm68, %v58
  %76 = vst.msk [vmem:[#allocation2 + $0x38] sm:$0xff] %vm68, %v59
  %s77 = scalar_lea.vmem %s0, 32
  %v78 = vld [vmem:[%s77] sm:$0xff]
  %v79 = vld [vmem:[%s77 + $0x8] sm:$0xff]
  %v80 = vld [vmem:[%s77 + $0x10] sm:$0xff]
  %v81 = vld [vmem:[%s77 + $0x18] sm:$0xff]
  %82 = vxpose.xlu0.b32.start [1/16] %v78, 128
  %83 = vxpose.xlu0.b32.cont [2/16] %v79, 128
  %84 = vxpose.xlu0.b32.cont [3/16] %v80, 128
  %85 = vxpose.xlu0.b32.cont [4/16] %v81, 128
  %86 = vxpose.xlu0.b32.cont [5/16] 0.0, 128
  %87 = vxpose.xlu0.b32.cont [6/16] 0.0, 128
  %88 = vxpose.xlu0.b32.cont [7/16] 0.0, 128
  %89 = vxpose.xlu0.b32.cont [8/16] 0.0, 128
  %90 = vxpose.xlu0.b32.cont [9/16] 0.0, 128
  %91 = vxpose.xlu0.b32.cont [10/16] 0.0, 128
  %92 = vxpose.xlu0.b32.cont [11/16] 0.0, 128
  %93 = vxpose.xlu0.b32.cont [12/16] 0.0, 128
  %94 = vxpose.xlu0.b32.cont [13/16] 0.0, 128
  %95 = vxpose.xlu0.b32.cont [14/16] 0.0, 128
  %96 = vxpose.xlu0.b32.cont [15/16] 0.0, 128
  %97 = vxpose.xlu0.b32.end [16/16] 0.0, 128
  %v98 = vpop.trf.xlu0
  %v99 = vpop.trf.xlu0
  %v100 = vpop.trf.xlu0
  %v101 = vpop.trf.xlu0
  %v102 = vpop.trf.xlu0
  %v103 = vpop.trf.xlu0
  %v104 = vpop.trf.xlu0
  %v105 = vpop.trf.xlu0
  %v106 = vpop.trf.xlu0
  %v107 = vpop.trf.xlu0
  %v108 = vpop.trf.xlu0
  %v109 = vpop.trf.xlu0
  %v110 = vpop.trf.xlu0
  %v111 = vpop.trf.xlu0
  %v112 = vpop.trf.xlu0
  %v113 = vpop.trf.xlu0
  %114 = vst.msk [vmem:[#allocation2 + $0x40] sm:$0xff] %vm68, %v98
  %115 = vst.msk [vmem:[#allocation2 + $0x48] sm:$0xff] %vm68, %v99
  %116 = vst.msk [vmem:[#allocation2 + $0x50] sm:$0xff] %vm68, %v100
  %117 = vst.msk [vmem:[#allocation2 + $0x58] sm:$0xff] %vm68, %v101
  %118 = vst.msk [vmem:[#allocation2 + $0x60] sm:$0xff] %vm68, %v102
  %119 = vst.msk [vmem:[#allocation2 + $0x68] sm:$0xff] %vm68, %v103
  %120 = vst.msk [vmem:[#allocation2 + $0x70] sm:$0xff] %vm68, %v104
  %121 = vst.msk [vmem:[#allocation2 + $0x78] sm:$0xff] %vm68, %v105
  %v122 = vld [vmem:[#allocation2] sm:$0xff]
  %v123 = vld [vmem:[#allocation2 + $0x8] sm:$0xff]
  %v124 = vld [vmem:[#allocation2 + $0x10] sm:$0xff]
  %v125 = vld [vmem:[#allocation2 + $0x18] sm:$0xff]
  %v126 = vld [vmem:[#allocation2 + $0x20] sm:$0xff]
  %v127 = vld [vmem:[#allocation2 + $0x28] sm:$0xff]
  %v128 = vld [vmem:[#allocation2 + $0x30] sm:$0xff]
  %v129 = vld [vmem:[#allocation2 + $0x38] sm:$0xff]
  %v130 = vld [vmem:[#allocation2 + $0x40] sm:$0xff]
  %v131 = vld [vmem:[#allocation2 + $0x48] sm:$0xff]
  %v132 = vld [vmem:[#allocation2 + $0x50] sm:$0xff]
  %v133 = vld [vmem:[#allocation2 + $0x58] sm:$0xff]
  %v134 = vld [vmem:[#allocation2 + $0x60] sm:$0xff]
  %v135 = vld [vmem:[#allocation2 + $0x68] sm:$0xff]
  %v136 = vld [vmem:[#allocation2 + $0x70] sm:$0xff]
  %v137 = vld [vmem:[#allocation2 + $0x78] sm:$0xff]
  %v138 = vld [vmem:[%s1] sm:$0x1]
  %v139 = vld [vmem:[%s2] sm:$0x1]
  %v140 = vsel %vm68, %v122, 0.0
  %141 = vadd.xlane.f32.xlu0 %v140
  %v142 = vpop.xlane.xlu0 %141
  %v143 = vsel %vm68, %v123, 0.0
  %144 = vadd.xlane.f32.xlu0 %v143
  %v145 = vpop.xlane.xlu0 %144
  %v146 = vsel %vm68, %v124, 0.0
  %147 = vadd.xlane.f32.xlu0 %v146
  %v148 = vpop.xlane.xlu0 %147
  %v149 = vsel %vm68, %v125, 0.0
  %150 = vadd.xlane.f32.xlu0 %v149
  %v151 = vpop.xlane.xlu0 %150
  %v152 = vsel %vm68, %v126, 0.0
  %153 = vadd.xlane.f32.xlu0 %v152
  %v154 = vpop.xlane.xlu0 %153
  %v155 = vsel %vm68, %v127, 0.0
  %156 = vadd.xlane.f32.xlu0 %v155
  %v157 = vpop.xlane.xlu0 %156
  %v158 = vsel %vm68, %v128, 0.0
  %159 = vadd.xlane.f32.xlu0 %v158
  %v160 = vpop.xlane.xlu0 %159
  %v161 = vsel %vm68, %v129, 0.0
  %162 = vadd.xlane.f32.xlu0 %v161
  %v163 = vpop.xlane.xlu0 %162
  %v164 = vsel %vm68, %v130, 0.0
  %165 = vadd.xlane.f32.xlu0 %v164
  %v166 = vpop.xlane.xlu0 %165
  %v167 = vsel %vm68, %v131, 0.0
  %168 = vadd.xlane.f32.xlu0 %v167
  %v169 = vpop.xlane.xlu0 %168
  %v170 = vsel %vm68, %v132, 0.0
  %171 = vadd.xlane.f32.xlu0 %v170
  %v172 = vpop.xlane.xlu0 %171
  %v173 = vsel %vm68, %v133, 0.0
  %174 = vadd.xlane.f32.xlu0 %v173
  %v175 = vpop.xlane.xlu0 %174
  %v176 = vsel %vm68, %v134, 0.0
  %177 = vadd.xlane.f32.xlu0 %v176
  %v178 = vpop.xlane.xlu0 %177
  %v179 = vsel %vm68, %v135, 0.0
  %180 = vadd.xlane.f32.xlu0 %v179
  %v181 = vpop.xlane.xlu0 %180
  %v182 = vsel %vm68, %v136, 0.0
  %183 = vadd.xlane.f32.xlu0 %v182
  %v184 = vpop.xlane.xlu0 %183
  %v185 = vsel %vm68, %v137, 0.0
  %186 = vadd.xlane.f32.xlu0 %v185
  %v187 = vpop.xlane.xlu0 %186
  %v188 = vrcp.pop 32.0
  %v189 = vmul.f32 32.0, %v188
  %v190 = vsub.f32 1.0, %v189
  %v191 = vmul.f32 %v188, %v190
  %v192 = vadd.f32 %v188, %v191
  %vm193 = vweird.f32 %v188
  %v194 = vsel %vm193, %v188, %v192
  %v195 = vmul.f32 %v142, %v194
  %v196 = vmul.f32 %v145, %v194
  %v197 = vmul.f32 %v148, %v194
  %v198 = vmul.f32 %v151, %v194
  %v199 = vmul.f32 %v154, %v194
  %v200 = vmul.f32 %v157, %v194
  %v201 = vmul.f32 %v160, %v194
  %v202 = vmul.f32 %v163, %v194
  %v203 = vmul.f32 %v166, %v194
  %v204 = vmul.f32 %v169, %v194
  %v205 = vmul.f32 %v172, %v194
  %v206 = vmul.f32 %v175, %v194
  %v207 = vmul.f32 %v178, %v194
  %v208 = vmul.f32 %v181, %v194
  %v209 = vmul.f32 %v184, %v194
  %v210 = vmul.f32 %v187, %v194
  %v211 = vmul.f32 %v122, %v122
  %v212 = vmul.f32 %v123, %v123
  %v213 = vmul.f32 %v124, %v124
  %v214 = vmul.f32 %v125, %v125
  %v215 = vmul.f32 %v126, %v126
  %v216 = vmul.f32 %v127, %v127
  %v217 = vmul.f32 %v128, %v128
  %v218 = vmul.f32 %v129, %v129
  %v219 = vmul.f32 %v130, %v130
  %v220 = vmul.f32 %v131, %v131
  %v221 = vmul.f32 %v132, %v132
  %v222 = vmul.f32 %v133, %v133
  %v223 = vmul.f32 %v134, %v134
  %v224 = vmul.f32 %v135, %v135
  %v225 = vmul.f32 %v136, %v136
  %v226 = vmul.f32 %v137, %v137
  %v227 = vsel %vm68, %v211, 0.0
  %228 = vadd.xlane.f32.xlu0 %v227
  %v229 = vpop.xlane.xlu0 %228
  %v230 = vsel %vm68, %v212, 0.0
  %231 = vadd.xlane.f32.xlu0 %v230
  %v232 = vpop.xlane.xlu0 %231
  %v233 = vsel %vm68, %v213, 0.0
  %234 = vadd.xlane.f32.xlu0 %v233
  %v235 = vpop.xlane.xlu0 %234
  %v236 = vsel %vm68, %v214, 0.0
  %237 = vadd.xlane.f32.xlu0 %v236
  %v238 = vpop.xlane.xlu0 %237
  %v239 = vsel %vm68, %v215, 0.0
  %240 = vadd.xlane.f32.xlu0 %v239
  %v241 = vpop.xlane.xlu0 %240
  %v242 = vsel %vm68, %v216, 0.0
  %243 = vadd.xlane.f32.xlu0 %v242
  %v244 = vpop.xlane.xlu0 %243
  %v245 = vsel %vm68, %v217, 0.0
  %246 = vadd.xlane.f32.xlu0 %v245
  %v247 = vpop.xlane.xlu0 %246
  %v248 = vsel %vm68, %v218, 0.0
  %249 = vadd.xlane.f32.xlu0 %v248
  %v250 = vpop.xlane.xlu0 %249
  %v251 = vsel %vm68, %v219, 0.0
  %252 = vadd.xlane.f32.xlu0 %v251
  %v253 = vpop.xlane.xlu0 %252
  %v254 = vsel %vm68, %v220, 0.0
  %255 = vadd.xlane.f32.xlu0 %v254
  %v256 = vpop.xlane.xlu0 %255
  %v257 = vsel %vm68, %v221, 0.0
  %258 = vadd.xlane.f32.xlu0 %v257
  %v259 = vpop.xlane.xlu0 %258
  %v260 = vsel %vm68, %v222, 0.0
  %261 = vadd.xlane.f32.xlu0 %v260
  %v262 = vpop.xlane.xlu0 %261
  %v263 = vsel %vm68, %v223, 0.0
  %264 = vadd.xlane.f32.xlu0 %v263
  %v265 = vpop.xlane.xlu0 %264
  %v266 = vsel %vm68, %v224, 0.0
  %267 = vadd.xlane.f32.xlu0 %v266
  %v268 = vpop.xlane.xlu0 %267
  %v269 = vsel %vm68, %v225, 0.0
  %270 = vadd.xlane.f32.xlu0 %v269
  %v271 = vpop.xlane.xlu0 %270
  %v272 = vsel %vm68, %v226, 0.0
  %273 = vadd.xlane.f32.xlu0 %v272
  %v274 = vpop.xlane.xlu0 %273
  %v275 = vmul.f32 %v229, %v194
  %v276 = vmul.f32 %v232, %v194
  %v277 = vmul.f32 %v235, %v194
  %v278 = vmul.f32 %v238, %v194
  %v279 = vmul.f32 %v241, %v194
  %v280 = vmul.f32 %v244, %v194
  %v281 = vmul.f32 %v247, %v194
  %v282 = vmul.f32 %v250, %v194
  %v283 = vmul.f32 %v253, %v194
  %v284 = vmul.f32 %v256, %v194
  %v285 = vmul.f32 %v259, %v194
  %v286 = vmul.f32 %v262, %v194
  %v287 = vmul.f32 %v265, %v194
  %v288 = vmul.f32 %v268, %v194
  %v289 = vmul.f32 %v271, %v194
  %v290 = vmul.f32 %v274, %v194
  %v291 = vmul.f32 %v195, %v195
  %v292 = vmul.f32 %v196, %v196
  %v293 = vmul.f32 %v197, %v197
  %v294 = vmul.f32 %v198, %v198
  %v295 = vmul.f32 %v199, %v199
  %v296 = vmul.f32 %v200, %v200
  %v297 = vmul.f32 %v201, %v201
  %v298 = vmul.f32 %v202, %v202
  %v299 = vmul.f32 %v203, %v203
  %v300 = vmul.f32 %v204, %v204
  %v301 = vmul.f32 %v205, %v205
  %v302 = vmul.f32 %v206, %v206
  %v303 = vmul.f32 %v207, %v207
  %v304 = vmul.f32 %v208, %v208
  %v305 = vmul.f32 %v209, %v209
  %v306 = vmul.f32 %v210, %v210
  %v307 = vsub.f32 %v275, %v291
  %v308 = vsub.f32 %v276, %v292
  %v309 = vsub.f32 %v277, %v293
  %v310 = vsub.f32 %v278, %v294
  %v311 = vsub.f32 %v279, %v295
  %v312 = vsub.f32 %v280, %v296
  %v313 = vsub.f32 %v281, %v297
  %v314 = vsub.f32 %v282, %v298
  %v315 = vsub.f32 %v283, %v299
  %v316 = vsub.f32 %v284, %v300
  %v317 = vsub.f32 %v285, %v301
  %v318 = vsub.f32 %v286, %v302
  %v319 = vsub.f32 %v287, %v303
  %v320 = vsub.f32 %v288, %v304
  %v321 = vsub.f32 %v289, %v305
  %v322 = vsub.f32 %v290, %v306
  %v323 = vsub.f32 %v122, %v195
  %v324 = vsub.f32 %v123, %v196
  %v325 = vsub.f32 %v124, %v197
  %v326 = vsub.f32 %v125, %v198
  %v327 = vsub.f32 %v126, %v199
  %v328 = vsub.f32 %v127, %v200
  %v329 = vsub.f32 %v128, %v201
  %v330 = vsub.f32 %v129, %v202
  %v331 = vsub.f32 %v130, %v203
  %v332 = vsub.f32 %v131, %v204
  %v333 = vsub.f32 %v132, %v205
  %v334 = vsub.f32 %v133, %v206
  %v335 = vsub.f32 %v134, %v207
  %v336 = vsub.f32 %v135, %v208
  %v337 = vsub.f32 %v136, %v209
  %v338 = vsub.f32 %v137, %v210
  %v339 = vadd.f32 %v307, 1e-05
  %v340 = vadd.f32 %v308, 1e-05
  %v341 = vadd.f32 %v309, 1e-05
  %v342 = vadd.f32 %v310, 1e-05
  %v343 = vadd.f32 %v311, 1e-05
  %v344 = vadd.f32 %v312, 1e-05
  %v345 = vadd.f32 %v313, 1e-05
  %v346 = vadd.f32 %v314, 1e-05
  %v347 = vadd.f32 %v315, 1e-05
  %v348 = vadd.f32 %v316, 1e-05
  %v349 = vadd.f32 %v317, 1e-05
  %v350 = vadd.f32 %v318, 1e-05
  %v351 = vadd.f32 %v319, 1e-05
  %v352 = vadd.f32 %v320, 1e-05
  %v353 = vadd.f32 %v321, 1e-05
  %v354 = vadd.f32 %v322, 1e-05
  %v355 = vrsqrt.pop %v339
  %v356 = vmul.f32 %v355, %v339
  %v357 = vmul.f32 %v356, %v355
  %v358 = vmul.f32 0.5, %v357
  %v359 = vsub.f32 1.5, %v358
  %v360 = vmul.f32 %v355, %v359
  %vm361 = vweird.f32 %v339
  %vm362 = vweird.f32 %v355
  %vm363 = vmor %vm361, %vm362
  %v364 = vsel %vm363, %v355, %v360
  %v365 = vrsqrt.pop %v340
  %v366 = vmul.f32 %v365, %v340
  %v367 = vmul.f32 %v366, %v365
  %v368 = vmul.f32 0.5, %v367
  %v369 = vsub.f32 1.5, %v368
  %v370 = vmul.f32 %v365, %v369
  %vm371 = vweird.f32 %v340
  %vm372 = vweird.f32 %v365
  %vm373 = vmor %vm371, %vm372
  %v374 = vsel %vm373, %v365, %v370
  %v375 = vrsqrt.pop %v341
  %v376 = vmul.f32 %v375, %v341
  %v377 = vmul.f32 %v376, %v375
  %v378 = vmul.f32 0.5, %v377
  %v379 = vsub.f32 1.5, %v378
  %v380 = vmul.f32 %v375, %v379
  %vm381 = vweird.f32 %v341
  %vm382 = vweird.f32 %v375
  %vm383 = vmor %vm381, %vm382
  %v384 = vsel %vm383, %v375, %v380
  %v385 = vrsqrt.pop %v342
  %v386 = vmul.f32 %v385, %v342
  %v387 = vmul.f32 %v386, %v385
  %v388 = vmul.f32 0.5, %v387
  %v389 = vsub.f32 1.5, %v388
  %v390 = vmul.f32 %v385, %v389
  %vm391 = vweird.f32 %v342
  %vm392 = vweird.f32 %v385
  %vm393 = vmor %vm391, %vm392
  %v394 = vsel %vm393, %v385, %v390
  %v395 = vrsqrt.pop %v343
  %v396 = vmul.f32 %v395, %v343
  %v397 = vmul.f32 %v396, %v395
  %v398 = vmul.f32 0.5, %v397
  %v399 = vsub.f32 1.5, %v398
  %v400 = vmul.f32 %v395, %v399
  %vm401 = vweird.f32 %v343
  %vm402 = vweird.f32 %v395
  %vm403 = vmor %vm401, %vm402
  %v404 = vsel %vm403, %v395, %v400
  %v405 = vrsqrt.pop %v344
  %v406 = vmul.f32 %v405, %v344
  %v407 = vmul.f32 %v406, %v405
  %v408 = vmul.f32 0.5, %v407
  %v409 = vsub.f32 1.5, %v408
  %v410 = vmul.f32 %v405, %v409
  %vm411 = vweird.f32 %v344
  %vm412 = vweird.f32 %v405
  %vm413 = vmor %vm411, %vm412
  %v414 = vsel %vm413, %v405, %v410
  %v415 = vrsqrt.pop %v345
  %v416 = vmul.f32 %v415, %v345
  %v417 = vmul.f32 %v416, %v415
  %v418 = vmul.f32 0.5, %v417
  %v419 = vsub.f32 1.5, %v418
  %v420 = vmul.f32 %v415, %v419
  %vm421 = vweird.f32 %v345
  %vm422 = vweird.f32 %v415
  %vm423 = vmor %vm421, %vm422
  %v424 = vsel %vm423, %v415, %v420
  %v425 = vrsqrt.pop %v346
  %v426 = vmul.f32 %v425, %v346
  %v427 = vmul.f32 %v426, %v425
  %v428 = vmul.f32 0.5, %v427
  %v429 = vsub.f32 1.5, %v428
  %v430 = vmul.f32 %v425, %v429
  %vm431 = vweird.f32 %v346
  %vm432 = vweird.f32 %v425
  %vm433 = vmor %vm431, %vm432
  %v434 = vsel %vm433, %v425, %v430
  %v435 = vrsqrt.pop %v347
  %v436 = vmul.f32 %v435, %v347
  %v437 = vmul.f32 %v436, %v435
  %v438 = vmul.f32 0.5, %v437
  %v439 = vsub.f32 1.5, %v438
  %v440 = vmul.f32 %v435, %v439
  %vm441 = vweird.f32 %v347
  %vm442 = vweird.f32 %v435
  %vm443 = vmor %vm441, %vm442
  %v444 = vsel %vm443, %v435, %v440
  %v445 = vrsqrt.pop %v348
  %v446 = vmul.f32 %v445, %v348
  %v447 = vmul.f32 %v446, %v445
  %v448 = vmul.f32 0.5, %v447
  %v449 = vsub.f32 1.5, %v448
  %v450 = vmul.f32 %v445, %v449
  %vm451 = vweird.f32 %v348
  %vm452 = vweird.f32 %v445
  %vm453 = vmor %vm451, %vm452
  %v454 = vsel %vm453, %v445, %v450
  %v455 = vrsqrt.pop %v349
  %v456 = vmul.f32 %v455, %v349
  %v457 = vmul.f32 %v456, %v455
  %v458 = vmul.f32 0.5, %v457
  %v459 = vsub.f32 1.5, %v458
  %v460 = vmul.f32 %v455, %v459
  %vm461 = vweird.f32 %v349
  %vm462 = vweird.f32 %v455
  %vm463 = vmor %vm461, %vm462
  %v464 = vsel %vm463, %v455, %v460
  %v465 = vrsqrt.pop %v350
  %v466 = vmul.f32 %v465, %v350
  %v467 = vmul.f32 %v466, %v465
  %v468 = vmul.f32 0.5, %v467
  %v469 = vsub.f32 1.5, %v468
  %v470 = vmul.f32 %v465, %v469
  %vm471 = vweird.f32 %v350
  %vm472 = vweird.f32 %v465
  %vm473 = vmor %vm471, %vm472
  %v474 = vsel %vm473, %v465, %v470
  %v475 = vrsqrt.pop %v351
  %v476 = vmul.f32 %v475, %v351
  %v477 = vmul.f32 %v476, %v475
  %v478 = vmul.f32 0.5, %v477
  %v479 = vsub.f32 1.5, %v478
  %v480 = vmul.f32 %v475, %v479
  %vm481 = vweird.f32 %v351
  %vm482 = vweird.f32 %v475
  %vm483 = vmor %vm481, %vm482
  %v484 = vsel %vm483, %v475, %v480
  %v485 = vrsqrt.pop %v352
  %v486 = vmul.f32 %v485, %v352
  %v487 = vmul.f32 %v486, %v485
  %v488 = vmul.f32 0.5, %v487
  %v489 = vsub.f32 1.5, %v488
  %v490 = vmul.f32 %v485, %v489
  %vm491 = vweird.f32 %v352
  %vm492 = vweird.f32 %v485
  %vm493 = vmor %vm491, %vm492
  %v494 = vsel %vm493, %v485, %v490
  %v495 = vrsqrt.pop %v353
  %v496 = vmul.f32 %v495, %v353
  %v497 = vmul.f32 %v496, %v495
  %v498 = vmul.f32 0.5, %v497
  %v499 = vsub.f32 1.5, %v498
  %v500 = vmul.f32 %v495, %v499
  %vm501 = vweird.f32 %v353
  %vm502 = vweird.f32 %v495
  %vm503 = vmor %vm501, %vm502
  %v504 = vsel %vm503, %v495, %v500
  %v505 = vrsqrt.pop %v354
  %v506 = vmul.f32 %v505, %v354
  %v507 = vmul.f32 %v506, %v505
  %v508 = vmul.f32 0.5, %v507
  %v509 = vsub.f32 1.5, %v508
  %v510 = vmul.f32 %v505, %v509
  %vm511 = vweird.f32 %v354
  %vm512 = vweird.f32 %v505
  %vm513 = vmor %vm511, %vm512
  %v514 = vsel %vm513, %v505, %v510
  %v515 = vmul.f32 %v323, %v364
  %v516 = vmul.f32 %v324, %v374
  %v517 = vmul.f32 %v325, %v384
  %v518 = vmul.f32 %v326, %v394
  %v519 = vmul.f32 %v327, %v404
  %v520 = vmul.f32 %v328, %v414
  %v521 = vmul.f32 %v329, %v424
  %v522 = vmul.f32 %v330, %v434
  %v523 = vmul.f32 %v331, %v444
  %v524 = vmul.f32 %v332, %v454
  %v525 = vmul.f32 %v333, %v464
  %v526 = vmul.f32 %v334, %v474
  %v527 = vmul.f32 %v335, %v484
  %v528 = vmul.f32 %v336, %v494
  %v529 = vmul.f32 %v337, %v504
  %v530 = vmul.f32 %v338, %v514
  %v532 = vperm.slane %v138, 0
  %v534 = vmul.f32 %v515, %v532
  %v535 = vmul.f32 %v516, %v532
  %v536 = vmul.f32 %v517, %v532
  %v537 = vmul.f32 %v518, %v532
  %v538 = vmul.f32 %v519, %v532
  %v539 = vmul.f32 %v520, %v532
  %v540 = vmul.f32 %v521, %v532
  %v541 = vmul.f32 %v522, %v532
  %v542 = vmul.f32 %v523, %v532
  %v543 = vmul.f32 %v524, %v532
  %v544 = vmul.f32 %v525, %v532
  %v545 = vmul.f32 %v526, %v532
  %v546 = vmul.f32 %v527, %v532
  %v547 = vmul.f32 %v528, %v532
  %v548 = vmul.f32 %v529, %v532
  %v549 = vmul.f32 %v530, %v532
  %v551 = vperm.slane %v139, 0
  %v553 = vadd.f32 %v534, %v551
  %v554 = vadd.f32 %v535, %v551
  %v555 = vadd.f32 %v536, %v551
  %v556 = vadd.f32 %v537, %v551
  %v557 = vadd.f32 %v538, %v551
  %v558 = vadd.f32 %v539, %v551
  %v559 = vadd.f32 %v540, %v551
  %v560 = vadd.f32 %v541, %v551
  %v561 = vadd.f32 %v542, %v551
  %v562 = vadd.f32 %v543, %v551
  %v563 = vadd.f32 %v544, %v551
  %v564 = vadd.f32 %v545, %v551
  %v565 = vadd.f32 %v546, %v551
  %v566 = vadd.f32 %v547, %v551
  %v567 = vadd.f32 %v548, %v551
  %v568 = vadd.f32 %v549, %v551
  %v569 = vld [vmem:[%s3] sm:$0xff]
  %v570 = vld [vmem:[%s3 + $0x8] sm:$0xff]
  %v571 = vld [vmem:[%s3 + $0x10] sm:$0xff]
  %v572 = vld [vmem:[%s3 + $0x18] sm:$0xff]
  %v573 = vld [vmem:[%s4] sm:$0x1]
  %v575 = vperm.slane %v573, 0
  %v578 = vsel %vm68, %v553, 0
  %v581 = vsel %vm68, %v554, 0
  %v584 = vsel %vm68, %v555, 0
  %v587 = vsel %vm68, %v556, 0
  %v590 = vsel %vm68, %v557, 0
  %v593 = vsel %vm68, %v558, 0
  %v596 = vsel %vm68, %v559, 0
  %v599 = vsel %vm68, %v560, 0
  %v602 = vsel %vm68, %v561, 0
  %v605 = vsel %vm68, %v562, 0
  %v608 = vsel %vm68, %v563, 0
  %v611 = vsel %vm68, %v564, 0
  %v614 = vsel %vm68, %v565, 0
  %v617 = vsel %vm68, %v566, 0
  %v620 = vsel %vm68, %v567, 0
  %v623 = vsel %vm68, %v568, 0
  %625 = vmatpush.msra.mxu0 0.0
  %626 = vmatpush.msra.mxu0 0.0
  %627 = vmatpush.msra.mxu0 0.0
  %628 = vmatpush.msra.mxu0 0.0
  %629 = vmatpush.msra.mxu0 0.0
  %630 = vmatpush.msra.mxu0 0.0
  %631 = vmatpush.msra.mxu0 0.0
  %632 = vmatpush.msra.mxu0 0.0
  %633 = vmatpush.msra.mxu0 0.0
  %634 = vmatpush.msra.mxu0 0.0
  %635 = vmatpush.msra.mxu0 0.0
  %636 = vmatpush.msra.mxu0 0.0
  %637 = vmatpush.msra.mxu0 %v572
  %638 = vmatpush.msra.mxu0 %v571
  %639 = vmatpush.msra.mxu0 %v570
  %640 = vmatpush.msra.mxu0 %v569
  %641 = vmatmul.f32.gmra.mxu0 %v578
  %v642 = vpop.f32.mrf.mxu0
  %v643 = vadd.f32 %v575, %v642
  %644 = vmatmul.f32.gmra.mxu0 %v581
  %v645 = vpop.f32.mrf.mxu0
  %v646 = vadd.f32 %v575, %v645
  %647 = vmatmul.f32.gmra.mxu0 %v584
  %v648 = vpop.f32.mrf.mxu0
  %v649 = vadd.f32 %v575, %v648
  %650 = vmatmul.f32.gmra.mxu0 %v587
  %v651 = vpop.f32.mrf.mxu0
  %v652 = vadd.f32 %v575, %v651
  %653 = vmatmul.f32.gmra.mxu0 %v590
  %v654 = vpop.f32.mrf.mxu0
  %v655 = vadd.f32 %v575, %v654
  %656 = vmatmul.f32.gmra.mxu0 %v593
  %v657 = vpop.f32.mrf.mxu0
  %v658 = vadd.f32 %v575, %v657
  %659 = vmatmul.f32.gmra.mxu0 %v596
  %v660 = vpop.f32.mrf.mxu0
  %v661 = vadd.f32 %v575, %v660
  %662 = vmatmul.f32.gmra.mxu0 %v599
  %v663 = vpop.f32.mrf.mxu0
  %v664 = vadd.f32 %v575, %v663
  %665 = vmatmul.f32.gmra.mxu0 %v602
  %v666 = vpop.f32.mrf.mxu0
  %v667 = vadd.f32 %v575, %v666
  %668 = vmatmul.f32.gmra.mxu0 %v605
  %v669 = vpop.f32.mrf.mxu0
  %v670 = vadd.f32 %v575, %v669
  %671 = vmatmul.f32.gmra.mxu0 %v608
  %v672 = vpop.f32.mrf.mxu0
  %v673 = vadd.f32 %v575, %v672
  %674 = vmatmul.f32.gmra.mxu0 %v611
  %v675 = vpop.f32.mrf.mxu0
  %v676 = vadd.f32 %v575, %v675
  %677 = vmatmul.f32.gmra.mxu0 %v614
  %v678 = vpop.f32.mrf.mxu0
  %v679 = vadd.f32 %v575, %v678
  %680 = vmatmul.f32.gmra.mxu0 %v617
  %v681 = vpop.f32.mrf.mxu0
  %v682 = vadd.f32 %v575, %v681
  %683 = vmatmul.f32.gmra.mxu0 %v620
  %v684 = vpop.f32.mrf.mxu0
  %v685 = vadd.f32 %v575, %v684
  %686 = vmatmul.f32.gmra.mxu0 %v623
  %v687 = vpop.f32.mrf.mxu0
  %v688 = vadd.f32 %v575, %v687
  %689 = vdwg.mxu0
  %698 = vrot.lane.b32.xlu0 %v643, 96
  %v699 = vpop.permute.xlu0 %698
  %700 = vrot.lane.b32.xlu0 %v646, 96
  %v701 = vpop.permute.xlu0 %700
  %702 = vrot.lane.b32.xlu0 %v649, 96
  %v703 = vpop.permute.xlu0 %702
  %704 = vrot.lane.b32.xlu0 %v652, 96
  %v705 = vpop.permute.xlu0 %704
  %706 = vrot.lane.b32.xlu0 %v655, 96
  %v707 = vpop.permute.xlu0 %706
  %708 = vrot.lane.b32.xlu0 %v658, 96
  %v709 = vpop.permute.xlu0 %708
  %710 = vrot.lane.b32.xlu0 %v661, 96
  %v711 = vpop.permute.xlu0 %710
  %712 = vrot.lane.b32.xlu0 %v664, 96
  %v713 = vpop.permute.xlu0 %712
  %vm714 = vcmask 64512
  %v715 = vsel %vm714, %v643, 0
  %v717 = vsel %vm714, %v646, 0
  %v719 = vsel %vm714, %v649, 0
  %v721 = vsel %vm714, %v652, 0
  %v723 = vsel %vm714, %v655, 0
  %v725 = vsel %vm714, %v658, 0
  %v727 = vsel %vm714, %v661, 0
  %v729 = vsel %vm714, %v664, 0
  %v731 = vsel %vm714, %v699, 0
  %v733 = vsel %vm714, %v701, 0
  %v735 = vsel %vm714, %v703, 0
  %v737 = vsel %vm714, %v705, 0
  %v739 = vsel %vm714, %v707, 0
  %v741 = vsel %vm714, %v709, 0
  %v743 = vsel %vm714, %v711, 0
  %v745 = vsel %vm714, %v713, 0
  %747 = vmatpush.xpose.msra.mxu0 0.0
  %748 = vmatpush.xpose.msra.mxu0 0.0
  %749 = vmatpush.xpose.msra.mxu0 0.0
  %750 = vmatpush.xpose.msra.mxu0 0.0
  %751 = vmatpush.xpose.msra.mxu0 0.0
  %752 = vmatpush.xpose.msra.mxu0 0.0
  %753 = vmatpush.xpose.msra.mxu0 0.0
  %754 = vmatpush.xpose.msra.mxu0 0.0
  %755 = vmatpush.xpose.msra.mxu0 %v745
  %756 = vmatpush.xpose.msra.mxu0 %v743
  %757 = vmatpush.xpose.msra.mxu0 %v741
  %758 = vmatpush.xpose.msra.mxu0 %v739
  %759 = vmatpush.xpose.msra.mxu0 %v737
  %760 = vmatpush.xpose.msra.mxu0 %v735
  %761 = vmatpush.xpose.msra.mxu0 %v733
  %762 = vmatpush.xpose.msra.mxu0 %v731
  %763 = vmatmul.f32.gmra.mxu0 %v715
  %v764 = vpop.f32.mrf.mxu0
  %v765 = vadd.f32 0.0, %v764
  %766 = vmatmul.f32.gmra.mxu0 %v717
  %v767 = vpop.f32.mrf.mxu0
  %v768 = vadd.f32 0.0, %v767
  %769 = vmatmul.f32.gmra.mxu0 %v719
  %v770 = vpop.f32.mrf.mxu0
  %v771 = vadd.f32 0.0, %v770
  %772 = vmatmul.f32.gmra.mxu0 %v721
  %v773 = vpop.f32.mrf.mxu0
  %v774 = vadd.f32 0.0, %v773
  %775 = vmatmul.f32.gmra.mxu0 %v723
  %v776 = vpop.f32.mrf.mxu0
  %v777 = vadd.f32 0.0, %v776
  %778 = vmatmul.f32.gmra.mxu0 %v725
  %v779 = vpop.f32.mrf.mxu0
  %v780 = vadd.f32 0.0, %v779
  %781 = vmatmul.f32.gmra.mxu0 %v727
  %v782 = vpop.f32.mrf.mxu0
  %v783 = vadd.f32 0.0, %v782
  %784 = vmatmul.f32.gmra.mxu0 %v729
  %v785 = vpop.f32.mrf.mxu0
  %v786 = vadd.f32 0.0, %v785
  %787 = vdwg.mxu0
  %vm788 = vcmask 523264
  %v789 = vsel %vm788, %v765, -inf
  %790 = vmax.xlane.f32.xlu0 %v789
  %v791 = vpop.xlane.xlu0 %790
  %v792 = vsel %vm788, %v768, -inf
  %793 = vmax.xlane.f32.xlu0 %v792
  %v794 = vpop.xlane.xlu0 %793
  %v795 = vsel %vm788, %v771, -inf
  %796 = vmax.xlane.f32.xlu0 %v795
  %v797 = vpop.xlane.xlu0 %796
  %v798 = vsel %vm788, %v774, -inf
  %799 = vmax.xlane.f32.xlu0 %v798
  %v800 = vpop.xlane.xlu0 %799
  %v801 = vsel %vm788, %v777, -inf
  %802 = vmax.xlane.f32.xlu0 %v801
  %v803 = vpop.xlane.xlu0 %802
  %v804 = vsel %vm788, %v780, -inf
  %805 = vmax.xlane.f32.xlu0 %v804
  %v806 = vpop.xlane.xlu0 %805
  %v807 = vsel %vm788, %v783, -inf
  %808 = vmax.xlane.f32.xlu0 %v807
  %v809 = vpop.xlane.xlu0 %808
  %v810 = vsel %vm788, %v786, -inf
  %811 = vmax.xlane.f32.xlu0 %v810
  %v812 = vpop.xlane.xlu0 %811
  %v813 = vsub.f32 %v765, %v791
  %v814 = vsub.f32 %v768, %v794
  %v815 = vsub.f32 %v771, %v797
  %v816 = vsub.f32 %v774, %v800
  %v817 = vsub.f32 %v777, %v803
  %v818 = vsub.f32 %v780, %v806
  %v819 = vsub.f32 %v783, %v809
  %v820 = vsub.f32 %v786, %v812
  %v821 = vmul.f32 %v813, 1.442695
  %v822 = vpow.pop %v821
  %v823 = vmul.f32 %v814, 1.442695
  %v824 = vpow.pop %v823
  %v825 = vmul.f32 %v815, 1.442695
  %v826 = vpow.pop %v825
  %v827 = vmul.f32 %v816, 1.442695
  %v828 = vpow.pop %v827
  %v829 = vmul.f32 %v817, 1.442695
  %v830 = vpow.pop %v829
  %v831 = vmul.f32 %v818, 1.442695
  %v832 = vpow.pop %v831
  %v833 = vmul.f32 %v819, 1.442695
  %v834 = vpow.pop %v833
  %v835 = vmul.f32 %v820, 1.442695
  %v836 = vpow.pop %v835
  %v837 = vsel %vm788, %v822, 0.0
  %838 = vadd.xlane.f32.xlu0 %v837
  %v839 = vpop.xlane.xlu0 %838
  %v840 = vsel %vm788, %v824, 0.0
  %841 = vadd.xlane.f32.xlu0 %v840
  %v842 = vpop.xlane.xlu0 %841
  %v843 = vsel %vm788, %v826, 0.0
  %844 = vadd.xlane.f32.xlu0 %v843
  %v845 = vpop.xlane.xlu0 %844
  %v846 = vsel %vm788, %v828, 0.0
  %847 = vadd.xlane.f32.xlu0 %v846
  %v848 = vpop.xlane.xlu0 %847
  %v849 = vsel %vm788, %v830, 0.0
  %850 = vadd.xlane.f32.xlu0 %v849
  %v851 = vpop.xlane.xlu0 %850
  %v852 = vsel %vm788, %v832, 0.0
  %853 = vadd.xlane.f32.xlu0 %v852
  %v854 = vpop.xlane.xlu0 %853
  %v855 = vsel %vm788, %v834, 0.0
  %856 = vadd.xlane.f32.xlu0 %v855
  %v857 = vpop.xlane.xlu0 %856
  %v858 = vsel %vm788, %v836, 0.0
  %859 = vadd.xlane.f32.xlu0 %v858
  %v860 = vpop.xlane.xlu0 %859
  %v861 = vrcp.pop %v839
  %v862 = vrcp.pop %v842
  %v863 = vrcp.pop %v845
  %v864 = vrcp.pop %v848
  %v865 = vrcp.pop %v851
  %v866 = vrcp.pop %v854
  %v867 = vrcp.pop %v857
  %v868 = vrcp.pop %v860
  %v869 = vmul.f32 %v822, %v861
  %v870 = vmul.f32 %v824, %v862
  %v871 = vmul.f32 %v826, %v863
  %v872 = vmul.f32 %v828, %v864
  %v873 = vmul.f32 %v830, %v865
  %v874 = vmul.f32 %v832, %v866
  %v875 = vmul.f32 %v834, %v867
  %v876 = vmul.f32 %v836, %v868
  %877 = vrot.lane.b32.xlu0 %v643, 64
  %v878 = vpop.permute.xlu0 %877
  %879 = vrot.lane.b32.xlu0 %v646, 64
  %v880 = vpop.permute.xlu0 %879
  %881 = vrot.lane.b32.xlu0 %v649, 64
  %v882 = vpop.permute.xlu0 %881
  %883 = vrot.lane.b32.xlu0 %v652, 64
  %v884 = vpop.permute.xlu0 %883
  %885 = vrot.lane.b32.xlu0 %v655, 64
  %v886 = vpop.permute.xlu0 %885
  %887 = vrot.lane.b32.xlu0 %v658, 64
  %v888 = vpop.permute.xlu0 %887
  %889 = vrot.lane.b32.xlu0 %v661, 64
  %v890 = vpop.permute.xlu0 %889
  %891 = vrot.lane.b32.xlu0 %v664, 64
  %v892 = vpop.permute.xlu0 %891
  %v902 = vsel %vm788, %v869, 0
  %v905 = vsel %vm788, %v870, 0
  %v908 = vsel %vm788, %v871, 0
  %v911 = vsel %vm788, %v872, 0
  %v914 = vsel %vm788, %v873, 0
  %v917 = vsel %vm788, %v874, 0
  %v920 = vsel %vm788, %v875, 0
  %v923 = vsel %vm788, %v876, 0
  %925 = vmatpush.msra.mxu0 0.0
  %926 = vmatpush.msra.mxu0 0.0
  %927 = vmatpush.msra.mxu0 0.0
  %928 = vmatpush.msra.mxu0 0.0
  %929 = vmatpush.msra.mxu0 0.0
  %930 = vmatpush.msra.mxu0 0.0
  %931 = vmatpush.msra.mxu0 0.0
  %932 = vmatpush.msra.mxu0 0.0
  %933 = vmatpush.msra.mxu0 %v892
  %934 = vmatpush.msra.mxu0 %v890
  %935 = vmatpush.msra.mxu0 %v888
  %936 = vmatpush.msra.mxu0 %v886
  %937 = vmatpush.msra.mxu0 %v884
  %938 = vmatpush.msra.mxu0 %v882
  %939 = vmatpush.msra.mxu0 %v880
  %940 = vmatpush.msra.mxu0 %v878
  %941 = vmatmul.f32.gmra.mxu0 %v902
  %v942 = vpop.f32.mrf.mxu0
  %v943 = vadd.f32 0.0, %v942
  %944 = vmatmul.f32.gmra.mxu0 %v905
  %v945 = vpop.f32.mrf.mxu0
  %v946 = vadd.f32 0.0, %v945
  %947 = vmatmul.f32.gmra.mxu0 %v908
  %v948 = vpop.f32.mrf.mxu0
  %v949 = vadd.f32 0.0, %v948
  %950 = vmatmul.f32.gmra.mxu0 %v911
  %v951 = vpop.f32.mrf.mxu0
  %v952 = vadd.f32 0.0, %v951
  %953 = vmatmul.f32.gmra.mxu0 %v914
  %v954 = vpop.f32.mrf.mxu0
  %v955 = vadd.f32 0.0, %v954
  %956 = vmatmul.f32.gmra.mxu0 %v917
  %v957 = vpop.f32.mrf.mxu0
  %v958 = vadd.f32 0.0, %v957
  %959 = vmatmul.f32.gmra.mxu0 %v920
  %v960 = vpop.f32.mrf.mxu0
  %v961 = vadd.f32 0.0, %v960
  %962 = vmatmul.f32.gmra.mxu0 %v923
  %v963 = vpop.f32.mrf.mxu0
  %v964 = vadd.f32 0.0, %v963
  %965 = vdwg.mxu0
  %966 = vst.msk [vmem:[#allocation3] sm:$0xff] %vm714, %v943
  %967 = vst.msk [vmem:[#allocation3 + $0x8] sm:$0xff] %vm714, %v946
  %968 = vst.msk [vmem:[#allocation3 + $0x10] sm:$0xff] %vm714, %v949
  %969 = vst.msk [vmem:[#allocation3 + $0x18] sm:$0xff] %vm714, %v952
  %970 = vst.msk [vmem:[#allocation3 + $0x20] sm:$0xff] %vm714, %v955
  %971 = vst.msk [vmem:[#allocation3 + $0x28] sm:$0xff] %vm714, %v958
  %972 = vst.msk [vmem:[#allocation3 + $0x30] sm:$0xff] %vm714, %v961
  %973 = vst.msk [vmem:[#allocation3 + $0x38] sm:$0xff] %vm714, %v964
  %974 = vrot.lane.b32.xlu0 %v643, 120
  %v975 = vpop.permute.xlu0 %974
  %976 = vrot.lane.b32.xlu0 %v646, 120
  %v977 = vpop.permute.xlu0 %976
  %978 = vrot.lane.b32.xlu0 %v649, 120
  %v979 = vpop.permute.xlu0 %978
  %980 = vrot.lane.b32.xlu0 %v652, 120
  %v981 = vpop.permute.xlu0 %980
  %982 = vrot.lane.b32.xlu0 %v655, 120
  %v983 = vpop.permute.xlu0 %982
  %984 = vrot.lane.b32.xlu0 %v658, 120
  %v985 = vpop.permute.xlu0 %984
  %986 = vrot.lane.b32.xlu0 %v661, 120
  %v987 = vpop.permute.xlu0 %986
  %988 = vrot.lane.b32.xlu0 %v664, 120
  %v989 = vpop.permute.xlu0 %988
  %990 = vrot.lane.b32.xlu0 %v643, 88
  %v991 = vpop.permute.xlu0 %990
  %992 = vrot.lane.b32.xlu0 %v646, 88
  %v993 = vpop.permute.xlu0 %992
  %994 = vrot.lane.b32.xlu0 %v649, 88
  %v995 = vpop.permute.xlu0 %994
  %996 = vrot.lane.b32.xlu0 %v652, 88
  %v997 = vpop.permute.xlu0 %996
  %998 = vrot.lane.b32.xlu0 %v655, 88
  %v999 = vpop.permute.xlu0 %998
  %1000 = vrot.lane.b32.xlu0 %v658, 88
  %v1001 = vpop.permute.xlu0 %1000
  %1002 = vrot.lane.b32.xlu0 %v661, 88
  %v1003 = vpop.permute.xlu0 %1002
  %1004 = vrot.lane.b32.xlu0 %v664, 88
  %v1005 = vpop.permute.xlu0 %1004
  %v1006 = vsel %vm714, %v975, 0
  %v1008 = vsel %vm714, %v977, 0
  %v1010 = vsel %vm714, %v979, 0
  %v1012 = vsel %vm714, %v981, 0
  %v1014 = vsel %vm714, %v983, 0
  %v1016 = vsel %vm714, %v985, 0
  %v1018 = vsel %vm714, %v987, 0
  %v1020 = vsel %vm714, %v989, 0
  %v1022 = vsel %vm714, %v991, 0
  %v1024 = vsel %vm714, %v993, 0
  %v1026 = vsel %vm714, %v995, 0
  %v1028 = vsel %vm714, %v997, 0
  %v1030 = vsel %vm714, %v999, 0
  %v1032 = vsel %vm714, %v1001, 0
  %v1034 = vsel %vm714, %v1003, 0
  %v1036 = vsel %vm714, %v1005, 0
  %1038 = vmatpush.xpose.msra.mxu0 0.0
  %1039 = vmatpush.xpose.msra.mxu0 0.0
  %1040 = vmatpush.xpose.msra.mxu0 0.0
  %1041 = vmatpush.xpose.msra.mxu0 0.0
  %1042 = vmatpush.xpose.msra.mxu0 0.0
  %1043 = vmatpush.xpose.msra.mxu0 0.0
  %1044 = vmatpush.xpose.msra.mxu0 0.0
  %1045 = vmatpush.xpose.msra.mxu0 0.0
  %1046 = vmatpush.xpose.msra.mxu0 %v1036
  %1047 = vmatpush.xpose.msra.mxu0 %v1034
  %1048 = vmatpush.xpose.msra.mxu0 %v1032
  %1049 = vmatpush.xpose.msra.mxu0 %v1030
  %1050 = vmatpush.xpose.msra.mxu0 %v1028
  %1051 = vmatpush.xpose.msra.mxu0 %v1026
  %1052 = vmatpush.xpose.msra.mxu0 %v1024
  %1053 = vmatpush.xpose.msra.mxu0 %v1022
  %1054 = vmatmul.f32.gmra.mxu0 %v1006
  %v1055 = vpop.f32.mrf.mxu0
  %v1056 = vadd.f32 0.0, %v1055
  %1057 = vmatmul.f32.gmra.mxu0 %v1008
  %v1058 = vpop.f32.mrf.mxu0
  %v1059 = vadd.f32 0.0, %v1058
  %1060 = vmatmul.f32.gmra.mxu0 %v1010
  %v1061 = vpop.f32.mrf.mxu0
  %v1062 = vadd.f32 0.0, %v1061
  %1063 = vmatmul.f32.gmra.mxu0 %v1012
  %v1064 = vpop.f32.mrf.mxu0
  %v1065 = vadd.f32 0.0, %v1064
  %1066 = vmatmul.f32.gmra.mxu0 %v1014
  %v1067 = vpop.f32.mrf.mxu0
  %v1068 = vadd.f32 0.0, %v1067
  %1069 = vmatmul.f32.gmra.mxu0 %v1016
  %v1070 = vpop.f32.mrf.mxu0
  %v1071 = vadd.f32 0.0, %v1070
  %1072 = vmatmul.f32.gmra.mxu0 %v1018
  %v1073 = vpop.f32.mrf.mxu0
  %v1074 = vadd.f32 0.0, %v1073
  %1075 = vmatmul.f32.gmra.mxu0 %v1020
  %v1076 = vpop.f32.mrf.mxu0
  %v1077 = vadd.f32 0.0, %v1076
  %1078 = vdwg.mxu0
  %v1079 = vsel %vm788, %v1056, -inf
  %1080 = vmax.xlane.f32.xlu0 %v1079
  %v1081 = vpop.xlane.xlu0 %1080
  %v1082 = vsel %vm788, %v1059, -inf
  %1083 = vmax.xlane.f32.xlu0 %v1082
  %v1084 = vpop.xlane.xlu0 %1083
  %v1085 = vsel %vm788, %v1062, -inf
  %1086 = vmax.xlane.f32.xlu0 %v1085
  %v1087 = vpop.xlane.xlu0 %1086
  %v1088 = vsel %vm788, %v1065, -inf
  %1089 = vmax.xlane.f32.xlu0 %v1088
  %v1090 = vpop.xlane.xlu0 %1089
  %v1091 = vsel %vm788, %v1068, -inf
  %1092 = vmax.xlane.f32.xlu0 %v1091
  %v1093 = vpop.xlane.xlu0 %1092
  %v1094 = vsel %vm788, %v1071, -inf
  %1095 = vmax.xlane.f32.xlu0 %v1094
  %v1096 = vpop.xlane.xlu0 %1095
  %v1097 = vsel %vm788, %v1074, -inf
  %1098 = vmax.xlane.f32.xlu0 %v1097
  %v1099 = vpop.xlane.xlu0 %1098
  %v1100 = vsel %vm788, %v1077, -inf
  %1101 = vmax.xlane.f32.xlu0 %v1100
  %v1102 = vpop.xlane.xlu0 %1101
  %v1103 = vsub.f32 %v1056, %v1081
  %v1104 = vsub.f32 %v1059, %v1084
  %v1105 = vsub.f32 %v1062, %v1087
  %v1106 = vsub.f32 %v1065, %v1090
  %v1107 = vsub.f32 %v1068, %v1093
  %v1108 = vsub.f32 %v1071, %v1096
  %v1109 = vsub.f32 %v1074, %v1099
  %v1110 = vsub.f32 %v1077, %v1102
  %v1111 = vmul.f32 %v1103, 1.442695
  %v1112 = vpow.pop %v1111
  %v1113 = vmul.f32 %v1104, 1.442695
  %v1114 = vpow.pop %v1113
  %v1115 = vmul.f32 %v1105, 1.442695
  %v1116 = vpow.pop %v1115
  %v1117 = vmul.f32 %v1106, 1.442695
  %v1118 = vpow.pop %v1117
  %v1119 = vmul.f32 %v1107, 1.442695
  %v1120 = vpow.pop %v1119
  %v1121 = vmul.f32 %v1108, 1.442695
  %v1122 = vpow.pop %v1121
  %v1123 = vmul.f32 %v1109, 1.442695
  %v1124 = vpow.pop %v1123
  %v1125 = vmul.f32 %v1110, 1.442695
  %v1126 = vpow.pop %v1125
  %v1127 = vsel %vm788, %v1112, 0.0
  %1128 = vadd.xlane.f32.xlu0 %v1127
  %v1129 = vpop.xlane.xlu0 %1128
  %v1130 = vsel %vm788, %v1114, 0.0
  %1131 = vadd.xlane.f32.xlu0 %v1130
  %v1132 = vpop.xlane.xlu0 %1131
  %v1133 = vsel %vm788, %v1116, 0.0
  %1134 = vadd.xlane.f32.xlu0 %v1133
  %v1135 = vpop.xlane.xlu0 %1134
  %v1136 = vsel %vm788, %v1118, 0.0
  %1137 = vadd.xlane.f32.xlu0 %v1136
  %v1138 = vpop.xlane.xlu0 %1137
  %v1139 = vsel %vm788, %v1120, 0.0
  %1140 = vadd.xlane.f32.xlu0 %v1139
  %v1141 = vpop.xlane.xlu0 %1140
  %v1142 = vsel %vm788, %v1122, 0.0
  %1143 = vadd.xlane.f32.xlu0 %v1142
  %v1144 = vpop.xlane.xlu0 %1143
  %v1145 = vsel %vm788, %v1124, 0.0
  %1146 = vadd.xlane.f32.xlu0 %v1145
  %v1147 = vpop.xlane.xlu0 %1146
  %v1148 = vsel %vm788, %v1126, 0.0
  %1149 = vadd.xlane.f32.xlu0 %v1148
  %v1150 = vpop.xlane.xlu0 %1149
  %v1151 = vrcp.pop %v1129
  %v1152 = vrcp.pop %v1132
  %v1153 = vrcp.pop %v1135
  %v1154 = vrcp.pop %v1138
  %v1155 = vrcp.pop %v1141
  %v1156 = vrcp.pop %v1144
  %v1157 = vrcp.pop %v1147
  %v1158 = vrcp.pop %v1150
  %v1159 = vmul.f32 %v1112, %v1151
  %v1160 = vmul.f32 %v1114, %v1152
  %v1161 = vmul.f32 %v1116, %v1153
  %v1162 = vmul.f32 %v1118, %v1154
  %v1163 = vmul.f32 %v1120, %v1155
  %v1164 = vmul.f32 %v1122, %v1156
  %v1165 = vmul.f32 %v1124, %v1157
  %v1166 = vmul.f32 %v1126, %v1158
  %1167 = vrot.lane.b32.xlu0 %v643, 56
  %v1168 = vpop.permute.xlu0 %1167
  %1169 = vrot.lane.b32.xlu0 %v646, 56
  %v1170 = vpop.permute.xlu0 %1169
  %1171 = vrot.lane.b32.xlu0 %v649, 56
  %v1172 = vpop.permute.xlu0 %1171
  %1173 = vrot.lane.b32.xlu0 %v652, 56
  %v1174 = vpop.permute.xlu0 %1173
  %1175 = vrot.lane.b32.xlu0 %v655, 56
  %v1176 = vpop.permute.xlu0 %1175
  %1177 = vrot.lane.b32.xlu0 %v658, 56
  %v1178 = vpop.permute.xlu0 %1177
  %1179 = vrot.lane.b32.xlu0 %v661, 56
  %v1180 = vpop.permute.xlu0 %1179
  %1181 = vrot.lane.b32.xlu0 %v664, 56
  %v1182 = vpop.permute.xlu0 %1181
  %v1192 = vsel %vm788, %v1159, 0
  %v1195 = vsel %vm788, %v1160, 0
  %v1198 = vsel %vm788, %v1161, 0
  %v1201 = vsel %vm788, %v1162, 0
  %v1204 = vsel %vm788, %v1163, 0
  %v1207 = vsel %vm788, %v1164, 0
  %v1210 = vsel %vm788, %v1165, 0
  %v1213 = vsel %vm788, %v1166, 0
  %1215 = vmatpush.msra.mxu0 0.0
  %1216 = vmatpush.msra.mxu0 0.0
  %1217 = vmatpush.msra.mxu0 0.0
  %1218 = vmatpush.msra.mxu0 0.0
  %1219 = vmatpush.msra.mxu0 0.0
  %1220 = vmatpush.msra.mxu0 0.0
  %1221 = vmatpush.msra.mxu0 0.0
  %1222 = vmatpush.msra.mxu0 0.0
  %1223 = vmatpush.msra.mxu0 %v1182
  %1224 = vmatpush.msra.mxu0 %v1180
  %1225 = vmatpush.msra.mxu0 %v1178
  %1226 = vmatpush.msra.mxu0 %v1176
  %1227 = vmatpush.msra.mxu0 %v1174
  %1228 = vmatpush.msra.mxu0 %v1172
  %1229 = vmatpush.msra.mxu0 %v1170
  %1230 = vmatpush.msra.mxu0 %v1168
  %1231 = vmatmul.f32.gmra.mxu0 %v1192
  %v1232 = vpop.f32.mrf.mxu0
  %v1233 = vadd.f32 0.0, %v1232
  %1234 = vmatmul.f32.gmra.mxu0 %v1195
  %v1235 = vpop.f32.mrf.mxu0
  %v1236 = vadd.f32 0.0, %v1235
  %1237 = vmatmul.f32.gmra.mxu0 %v1198
  %v1238 = vpop.f32.mrf.mxu0
  %v1239 = vadd.f32 0.0, %v1238
  %1240 = vmatmul.f32.gmra.mxu0 %v1201
  %v1241 = vpop.f32.mrf.mxu0
  %v1242 = vadd.f32 0.0, %v1241
  %1243 = vmatmul.f32.gmra.mxu0 %v1204
  %v1244 = vpop.f32.mrf.mxu0
  %v1245 = vadd.f32 0.0, %v1244
  %1246 = vmatmul.f32.gmra.mxu0 %v1207
  %v1247 = vpop.f32.mrf.mxu0
  %v1248 = vadd.f32 0.0, %v1247
  %1249 = vmatmul.f32.gmra.mxu0 %v1210
  %v1250 = vpop.f32.mrf.mxu0
  %v1251 = vadd.f32 0.0, %v1250
  %1252 = vmatmul.f32.gmra.mxu0 %v1213
  %v1253 = vpop.f32.mrf.mxu0
  %v1254 = vadd.f32 0.0, %v1253
  %1255 = vdwg.mxu0
  %1264 = vrot.lane.b32.xlu0 %v1233, 8
  %v1265 = vpop.permute.xlu0 %1264
  %1266 = vrot.lane.b32.xlu0 %v1236, 8
  %v1267 = vpop.permute.xlu0 %1266
  %1268 = vrot.lane.b32.xlu0 %v1239, 8
  %v1269 = vpop.permute.xlu0 %1268
  %1270 = vrot.lane.b32.xlu0 %v1242, 8
  %v1271 = vpop.permute.xlu0 %1270
  %1272 = vrot.lane.b32.xlu0 %v1245, 8
  %v1273 = vpop.permute.xlu0 %1272
  %1274 = vrot.lane.b32.xlu0 %v1248, 8
  %v1275 = vpop.permute.xlu0 %1274
  %1276 = vrot.lane.b32.xlu0 %v1251, 8
  %v1277 = vpop.permute.xlu0 %1276
  %1278 = vrot.lane.b32.xlu0 %v1254, 8
  %v1279 = vpop.permute.xlu0 %1278
  %vm1288 = vcmask 130112
  %1289 = vst.msk [vmem:[#allocation3] sm:$0xff] %vm1288, %v1265
  %1290 = vst.msk [vmem:[#allocation3 + $0x8] sm:$0xff] %vm1288, %v1267
  %1291 = vst.msk [vmem:[#allocation3 + $0x10] sm:$0xff] %vm1288, %v1269
  %1292 = vst.msk [vmem:[#allocation3 + $0x18] sm:$0xff] %vm1288, %v1271
  %1293 = vst.msk [vmem:[#allocation3 + $0x20] sm:$0xff] %vm1288, %v1273
  %1294 = vst.msk [vmem:[#allocation3 + $0x28] sm:$0xff] %vm1288, %v1275
  %1295 = vst.msk [vmem:[#allocation3 + $0x30] sm:$0xff] %vm1288, %v1277
  %1296 = vst.msk [vmem:[#allocation3 + $0x38] sm:$0xff] %vm1288, %v1279
  %1297 = vrot.lane.b32.xlu0 %v643, 112
  %v1298 = vpop.permute.xlu0 %1297
  %1299 = vrot.lane.b32.xlu0 %v646, 112
  %v1300 = vpop.permute.xlu0 %1299
  %1301 = vrot.lane.b32.xlu0 %v649, 112
  %v1302 = vpop.permute.xlu0 %1301
  %1303 = vrot.lane.b32.xlu0 %v652, 112
  %v1304 = vpop.permute.xlu0 %1303
  %1305 = vrot.lane.b32.xlu0 %v655, 112
  %v1306 = vpop.permute.xlu0 %1305
  %1307 = vrot.lane.b32.xlu0 %v658, 112
  %v1308 = vpop.permute.xlu0 %1307
  %1309 = vrot.lane.b32.xlu0 %v661, 112
  %v1310 = vpop.permute.xlu0 %1309
  %1311 = vrot.lane.b32.xlu0 %v664, 112
  %v1312 = vpop.permute.xlu0 %1311
  %1313 = vrot.lane.b32.xlu0 %v643, 80
  %v1314 = vpop.permute.xlu0 %1313
  %1315 = vrot.lane.b32.xlu0 %v646, 80
  %v1316 = vpop.permute.xlu0 %1315
  %1317 = vrot.lane.b32.xlu0 %v649, 80
  %v1318 = vpop.permute.xlu0 %1317
  %1319 = vrot.lane.b32.xlu0 %v652, 80
  %v1320 = vpop.permute.xlu0 %1319
  %1321 = vrot.lane.b32.xlu0 %v655, 80
  %v1322 = vpop.permute.xlu0 %1321
  %1323 = vrot.lane.b32.xlu0 %v658, 80
  %v1324 = vpop.permute.xlu0 %1323
  %1325 = vrot.lane.b32.xlu0 %v661, 80
  %v1326 = vpop.permute.xlu0 %1325
  %1327 = vrot.lane.b32.xlu0 %v664, 80
  %v1328 = vpop.permute.xlu0 %1327
  %v1329 = vsel %vm714, %v1298, 0
  %v1331 = vsel %vm714, %v1300, 0
  %v1333 = vsel %vm714, %v1302, 0
  %v1335 = vsel %vm714, %v1304, 0
  %v1337 = vsel %vm714, %v1306, 0
  %v1339 = vsel %vm714, %v1308, 0
  %v1341 = vsel %vm714, %v1310, 0
  %v1343 = vsel %vm714, %v1312, 0
  %v1345 = vsel %vm714, %v1314, 0
  %v1347 = vsel %vm714, %v1316, 0
  %v1349 = vsel %vm714, %v1318, 0
  %v1351 = vsel %vm714, %v1320, 0
  %v1353 = vsel %vm714, %v1322, 0
  %v1355 = vsel %vm714, %v1324, 0
  %v1357 = vsel %vm714, %v1326, 0
  %v1359 = vsel %vm714, %v1328, 0
  %1361 = vmatpush.xpose.msra.mxu0 0.0
  %1362 = vmatpush.xpose.msra.mxu0 0.0
  %1363 = vmatpush.xpose.msra.mxu0 0.0
  %1364 = vmatpush.xpose.msra.mxu0 0.0
  %1365 = vmatpush.xpose.msra.mxu0 0.0
  %1366 = vmatpush.xpose.msra.mxu0 0.0
  %1367 = vmatpush.xpose.msra.mxu0 0.0
  %1368 = vmatpush.xpose.msra.mxu0 0.0
  %1369 = vmatpush.xpose.msra.mxu0 %v1359
  %1370 = vmatpush.xpose.msra.mxu0 %v1357
  %1371 = vmatpush.xpose.msra.mxu0 %v1355
  %1372 = vmatpush.xpose.msra.mxu0 %v1353
  %1373 = vmatpush.xpose.msra.mxu0 %v1351
  %1374 = vmatpush.xpose.msra.mxu0 %v1349
  %1375 = vmatpush.xpose.msra.mxu0 %v1347
  %1376 = vmatpush.xpose.msra.mxu0 %v1345
  %1377 = vmatmul.f32.gmra.mxu0 %v1329
  %v1378 = vpop.f32.mrf.mxu0
  %v1379 = vadd.f32 0.0, %v1378
  %1380 = vmatmul.f32.gmra.mxu0 %v1331
  %v1381 = vpop.f32.mrf.mxu0
  %v1382 = vadd.f32 0.0, %v1381
  %1383 = vmatmul.f32.gmra.mxu0 %v1333
  %v1384 = vpop.f32.mrf.mxu0
  %v1385 = vadd.f32 0.0, %v1384
  %1386 = vmatmul.f32.gmra.mxu0 %v1335
  %v1387 = vpop.f32.mrf.mxu0
  %v1388 = vadd.f32 0.0, %v1387
  %1389 = vmatmul.f32.gmra.mxu0 %v1337
  %v1390 = vpop.f32.mrf.mxu0
  %v1391 = vadd.f32 0.0, %v1390
  %1392 = vmatmul.f32.gmra.mxu0 %v1339
  %v1393 = vpop.f32.mrf.mxu0
  %v1394 = vadd.f32 0.0, %v1393
  %1395 = vmatmul.f32.gmra.mxu0 %v1341
  %v1396 = vpop.f32.mrf.mxu0
  %v1397 = vadd.f32 0.0, %v1396
  %1398 = vmatmul.f32.gmra.mxu0 %v1343
  %v1399 = vpop.f32.mrf.mxu0
  %v1400 = vadd.f32 0.0, %v1399
  %1401 = vdwg.mxu0
  %v1402 = vsel %vm788, %v1379, -inf
  %1403 = vmax.xlane.f32.xlu0 %v1402
  %v1404 = vpop.xlane.xlu0 %1403
  %v1405 = vsel %vm788, %v1382, -inf
  %1406 = vmax.xlane.f32.xlu0 %v1405
  %v1407 = vpop.xlane.xlu0 %1406
  %v1408 = vsel %vm788, %v1385, -inf
  %1409 = vmax.xlane.f32.xlu0 %v1408
  %v1410 = vpop.xlane.xlu0 %1409
  %v1411 = vsel %vm788, %v1388, -inf
  %1412 = vmax.xlane.f32.xlu0 %v1411
  %v1413 = vpop.xlane.xlu0 %1412
  %v1414 = vsel %vm788, %v1391, -inf
  %1415 = vmax.xlane.f32.xlu0 %v1414
  %v1416 = vpop.xlane.xlu0 %1415
  %v1417 = vsel %vm788, %v1394, -inf
  %1418 = vmax.xlane.f32.xlu0 %v1417
  %v1419 = vpop.xlane.xlu0 %1418
  %v1420 = vsel %vm788, %v1397, -inf
  %1421 = vmax.xlane.f32.xlu0 %v1420
  %v1422 = vpop.xlane.xlu0 %1421
  %v1423 = vsel %vm788, %v1400, -inf
  %1424 = vmax.xlane.f32.xlu0 %v1423
  %v1425 = vpop.xlane.xlu0 %1424
  %v1426 = vsub.f32 %v1379, %v1404
  %v1427 = vsub.f32 %v1382, %v1407
  %v1428 = vsub.f32 %v1385, %v1410
  %v1429 = vsub.f32 %v1388, %v1413
  %v1430 = vsub.f32 %v1391, %v1416
  %v1431 = vsub.f32 %v1394, %v1419
  %v1432 = vsub.f32 %v1397, %v1422
  %v1433 = vsub.f32 %v1400, %v1425
  %v1434 = vmul.f32 %v1426, 1.442695
  %v1435 = vpow.pop %v1434
  %v1436 = vmul.f32 %v1427, 1.442695
  %v1437 = vpow.pop %v1436
  %v1438 = vmul.f32 %v1428, 1.442695
  %v1439 = vpow.pop %v1438
  %v1440 = vmul.f32 %v1429, 1.442695
  %v1441 = vpow.pop %v1440
  %v1442 = vmul.f32 %v1430, 1.442695
  %v1443 = vpow.pop %v1442
  %v1444 = vmul.f32 %v1431, 1.442695
  %v1445 = vpow.pop %v1444
  %v1446 = vmul.f32 %v1432, 1.442695
  %v1447 = vpow.pop %v1446
  %v1448 = vmul.f32 %v1433, 1.442695
  %v1449 = vpow.pop %v1448
  %v1450 = vsel %vm788, %v1435, 0.0
  %1451 = vadd.xlane.f32.xlu0 %v1450
  %v1452 = vpop.xlane.xlu0 %1451
  %v1453 = vsel %vm788, %v1437, 0.0
  %1454 = vadd.xlane.f32.xlu0 %v1453
  %v1455 = vpop.xlane.xlu0 %1454
  %v1456 = vsel %vm788, %v1439, 0.0
  %1457 = vadd.xlane.f32.xlu0 %v1456
  %v1458 = vpop.xlane.xlu0 %1457
  %v1459 = vsel %vm788, %v1441, 0.0
  %1460 = vadd.xlane.f32.xlu0 %v1459
  %v1461 = vpop.xlane.xlu0 %1460
  %v1462 = vsel %vm788, %v1443, 0.0
  %1463 = vadd.xlane.f32.xlu0 %v1462
  %v1464 = vpop.xlane.xlu0 %1463
  %v1465 = vsel %vm788, %v1445, 0.0
  %1466 = vadd.xlane.f32.xlu0 %v1465
  %v1467 = vpop.xlane.xlu0 %1466
  %v1468 = vsel %vm788, %v1447, 0.0
  %1469 = vadd.xlane.f32.xlu0 %v1468
  %v1470 = vpop.xlane.xlu0 %1469
  %v1471 = vsel %vm788, %v1449, 0.0
  %1472 = vadd.xlane.f32.xlu0 %v1471
  %v1473 = vpop.xlane.xlu0 %1472
  %v1474 = vrcp.pop %v1452
  %v1475 = vrcp.pop %v1455
  %v1476 = vrcp.pop %v1458
  %v1477 = vrcp.pop %v1461
  %v1478 = vrcp.pop %v1464
  %v1479 = vrcp.pop %v1467
  %v1480 = vrcp.pop %v1470
  %v1481 = vrcp.pop %v1473
  %v1482 = vmul.f32 %v1435, %v1474
  %v1483 = vmul.f32 %v1437, %v1475
  %v1484 = vmul.f32 %v1439, %v1476
  %v1485 = vmul.f32 %v1441, %v1477
  %v1486 = vmul.f32 %v1443, %v1478
  %v1487 = vmul.f32 %v1445, %v1479
  %v1488 = vmul.f32 %v1447, %v1480
  %v1489 = vmul.f32 %v1449, %v1481
  %1490 = vrot.lane.b32.xlu0 %v643, 48
  %v1491 = vpop.permute.xlu0 %1490
  %1492 = vrot.lane.b32.xlu0 %v646, 48
  %v1493 = vpop.permute.xlu0 %1492
  %1494 = vrot.lane.b32.xlu0 %v649, 48
  %v1495 = vpop.permute.xlu0 %1494
  %1496 = vrot.lane.b32.xlu0 %v652, 48
  %v1497 = vpop.permute.xlu0 %1496
  %1498 = vrot.lane.b32.xlu0 %v655, 48
  %v1499 = vpop.permute.xlu0 %1498
  %1500 = vrot.lane.b32.xlu0 %v658, 48
  %v1501 = vpop.permute.xlu0 %1500
  %1502 = vrot.lane.b32.xlu0 %v661, 48
  %v1503 = vpop.permute.xlu0 %1502
  %1504 = vrot.lane.b32.xlu0 %v664, 48
  %v1505 = vpop.permute.xlu0 %1504
  %v1515 = vsel %vm788, %v1482, 0
  %v1518 = vsel %vm788, %v1483, 0
  %v1521 = vsel %vm788, %v1484, 0
  %v1524 = vsel %vm788, %v1485, 0
  %v1527 = vsel %vm788, %v1486, 0
  %v1530 = vsel %vm788, %v1487, 0
  %v1533 = vsel %vm788, %v1488, 0
  %v1536 = vsel %vm788, %v1489, 0
  %1538 = vmatpush.msra.mxu0 0.0
  %1539 = vmatpush.msra.mxu0 0.0
  %1540 = vmatpush.msra.mxu0 0.0
  %1541 = vmatpush.msra.mxu0 0.0
  %1542 = vmatpush.msra.mxu0 0.0
  %1543 = vmatpush.msra.mxu0 0.0
  %1544 = vmatpush.msra.mxu0 0.0
  %1545 = vmatpush.msra.mxu0 0.0
  %1546 = vmatpush.msra.mxu0 %v1505
  %1547 = vmatpush.msra.mxu0 %v1503
  %1548 = vmatpush.msra.mxu0 %v1501
  %1549 = vmatpush.msra.mxu0 %v1499
  %1550 = vmatpush.msra.mxu0 %v1497
  %1551 = vmatpush.msra.mxu0 %v1495
  %1552 = vmatpush.msra.mxu0 %v1493
  %1553 = vmatpush.msra.mxu0 %v1491
  %1554 = vmatmul.f32.gmra.mxu0 %v1515
  %v1555 = vpop.f32.mrf.mxu0
  %v1556 = vadd.f32 0.0, %v1555
  %1557 = vmatmul.f32.gmra.mxu0 %v1518
  %v1558 = vpop.f32.mrf.mxu0
  %v1559 = vadd.f32 0.0, %v1558
  %1560 = vmatmul.f32.gmra.mxu0 %v1521
  %v1561 = vpop.f32.mrf.mxu0
  %v1562 = vadd.f32 0.0, %v1561
  %1563 = vmatmul.f32.gmra.mxu0 %v1524
  %v1564 = vpop.f32.mrf.mxu0
  %v1565 = vadd.f32 0.0, %v1564
  %1566 = vmatmul.f32.gmra.mxu0 %v1527
  %v1567 = vpop.f32.mrf.mxu0
  %v1568 = vadd.f32 0.0, %v1567
  %1569 = vmatmul.f32.gmra.mxu0 %v1530
  %v1570 = vpop.f32.mrf.mxu0
  %v1571 = vadd.f32 0.0, %v1570
  %1572 = vmatmul.f32.gmra.mxu0 %v1533
  %v1573 = vpop.f32.mrf.mxu0
  %v1574 = vadd.f32 0.0, %v1573
  %1575 = vmatmul.f32.gmra.mxu0 %v1536
  %v1576 = vpop.f32.mrf.mxu0
  %v1577 = vadd.f32 0.0, %v1576
  %1578 = vdwg.mxu0
  %1587 = vrot.lane.b32.xlu0 %v1556, 16
  %v1588 = vpop.permute.xlu0 %1587
  %1589 = vrot.lane.b32.xlu0 %v1559, 16
  %v1590 = vpop.permute.xlu0 %1589
  %1591 = vrot.lane.b32.xlu0 %v1562, 16
  %v1592 = vpop.permute.xlu0 %1591
  %1593 = vrot.lane.b32.xlu0 %v1565, 16
  %v1594 = vpop.permute.xlu0 %1593
  %1595 = vrot.lane.b32.xlu0 %v1568, 16
  %v1596 = vpop.permute.xlu0 %1595
  %1597 = vrot.lane.b32.xlu0 %v1571, 16
  %v1598 = vpop.permute.xlu0 %1597
  %1599 = vrot.lane.b32.xlu0 %v1574, 16
  %v1600 = vpop.permute.xlu0 %1599
  %1601 = vrot.lane.b32.xlu0 %v1577, 16
  %v1602 = vpop.permute.xlu0 %1601
  %vm1611 = vcmask 195712
  %1612 = vst.msk [vmem:[#allocation3] sm:$0xff] %vm1611, %v1588
  %1613 = vst.msk [vmem:[#allocation3 + $0x8] sm:$0xff] %vm1611, %v1590
  %1614 = vst.msk [vmem:[#allocation3 + $0x10] sm:$0xff] %vm1611, %v1592
  %1615 = vst.msk [vmem:[#allocation3 + $0x18] sm:$0xff] %vm1611, %v1594
  %1616 = vst.msk [vmem:[#allocation3 + $0x20] sm:$0xff] %vm1611, %v1596
  %1617 = vst.msk [vmem:[#allocation3 + $0x28] sm:$0xff] %vm1611, %v1598
  %1618 = vst.msk [vmem:[#allocation3 + $0x30] sm:$0xff] %vm1611, %v1600
  %1619 = vst.msk [vmem:[#allocation3 + $0x38] sm:$0xff] %vm1611, %v1602
  %1620 = vrot.lane.b32.xlu0 %v643, 104
  %v1621 = vpop.permute.xlu0 %1620
  %1622 = vrot.lane.b32.xlu0 %v646, 104
  %v1623 = vpop.permute.xlu0 %1622
  %1624 = vrot.lane.b32.xlu0 %v649, 104
  %v1625 = vpop.permute.xlu0 %1624
  %1626 = vrot.lane.b32.xlu0 %v652, 104
  %v1627 = vpop.permute.xlu0 %1626
  %1628 = vrot.lane.b32.xlu0 %v655, 104
  %v1629 = vpop.permute.xlu0 %1628
  %1630 = vrot.lane.b32.xlu0 %v658, 104
  %v1631 = vpop.permute.xlu0 %1630
  %1632 = vrot.lane.b32.xlu0 %v661, 104
  %v1633 = vpop.permute.xlu0 %1632
  %1634 = vrot.lane.b32.xlu0 %v664, 104
  %v1635 = vpop.permute.xlu0 %1634
  %1636 = vrot.lane.b32.xlu0 %v643, 72
  %v1637 = vpop.permute.xlu0 %1636
  %1638 = vrot.lane.b32.xlu0 %v646, 72
  %v1639 = vpop.permute.xlu0 %1638
  %1640 = vrot.lane.b32.xlu0 %v649, 72
  %v1641 = vpop.permute.xlu0 %1640
  %1642 = vrot.lane.b32.xlu0 %v652, 72
  %v1643 = vpop.permute.xlu0 %1642
  %1644 = vrot.lane.b32.xlu0 %v655, 72
  %v1645 = vpop.permute.xlu0 %1644
  %1646 = vrot.lane.b32.xlu0 %v658, 72
  %v1647 = vpop.permute.xlu0 %1646
  %1648 = vrot.lane.b32.xlu0 %v661, 72
  %v1649 = vpop.permute.xlu0 %1648
  %1650 = vrot.lane.b32.xlu0 %v664, 72
  %v1651 = vpop.permute.xlu0 %1650
  %v1652 = vsel %vm714, %v1621, 0
  %v1654 = vsel %vm714, %v1623, 0
  %v1656 = vsel %vm714, %v1625, 0
  %v1658 = vsel %vm714, %v1627, 0
  %v1660 = vsel %vm714, %v1629, 0
  %v1662 = vsel %vm714, %v1631, 0
  %v1664 = vsel %vm714, %v1633, 0
  %v1666 = vsel %vm714, %v1635, 0
  %v1668 = vsel %vm714, %v1637, 0
  %v1670 = vsel %vm714, %v1639, 0
  %v1672 = vsel %vm714, %v1641, 0
  %v1674 = vsel %vm714, %v1643, 0
  %v1676 = vsel %vm714, %v1645, 0
  %v1678 = vsel %vm714, %v1647, 0
  %v1680 = vsel %vm714, %v1649, 0
  %v1682 = vsel %vm714, %v1651, 0
  %1684 = vmatpush.xpose.msra.mxu0 0.0
  %1685 = vmatpush.xpose.msra.mxu0 0.0
  %1686 = vmatpush.xpose.msra.mxu0 0.0
  %1687 = vmatpush.xpose.msra.mxu0 0.0
  %1688 = vmatpush.xpose.msra.mxu0 0.0
  %1689 = vmatpush.xpose.msra.mxu0 0.0
  %1690 = vmatpush.xpose.msra.mxu0 0.0
  %1691 = vmatpush.xpose.msra.mxu0 0.0
  %1692 = vmatpush.xpose.msra.mxu0 %v1682
  %1693 = vmatpush.xpose.msra.mxu0 %v1680
  %1694 = vmatpush.xpose.msra.mxu0 %v1678
  %1695 = vmatpush.xpose.msra.mxu0 %v1676
  %1696 = vmatpush.xpose.msra.mxu0 %v1674
  %1697 = vmatpush.xpose.msra.mxu0 %v1672
  %1698 = vmatpush.xpose.msra.mxu0 %v1670
  %1699 = vmatpush.xpose.msra.mxu0 %v1668
  %1700 = vmatmul.f32.gmra.mxu0 %v1652
  %v1701 = vpop.f32.mrf.mxu0
  %v1702 = vadd.f32 0.0, %v1701
  %1703 = vmatmul.f32.gmra.mxu0 %v1654
  %v1704 = vpop.f32.mrf.mxu0
  %v1705 = vadd.f32 0.0, %v1704
  %1706 = vmatmul.f32.gmra.mxu0 %v1656
  %v1707 = vpop.f32.mrf.mxu0
  %v1708 = vadd.f32 0.0, %v1707
  %1709 = vmatmul.f32.gmra.mxu0 %v1658
  %v1710 = vpop.f32.mrf.mxu0
  %v1711 = vadd.f32 0.0, %v1710
  %1712 = vmatmul.f32.gmra.mxu0 %v1660
  %v1713 = vpop.f32.mrf.mxu0
  %v1714 = vadd.f32 0.0, %v1713
  %1715 = vmatmul.f32.gmra.mxu0 %v1662
  %v1716 = vpop.f32.mrf.mxu0
  %v1717 = vadd.f32 0.0, %v1716
  %1718 = vmatmul.f32.gmra.mxu0 %v1664
  %v1719 = vpop.f32.mrf.mxu0
  %v1720 = vadd.f32 0.0, %v1719
  %1721 = vmatmul.f32.gmra.mxu0 %v1666
  %v1722 = vpop.f32.mrf.mxu0
  %v1723 = vadd.f32 0.0, %v1722
  %1724 = vdwg.mxu0
  %v1725 = vsel %vm788, %v1702, -inf
  %1726 = vmax.xlane.f32.xlu0 %v1725
  %v1727 = vpop.xlane.xlu0 %1726
  %v1728 = vsel %vm788, %v1705, -inf
  %1729 = vmax.xlane.f32.xlu0 %v1728
  %v1730 = vpop.xlane.xlu0 %1729
  %v1731 = vsel %vm788, %v1708, -inf
  %1732 = vmax.xlane.f32.xlu0 %v1731
  %v1733 = vpop.xlane.xlu0 %1732
  %v1734 = vsel %vm788, %v1711, -inf
  %1735 = vmax.xlane.f32.xlu0 %v1734
  %v1736 = vpop.xlane.xlu0 %1735
  %v1737 = vsel %vm788, %v1714, -inf
  %1738 = vmax.xlane.f32.xlu0 %v1737
  %v1739 = vpop.xlane.xlu0 %1738
  %v1740 = vsel %vm788, %v1717, -inf
  %1741 = vmax.xlane.f32.xlu0 %v1740
  %v1742 = vpop.xlane.xlu0 %1741
  %v1743 = vsel %vm788, %v1720, -inf
  %1744 = vmax.xlane.f32.xlu0 %v1743
  %v1745 = vpop.xlane.xlu0 %1744
  %v1746 = vsel %vm788, %v1723, -inf
  %1747 = vmax.xlane.f32.xlu0 %v1746
  %v1748 = vpop.xlane.xlu0 %1747
  %v1749 = vsub.f32 %v1702, %v1727
  %v1750 = vsub.f32 %v1705, %v1730
  %v1751 = vsub.f32 %v1708, %v1733
  %v1752 = vsub.f32 %v1711, %v1736
  %v1753 = vsub.f32 %v1714, %v1739
  %v1754 = vsub.f32 %v1717, %v1742
  %v1755 = vsub.f32 %v1720, %v1745
  %v1756 = vsub.f32 %v1723, %v1748
  %v1757 = vmul.f32 %v1749, 1.442695
  %v1758 = vpow.pop %v1757
  %v1759 = vmul.f32 %v1750, 1.442695
  %v1760 = vpow.pop %v1759
  %v1761 = vmul.f32 %v1751, 1.442695
  %v1762 = vpow.pop %v1761
  %v1763 = vmul.f32 %v1752, 1.442695
  %v1764 = vpow.pop %v1763
  %v1765 = vmul.f32 %v1753, 1.442695
  %v1766 = vpow.pop %v1765
  %v1767 = vmul.f32 %v1754, 1.442695
  %v1768 = vpow.pop %v1767
  %v1769 = vmul.f32 %v1755, 1.442695
  %v1770 = vpow.pop %v1769
  %v1771 = vmul.f32 %v1756, 1.442695
  %v1772 = vpow.pop %v1771
  %v1773 = vsel %vm788, %v1758, 0.0
  %1774 = vadd.xlane.f32.xlu0 %v1773
  %v1775 = vpop.xlane.xlu0 %1774
  %v1776 = vsel %vm788, %v1760, 0.0
  %1777 = vadd.xlane.f32.xlu0 %v1776
  %v1778 = vpop.xlane.xlu0 %1777
  %v1779 = vsel %vm788, %v1762, 0.0
  %1780 = vadd.xlane.f32.xlu0 %v1779
  %v1781 = vpop.xlane.xlu0 %1780
  %v1782 = vsel %vm788, %v1764, 0.0
  %1783 = vadd.xlane.f32.xlu0 %v1782
  %v1784 = vpop.xlane.xlu0 %1783
  %v1785 = vsel %vm788, %v1766, 0.0
  %1786 = vadd.xlane.f32.xlu0 %v1785
  %v1787 = vpop.xlane.xlu0 %1786
  %v1788 = vsel %vm788, %v1768, 0.0
  %1789 = vadd.xlane.f32.xlu0 %v1788
  %v1790 = vpop.xlane.xlu0 %1789
  %v1791 = vsel %vm788, %v1770, 0.0
  %1792 = vadd.xlane.f32.xlu0 %v1791
  %v1793 = vpop.xlane.xlu0 %1792
  %v1794 = vsel %vm788, %v1772, 0.0
  %1795 = vadd.xlane.f32.xlu0 %v1794
  %v1796 = vpop.xlane.xlu0 %1795
  %v1797 = vrcp.pop %v1775
  %v1798 = vrcp.pop %v1778
  %v1799 = vrcp.pop %v1781
  %v1800 = vrcp.pop %v1784
  %v1801 = vrcp.pop %v1787
  %v1802 = vrcp.pop %v1790
  %v1803 = vrcp.pop %v1793
  %v1804 = vrcp.pop %v1796
  %v1805 = vmul.f32 %v1758, %v1797
  %v1806 = vmul.f32 %v1760, %v1798
  %v1807 = vmul.f32 %v1762, %v1799
  %v1808 = vmul.f32 %v1764, %v1800
  %v1809 = vmul.f32 %v1766, %v1801
  %v1810 = vmul.f32 %v1768, %v1802
  %v1811 = vmul.f32 %v1770, %v1803
  %v1812 = vmul.f32 %v1772, %v1804
  %1813 = vrot.lane.b32.xlu0 %v643, 40
  %v1814 = vpop.permute.xlu0 %1813
  %1815 = vrot.lane.b32.xlu0 %v646, 40
  %v1816 = vpop.permute.xlu0 %1815
  %1817 = vrot.lane.b32.xlu0 %v649, 40
  %v1818 = vpop.permute.xlu0 %1817
  %1819 = vrot.lane.b32.xlu0 %v652, 40
  %v1820 = vpop.permute.xlu0 %1819
  %1821 = vrot.lane.b32.xlu0 %v655, 40
  %v1822 = vpop.permute.xlu0 %1821
  %1823 = vrot.lane.b32.xlu0 %v658, 40
  %v1824 = vpop.permute.xlu0 %1823
  %1825 = vrot.lane.b32.xlu0 %v661, 40
  %v1826 = vpop.permute.xlu0 %1825
  %1827 = vrot.lane.b32.xlu0 %v664, 40
  %v1828 = vpop.permute.xlu0 %1827
  %v1838 = vsel %vm788, %v1805, 0
  %v1841 = vsel %vm788, %v1806, 0
  %v1844 = vsel %vm788, %v1807, 0
  %v1847 = vsel %vm788, %v1808, 0
  %v1850 = vsel %vm788, %v1809, 0
  %v1853 = vsel %vm788, %v1810, 0
  %v1856 = vsel %vm788, %v1811, 0
  %v1859 = vsel %vm788, %v1812, 0
  %1861 = vmatpush.msra.mxu0 0.0
  %1862 = vmatpush.msra.mxu0 0.0
  %1863 = vmatpush.msra.mxu0 0.0
  %1864 = vmatpush.msra.mxu0 0.0
  %1865 = vmatpush.msra.mxu0 0.0
  %1866 = vmatpush.msra.mxu0 0.0
  %1867 = vmatpush.msra.mxu0 0.0
  %1868 = vmatpush.msra.mxu0 0.0
  %1869 = vmatpush.msra.mxu0 %v1828
  %1870 = vmatpush.msra.mxu0 %v1826
  %1871 = vmatpush.msra.mxu0 %v1824
  %1872 = vmatpush.msra.mxu0 %v1822
  %1873 = vmatpush.msra.mxu0 %v1820
  %1874 = vmatpush.msra.mxu0 %v1818
  %1875 = vmatpush.msra.mxu0 %v1816
  %1876 = vmatpush.msra.mxu0 %v1814
  %1877 = vmatmul.f32.gmra.mxu0 %v1838
  %v1878 = vpop.f32.mrf.mxu0
  %v1879 = vadd.f32 0.0, %v1878
  %1880 = vmatmul.f32.gmra.mxu0 %v1841
  %v1881 = vpop.f32.mrf.mxu0
  %v1882 = vadd.f32 0.0, %v1881
  %1883 = vmatmul.f32.gmra.mxu0 %v1844
  %v1884 = vpop.f32.mrf.mxu0
  %v1885 = vadd.f32 0.0, %v1884
  %1886 = vmatmul.f32.gmra.mxu0 %v1847
  %v1887 = vpop.f32.mrf.mxu0
  %v1888 = vadd.f32 0.0, %v1887
  %1889 = vmatmul.f32.gmra.mxu0 %v1850
  %v1890 = vpop.f32.mrf.mxu0
  %v1891 = vadd.f32 0.0, %v1890
  %1892 = vmatmul.f32.gmra.mxu0 %v1853
  %v1893 = vpop.f32.mrf.mxu0
  %v1894 = vadd.f32 0.0, %v1893
  %1895 = vmatmul.f32.gmra.mxu0 %v1856
  %v1896 = vpop.f32.mrf.mxu0
  %v1897 = vadd.f32 0.0, %v1896
  %1898 = vmatmul.f32.gmra.mxu0 %v1859
  %v1899 = vpop.f32.mrf.mxu0
  %v1900 = vadd.f32 0.0, %v1899
  %1901 = vdwg.mxu0
  %1910 = vrot.lane.b32.xlu0 %v1879, 24
  %v1911 = vpop.permute.xlu0 %1910
  %1912 = vrot.lane.b32.xlu0 %v1882, 24
  %v1913 = vpop.permute.xlu0 %1912
  %1914 = vrot.lane.b32.xlu0 %v1885, 24
  %v1915 = vpop.permute.xlu0 %1914
  %1916 = vrot.lane.b32.xlu0 %v1888, 24
  %v1917 = vpop.permute.xlu0 %1916
  %1918 = vrot.lane.b32.xlu0 %v1891, 24
  %v1919 = vpop.permute.xlu0 %1918
  %1920 = vrot.lane.b32.xlu0 %v1894, 24
  %v1921 = vpop.permute.xlu0 %1920
  %1922 = vrot.lane.b32.xlu0 %v1897, 24
  %v1923 = vpop.permute.xlu0 %1922
  %1924 = vrot.lane.b32.xlu0 %v1900, 24
  %v1925 = vpop.permute.xlu0 %1924
  %vm1934 = vcmask 261312
  %1935 = vst.msk [vmem:[#allocation3] sm:$0xff] %vm1934, %v1911
  %1936 = vst.msk [vmem:[#allocation3 + $0x8] sm:$0xff] %vm1934, %v1913
  %1937 = vst.msk [vmem:[#allocation3 + $0x10] sm:$0xff] %vm1934, %v1915
  %1938 = vst.msk [vmem:[#allocation3 + $0x18] sm:$0xff] %vm1934, %v1917
  %1939 = vst.msk [vmem:[#allocation3 + $0x20] sm:$0xff] %vm1934, %v1919
  %1940 = vst.msk [vmem:[#allocation3 + $0x28] sm:$0xff] %vm1934, %v1921
  %1941 = vst.msk [vmem:[#allocation3 + $0x30] sm:$0xff] %vm1934, %v1923
  %1942 = vst.msk [vmem:[#allocation3 + $0x38] sm:$0xff] %vm1934, %v1925
  %1951 = vrot.lane.b32.xlu0 %v667, 96
  %v1952 = vpop.permute.xlu0 %1951
  %1953 = vrot.lane.b32.xlu0 %v670, 96
  %v1954 = vpop.permute.xlu0 %1953
  %1955 = vrot.lane.b32.xlu0 %v673, 96
  %v1956 = vpop.permute.xlu0 %1955
  %1957 = vrot.lane.b32.xlu0 %v676, 96
  %v1958 = vpop.permute.xlu0 %1957
  %1959 = vrot.lane.b32.xlu0 %v679, 96
  %v1960 = vpop.permute.xlu0 %1959
  %1961 = vrot.lane.b32.xlu0 %v682, 96
  %v1962 = vpop.permute.xlu0 %1961
  %1963 = vrot.lane.b32.xlu0 %v685, 96
  %v1964 = vpop.permute.xlu0 %1963
  %1965 = vrot.lane.b32.xlu0 %v688, 96
  %v1966 = vpop.permute.xlu0 %1965
  %v1967 = vsel %vm714, %v667, 0
  %v1969 = vsel %vm714, %v670, 0
  %v1971 = vsel %vm714, %v673, 0
  %v1973 = vsel %vm714, %v676, 0
  %v1975 = vsel %vm714, %v679, 0
  %v1977 = vsel %vm714, %v682, 0
  %v1979 = vsel %vm714, %v685, 0
  %v1981 = vsel %vm714, %v688, 0
  %v1983 = vsel %vm714, %v1952, 0
  %v1985 = vsel %vm714, %v1954, 0
  %v1987 = vsel %vm714, %v1956, 0
  %v1989 = vsel %vm714, %v1958, 0
  %v1991 = vsel %vm714, %v1960, 0
  %v1993 = vsel %vm714, %v1962, 0
  %v1995 = vsel %vm714, %v1964, 0
  %v1997 = vsel %vm714, %v1966, 0
  %1999 = vmatpush.xpose.msra.mxu0 0.0
  %2000 = vmatpush.xpose.msra.mxu0 0.0
  %2001 = vmatpush.xpose.msra.mxu0 0.0
  %2002 = vmatpush.xpose.msra.mxu0 0.0
  %2003 = vmatpush.xpose.msra.mxu0 0.0
  %2004 = vmatpush.xpose.msra.mxu0 0.0
  %2005 = vmatpush.xpose.msra.mxu0 0.0
  %2006 = vmatpush.xpose.msra.mxu0 0.0
  %2007 = vmatpush.xpose.msra.mxu0 %v1997
  %2008 = vmatpush.xpose.msra.mxu0 %v1995
  %2009 = vmatpush.xpose.msra.mxu0 %v1993
  %2010 = vmatpush.xpose.msra.mxu0 %v1991
  %2011 = vmatpush.xpose.msra.mxu0 %v1989
  %2012 = vmatpush.xpose.msra.mxu0 %v1987
  %2013 = vmatpush.xpose.msra.mxu0 %v1985
  %2014 = vmatpush.xpose.msra.mxu0 %v1983
  %2015 = vmatmul.f32.gmra.mxu0 %v1967
  %v2016 = vpop.f32.mrf.mxu0
  %v2017 = vadd.f32 0.0, %v2016
  %2018 = vmatmul.f32.gmra.mxu0 %v1969
  %v2019 = vpop.f32.mrf.mxu0
  %v2020 = vadd.f32 0.0, %v2019
  %2021 = vmatmul.f32.gmra.mxu0 %v1971
  %v2022 = vpop.f32.mrf.mxu0
  %v2023 = vadd.f32 0.0, %v2022
  %2024 = vmatmul.f32.gmra.mxu0 %v1973
  %v2025 = vpop.f32.mrf.mxu0
  %v2026 = vadd.f32 0.0, %v2025
  %2027 = vmatmul.f32.gmra.mxu0 %v1975
  %v2028 = vpop.f32.mrf.mxu0
  %v2029 = vadd.f32 0.0, %v2028
  %2030 = vmatmul.f32.gmra.mxu0 %v1977
  %v2031 = vpop.f32.mrf.mxu0
  %v2032 = vadd.f32 0.0, %v2031
  %2033 = vmatmul.f32.gmra.mxu0 %v1979
  %v2034 = vpop.f32.mrf.mxu0
  %v2035 = vadd.f32 0.0, %v2034
  %2036 = vmatmul.f32.gmra.mxu0 %v1981
  %v2037 = vpop.f32.mrf.mxu0
  %v2038 = vadd.f32 0.0, %v2037
  %2039 = vdwg.mxu0
  %v2040 = vsel %vm788, %v2017, -inf
  %2041 = vmax.xlane.f32.xlu0 %v2040
  %v2042 = vpop.xlane.xlu0 %2041
  %v2043 = vsel %vm788, %v2020, -inf
  %2044 = vmax.xlane.f32.xlu0 %v2043
  %v2045 = vpop.xlane.xlu0 %2044
  %v2046 = vsel %vm788, %v2023, -inf
  %2047 = vmax.xlane.f32.xlu0 %v2046
  %v2048 = vpop.xlane.xlu0 %2047
  %v2049 = vsel %vm788, %v2026, -inf
  %2050 = vmax.xlane.f32.xlu0 %v2049
  %v2051 = vpop.xlane.xlu0 %2050
  %v2052 = vsel %vm788, %v2029, -inf
  %2053 = vmax.xlane.f32.xlu0 %v2052
  %v2054 = vpop.xlane.xlu0 %2053
  %v2055 = vsel %vm788, %v2032, -inf
  %2056 = vmax.xlane.f32.xlu0 %v2055
  %v2057 = vpop.xlane.xlu0 %2056
  %v2058 = vsel %vm788, %v2035, -inf
  %2059 = vmax.xlane.f32.xlu0 %v2058
  %v2060 = vpop.xlane.xlu0 %2059
  %v2061 = vsel %vm788, %v2038, -inf
  %2062 = vmax.xlane.f32.xlu0 %v2061
  %v2063 = vpop.xlane.xlu0 %2062
  %v2064 = vsub.f32 %v2017, %v2042
  %v2065 = vsub.f32 %v2020, %v2045
  %v2066 = vsub.f32 %v2023, %v2048
  %v2067 = vsub.f32 %v2026, %v2051
  %v2068 = vsub.f32 %v2029, %v2054
  %v2069 = vsub.f32 %v2032, %v2057
  %v2070 = vsub.f32 %v2035, %v2060
  %v2071 = vsub.f32 %v2038, %v2063
  %v2072 = vmul.f32 %v2064, 1.442695
  %v2073 = vpow.pop %v2072
  %v2074 = vmul.f32 %v2065, 1.442695
  %v2075 = vpow.pop %v2074
  %v2076 = vmul.f32 %v2066, 1.442695
  %v2077 = vpow.pop %v2076
  %v2078 = vmul.f32 %v2067, 1.442695
  %v2079 = vpow.pop %v2078
  %v2080 = vmul.f32 %v2068, 1.442695
  %v2081 = vpow.pop %v2080
  %v2082 = vmul.f32 %v2069, 1.442695
  %v2083 = vpow.pop %v2082
  %v2084 = vmul.f32 %v2070, 1.442695
  %v2085 = vpow.pop %v2084
  %v2086 = vmul.f32 %v2071, 1.442695
  %v2087 = vpow.pop %v2086
  %v2088 = vsel %vm788, %v2073, 0.0
  %2089 = vadd.xlane.f32.xlu0 %v2088
  %v2090 = vpop.xlane.xlu0 %2089
  %v2091 = vsel %vm788, %v2075, 0.0
  %2092 = vadd.xlane.f32.xlu0 %v2091
  %v2093 = vpop.xlane.xlu0 %2092
  %v2094 = vsel %vm788, %v2077, 0.0
  %2095 = vadd.xlane.f32.xlu0 %v2094
  %v2096 = vpop.xlane.xlu0 %2095
  %v2097 = vsel %vm788, %v2079, 0.0
  %2098 = vadd.xlane.f32.xlu0 %v2097
  %v2099 = vpop.xlane.xlu0 %2098
  %v2100 = vsel %vm788, %v2081, 0.0
  %2101 = vadd.xlane.f32.xlu0 %v2100
  %v2102 = vpop.xlane.xlu0 %2101
  %v2103 = vsel %vm788, %v2083, 0.0
  %2104 = vadd.xlane.f32.xlu0 %v2103
  %v2105 = vpop.xlane.xlu0 %2104
  %v2106 = vsel %vm788, %v2085, 0.0
  %2107 = vadd.xlane.f32.xlu0 %v2106
  %v2108 = vpop.xlane.xlu0 %2107
  %v2109 = vsel %vm788, %v2087, 0.0
  %2110 = vadd.xlane.f32.xlu0 %v2109
  %v2111 = vpop.xlane.xlu0 %2110
  %v2112 = vrcp.pop %v2090
  %v2113 = vrcp.pop %v2093
  %v2114 = vrcp.pop %v2096
  %v2115 = vrcp.pop %v2099
  %v2116 = vrcp.pop %v2102
  %v2117 = vrcp.pop %v2105
  %v2118 = vrcp.pop %v2108
  %v2119 = vrcp.pop %v2111
  %v2120 = vmul.f32 %v2073, %v2112
  %v2121 = vmul.f32 %v2075, %v2113
  %v2122 = vmul.f32 %v2077, %v2114
  %v2123 = vmul.f32 %v2079, %v2115
  %v2124 = vmul.f32 %v2081, %v2116
  %v2125 = vmul.f32 %v2083, %v2117
  %v2126 = vmul.f32 %v2085, %v2118
  %v2127 = vmul.f32 %v2087, %v2119
  %2128 = vrot.lane.b32.xlu0 %v667, 64
  %v2129 = vpop.permute.xlu0 %2128
  %2130 = vrot.lane.b32.xlu0 %v670, 64
  %v2131 = vpop.permute.xlu0 %2130
  %2132 = vrot.lane.b32.xlu0 %v673, 64
  %v2133 = vpop.permute.xlu0 %2132
  %2134 = vrot.lane.b32.xlu0 %v676, 64
  %v2135 = vpop.permute.xlu0 %2134
  %2136 = vrot.lane.b32.xlu0 %v679, 64
  %v2137 = vpop.permute.xlu0 %2136
  %2138 = vrot.lane.b32.xlu0 %v682, 64
  %v2139 = vpop.permute.xlu0 %2138
  %2140 = vrot.lane.b32.xlu0 %v685, 64
  %v2141 = vpop.permute.xlu0 %2140
  %2142 = vrot.lane.b32.xlu0 %v688, 64
  %v2143 = vpop.permute.xlu0 %2142
  %v2153 = vsel %vm788, %v2120, 0
  %v2156 = vsel %vm788, %v2121, 0
  %v2159 = vsel %vm788, %v2122, 0
  %v2162 = vsel %vm788, %v2123, 0
  %v2165 = vsel %vm788, %v2124, 0
  %v2168 = vsel %vm788, %v2125, 0
  %v2171 = vsel %vm788, %v2126, 0
  %v2174 = vsel %vm788, %v2127, 0
  %2176 = vmatpush.msra.mxu0 0.0
  %2177 = vmatpush.msra.mxu0 0.0
  %2178 = vmatpush.msra.mxu0 0.0
  %2179 = vmatpush.msra.mxu0 0.0
  %2180 = vmatpush.msra.mxu0 0.0
  %2181 = vmatpush.msra.mxu0 0.0
  %2182 = vmatpush.msra.mxu0 0.0
  %2183 = vmatpush.msra.mxu0 0.0
  %2184 = vmatpush.msra.mxu0 %v2143
  %2185 = vmatpush.msra.mxu0 %v2141
  %2186 = vmatpush.msra.mxu0 %v2139
  %2187 = vmatpush.msra.mxu0 %v2137
  %2188 = vmatpush.msra.mxu0 %v2135
  %2189 = vmatpush.msra.mxu0 %v2133
  %2190 = vmatpush.msra.mxu0 %v2131
  %2191 = vmatpush.msra.mxu0 %v2129
  %2192 = vmatmul.f32.gmra.mxu0 %v2153
  %v2193 = vpop.f32.mrf.mxu0
  %v2194 = vadd.f32 0.0, %v2193
  %2195 = vmatmul.f32.gmra.mxu0 %v2156
  %v2196 = vpop.f32.mrf.mxu0
  %v2197 = vadd.f32 0.0, %v2196
  %2198 = vmatmul.f32.gmra.mxu0 %v2159
  %v2199 = vpop.f32.mrf.mxu0
  %v2200 = vadd.f32 0.0, %v2199
  %2201 = vmatmul.f32.gmra.mxu0 %v2162
  %v2202 = vpop.f32.mrf.mxu0
  %v2203 = vadd.f32 0.0, %v2202
  %2204 = vmatmul.f32.gmra.mxu0 %v2165
  %v2205 = vpop.f32.mrf.mxu0
  %v2206 = vadd.f32 0.0, %v2205
  %2207 = vmatmul.f32.gmra.mxu0 %v2168
  %v2208 = vpop.f32.mrf.mxu0
  %v2209 = vadd.f32 0.0, %v2208
  %2210 = vmatmul.f32.gmra.mxu0 %v2171
  %v2211 = vpop.f32.mrf.mxu0
  %v2212 = vadd.f32 0.0, %v2211
  %2213 = vmatmul.f32.gmra.mxu0 %v2174
  %v2214 = vpop.f32.mrf.mxu0
  %v2215 = vadd.f32 0.0, %v2214
  %2216 = vdwg.mxu0
  %2217 = vst.msk [vmem:[#allocation3 + $0x40] sm:$0xff] %vm714, %v2194
  %2218 = vst.msk [vmem:[#allocation3 + $0x48] sm:$0xff] %vm714, %v2197
  %2219 = vst.msk [vmem:[#allocation3 + $0x50] sm:$0xff] %vm714, %v2200
  %2220 = vst.msk [vmem:[#allocation3 + $0x58] sm:$0xff] %vm714, %v2203
  %2221 = vst.msk [vmem:[#allocation3 + $0x60] sm:$0xff] %vm714, %v2206
  %2222 = vst.msk [vmem:[#allocation3 + $0x68] sm:$0xff] %vm714, %v2209
  %2223 = vst.msk [vmem:[#allocation3 + $0x70] sm:$0xff] %vm714, %v2212
  %2224 = vst.msk [vmem:[#allocation3 + $0x78] sm:$0xff] %vm714, %v2215
  %2225 = vrot.lane.b32.xlu0 %v667, 120
  %v2226 = vpop.permute.xlu0 %2225
  %2227 = vrot.lane.b32.xlu0 %v670, 120
  %v2228 = vpop.permute.xlu0 %2227
  %2229 = vrot.lane.b32.xlu0 %v673, 120
  %v2230 = vpop.permute.xlu0 %2229
  %2231 = vrot.lane.b32.xlu0 %v676, 120
  %v2232 = vpop.permute.xlu0 %2231
  %2233 = vrot.lane.b32.xlu0 %v679, 120
  %v2234 = vpop.permute.xlu0 %2233
  %2235 = vrot.lane.b32.xlu0 %v682, 120
  %v2236 = vpop.permute.xlu0 %2235
  %2237 = vrot.lane.b32.xlu0 %v685, 120
  %v2238 = vpop.permute.xlu0 %2237
  %2239 = vrot.lane.b32.xlu0 %v688, 120
  %v2240 = vpop.permute.xlu0 %2239
  %2241 = vrot.lane.b32.xlu0 %v667, 88
  %v2242 = vpop.permute.xlu0 %2241
  %2243 = vrot.lane.b32.xlu0 %v670, 88
  %v2244 = vpop.permute.xlu0 %2243
  %2245 = vrot.lane.b32.xlu0 %v673, 88
  %v2246 = vpop.permute.xlu0 %2245
  %2247 = vrot.lane.b32.xlu0 %v676, 88
  %v2248 = vpop.permute.xlu0 %2247
  %2249 = vrot.lane.b32.xlu0 %v679, 88
  %v2250 = vpop.permute.xlu0 %2249
  %2251 = vrot.lane.b32.xlu0 %v682, 88
  %v2252 = vpop.permute.xlu0 %2251
  %2253 = vrot.lane.b32.xlu0 %v685, 88
  %v2254 = vpop.permute.xlu0 %2253
  %2255 = vrot.lane.b32.xlu0 %v688, 88
  %v2256 = vpop.permute.xlu0 %2255
  %v2257 = vsel %vm714, %v2226, 0
  %v2259 = vsel %vm714, %v2228, 0
  %v2261 = vsel %vm714, %v2230, 0
  %v2263 = vsel %vm714, %v2232, 0
  %v2265 = vsel %vm714, %v2234, 0
  %v2267 = vsel %vm714, %v2236, 0
  %v2269 = vsel %vm714, %v2238, 0
  %v2271 = vsel %vm714, %v2240, 0
  %v2273 = vsel %vm714, %v2242, 0
  %v2275 = vsel %vm714, %v2244, 0
  %v2277 = vsel %vm714, %v2246, 0
  %v2279 = vsel %vm714, %v2248, 0
  %v2281 = vsel %vm714, %v2250, 0
  %v2283 = vsel %vm714, %v2252, 0
  %v2285 = vsel %vm714, %v2254, 0
  %v2287 = vsel %vm714, %v2256, 0
  %2289 = vmatpush.xpose.msra.mxu0 0.0
  %2290 = vmatpush.xpose.msra.mxu0 0.0
  %2291 = vmatpush.xpose.msra.mxu0 0.0
  %2292 = vmatpush.xpose.msra.mxu0 0.0
  %2293 = vmatpush.xpose.msra.mxu0 0.0
  %2294 = vmatpush.xpose.msra.mxu0 0.0
  %2295 = vmatpush.xpose.msra.mxu0 0.0
  %2296 = vmatpush.xpose.msra.mxu0 0.0
  %2297 = vmatpush.xpose.msra.mxu0 %v2287
  %2298 = vmatpush.xpose.msra.mxu0 %v2285
  %2299 = vmatpush.xpose.msra.mxu0 %v2283
  %2300 = vmatpush.xpose.msra.mxu0 %v2281
  %2301 = vmatpush.xpose.msra.mxu0 %v2279
  %2302 = vmatpush.xpose.msra.mxu0 %v2277
  %2303 = vmatpush.xpose.msra.mxu0 %v2275
  %2304 = vmatpush.xpose.msra.mxu0 %v2273
  %2305 = vmatmul.f32.gmra.mxu0 %v2257
  %v2306 = vpop.f32.mrf.mxu0
  %v2307 = vadd.f32 0.0, %v2306
  %2308 = vmatmul.f32.gmra.mxu0 %v2259
  %v2309 = vpop.f32.mrf.mxu0
  %v2310 = vadd.f32 0.0, %v2309
  %2311 = vmatmul.f32.gmra.mxu0 %v2261
  %v2312 = vpop.f32.mrf.mxu0
  %v2313 = vadd.f32 0.0, %v2312
  %2314 = vmatmul.f32.gmra.mxu0 %v2263
  %v2315 = vpop.f32.mrf.mxu0
  %v2316 = vadd.f32 0.0, %v2315
  %2317 = vmatmul.f32.gmra.mxu0 %v2265
  %v2318 = vpop.f32.mrf.mxu0
  %v2319 = vadd.f32 0.0, %v2318
  %2320 = vmatmul.f32.gmra.mxu0 %v2267
  %v2321 = vpop.f32.mrf.mxu0
  %v2322 = vadd.f32 0.0, %v2321
  %2323 = vmatmul.f32.gmra.mxu0 %v2269
  %v2324 = vpop.f32.mrf.mxu0
  %v2325 = vadd.f32 0.0, %v2324
  %2326 = vmatmul.f32.gmra.mxu0 %v2271
  %v2327 = vpop.f32.mrf.mxu0
  %v2328 = vadd.f32 0.0, %v2327
  %2329 = vdwg.mxu0
  %v2330 = vsel %vm788, %v2307, -inf
  %2331 = vmax.xlane.f32.xlu0 %v2330
  %v2332 = vpop.xlane.xlu0 %2331
  %v2333 = vsel %vm788, %v2310, -inf
  %2334 = vmax.xlane.f32.xlu0 %v2333
  %v2335 = vpop.xlane.xlu0 %2334
  %v2336 = vsel %vm788, %v2313, -inf
  %2337 = vmax.xlane.f32.xlu0 %v2336
  %v2338 = vpop.xlane.xlu0 %2337
  %v2339 = vsel %vm788, %v2316, -inf
  %2340 = vmax.xlane.f32.xlu0 %v2339
  %v2341 = vpop.xlane.xlu0 %2340
  %v2342 = vsel %vm788, %v2319, -inf
  %2343 = vmax.xlane.f32.xlu0 %v2342
  %v2344 = vpop.xlane.xlu0 %2343
  %v2345 = vsel %vm788, %v2322, -inf
  %2346 = vmax.xlane.f32.xlu0 %v2345
  %v2347 = vpop.xlane.xlu0 %2346
  %v2348 = vsel %vm788, %v2325, -inf
  %2349 = vmax.xlane.f32.xlu0 %v2348
  %v2350 = vpop.xlane.xlu0 %2349
  %v2351 = vsel %vm788, %v2328, -inf
  %2352 = vmax.xlane.f32.xlu0 %v2351
  %v2353 = vpop.xlane.xlu0 %2352
  %v2354 = vsub.f32 %v2307, %v2332
  %v2355 = vsub.f32 %v2310, %v2335
  %v2356 = vsub.f32 %v2313, %v2338
  %v2357 = vsub.f32 %v2316, %v2341
  %v2358 = vsub.f32 %v2319, %v2344
  %v2359 = vsub.f32 %v2322, %v2347
  %v2360 = vsub.f32 %v2325, %v2350
  %v2361 = vsub.f32 %v2328, %v2353
  %v2362 = vmul.f32 %v2354, 1.442695
  %v2363 = vpow.pop %v2362
  %v2364 = vmul.f32 %v2355, 1.442695
  %v2365 = vpow.pop %v2364
  %v2366 = vmul.f32 %v2356, 1.442695
  %v2367 = vpow.pop %v2366
  %v2368 = vmul.f32 %v2357, 1.442695
  %v2369 = vpow.pop %v2368
  %v2370 = vmul.f32 %v2358, 1.442695
  %v2371 = vpow.pop %v2370
  %v2372 = vmul.f32 %v2359, 1.442695
  %v2373 = vpow.pop %v2372
  %v2374 = vmul.f32 %v2360, 1.442695
  %v2375 = vpow.pop %v2374
  %v2376 = vmul.f32 %v2361, 1.442695
  %v2377 = vpow.pop %v2376
  %v2378 = vsel %vm788, %v2363, 0.0
  %2379 = vadd.xlane.f32.xlu0 %v2378
  %v2380 = vpop.xlane.xlu0 %2379
  %v2381 = vsel %vm788, %v2365, 0.0
  %2382 = vadd.xlane.f32.xlu0 %v2381
  %v2383 = vpop.xlane.xlu0 %2382
  %v2384 = vsel %vm788, %v2367, 0.0
  %2385 = vadd.xlane.f32.xlu0 %v2384
  %v2386 = vpop.xlane.xlu0 %2385
  %v2387 = vsel %vm788, %v2369, 0.0
  %2388 = vadd.xlane.f32.xlu0 %v2387
  %v2389 = vpop.xlane.xlu0 %2388
  %v2390 = vsel %vm788, %v2371, 0.0
  %2391 = vadd.xlane.f32.xlu0 %v2390
  %v2392 = vpop.xlane.xlu0 %2391
  %v2393 = vsel %vm788, %v2373, 0.0
  %2394 = vadd.xlane.f32.xlu0 %v2393
  %v2395 = vpop.xlane.xlu0 %2394
  %v2396 = vsel %vm788, %v2375, 0.0
  %2397 = vadd.xlane.f32.xlu0 %v2396
  %v2398 = vpop.xlane.xlu0 %2397
  %v2399 = vsel %vm788, %v2377, 0.0
  %2400 = vadd.xlane.f32.xlu0 %v2399
  %v2401 = vpop.xlane.xlu0 %2400
  %v2402 = vrcp.pop %v2380
  %v2403 = vrcp.pop %v2383
  %v2404 = vrcp.pop %v2386
  %v2405 = vrcp.pop %v2389
  %v2406 = vrcp.pop %v2392
  %v2407 = vrcp.pop %v2395
  %v2408 = vrcp.pop %v2398
  %v2409 = vrcp.pop %v2401
  %v2410 = vmul.f32 %v2363, %v2402
  %v2411 = vmul.f32 %v2365, %v2403
  %v2412 = vmul.f32 %v2367, %v2404
  %v2413 = vmul.f32 %v2369, %v2405
  %v2414 = vmul.f32 %v2371, %v2406
  %v2415 = vmul.f32 %v2373, %v2407
  %v2416 = vmul.f32 %v2375, %v2408
  %v2417 = vmul.f32 %v2377, %v2409
  %2418 = vrot.lane.b32.xlu0 %v667, 56
  %v2419 = vpop.permute.xlu0 %2418
  %2420 = vrot.lane.b32.xlu0 %v670, 56
  %v2421 = vpop.permute.xlu0 %2420
  %2422 = vrot.lane.b32.xlu0 %v673, 56
  %v2423 = vpop.permute.xlu0 %2422
  %2424 = vrot.lane.b32.xlu0 %v676, 56
  %v2425 = vpop.permute.xlu0 %2424
  %2426 = vrot.lane.b32.xlu0 %v679, 56
  %v2427 = vpop.permute.xlu0 %2426
  %2428 = vrot.lane.b32.xlu0 %v682, 56
  %v2429 = vpop.permute.xlu0 %2428
  %2430 = vrot.lane.b32.xlu0 %v685, 56
  %v2431 = vpop.permute.xlu0 %2430
  %2432 = vrot.lane.b32.xlu0 %v688, 56
  %v2433 = vpop.permute.xlu0 %2432
  %v2443 = vsel %vm788, %v2410, 0
  %v2446 = vsel %vm788, %v2411, 0
  %v2449 = vsel %vm788, %v2412, 0
  %v2452 = vsel %vm788, %v2413, 0
  %v2455 = vsel %vm788, %v2414, 0
  %v2458 = vsel %vm788, %v2415, 0
  %v2461 = vsel %vm788, %v2416, 0
  %v2464 = vsel %vm788, %v2417, 0
  %2466 = vmatpush.msra.mxu0 0.0
  %2467 = vmatpush.msra.mxu0 0.0
  %2468 = vmatpush.msra.mxu0 0.0
  %2469 = vmatpush.msra.mxu0 0.0
  %2470 = vmatpush.msra.mxu0 0.0
  %2471 = vmatpush.msra.mxu0 0.0
  %2472 = vmatpush.msra.mxu0 0.0
  %2473 = vmatpush.msra.mxu0 0.0
  %2474 = vmatpush.msra.mxu0 %v2433
  %2475 = vmatpush.msra.mxu0 %v2431
  %2476 = vmatpush.msra.mxu0 %v2429
  %2477 = vmatpush.msra.mxu0 %v2427
  %2478 = vmatpush.msra.mxu0 %v2425
  %2479 = vmatpush.msra.mxu0 %v2423
  %2480 = vmatpush.msra.mxu0 %v2421
  %2481 = vmatpush.msra.mxu0 %v2419
  %2482 = vmatmul.f32.gmra.mxu0 %v2443
  %v2483 = vpop.f32.mrf.mxu0
  %v2484 = vadd.f32 0.0, %v2483
  %2485 = vmatmul.f32.gmra.mxu0 %v2446
  %v2486 = vpop.f32.mrf.mxu0
  %v2487 = vadd.f32 0.0, %v2486
  %2488 = vmatmul.f32.gmra.mxu0 %v2449
  %v2489 = vpop.f32.mrf.mxu0
  %v2490 = vadd.f32 0.0, %v2489
  %2491 = vmatmul.f32.gmra.mxu0 %v2452
  %v2492 = vpop.f32.mrf.mxu0
  %v2493 = vadd.f32 0.0, %v2492
  %2494 = vmatmul.f32.gmra.mxu0 %v2455
  %v2495 = vpop.f32.mrf.mxu0
  %v2496 = vadd.f32 0.0, %v2495
  %2497 = vmatmul.f32.gmra.mxu0 %v2458
  %v2498 = vpop.f32.mrf.mxu0
  %v2499 = vadd.f32 0.0, %v2498
  %2500 = vmatmul.f32.gmra.mxu0 %v2461
  %v2501 = vpop.f32.mrf.mxu0
  %v2502 = vadd.f32 0.0, %v2501
  %2503 = vmatmul.f32.gmra.mxu0 %v2464
  %v2504 = vpop.f32.mrf.mxu0
  %v2505 = vadd.f32 0.0, %v2504
  %2506 = vdwg.mxu0
  %2515 = vrot.lane.b32.xlu0 %v2484, 8
  %v2516 = vpop.permute.xlu0 %2515
  %2517 = vrot.lane.b32.xlu0 %v2487, 8
  %v2518 = vpop.permute.xlu0 %2517
  %2519 = vrot.lane.b32.xlu0 %v2490, 8
  %v2520 = vpop.permute.xlu0 %2519
  %2521 = vrot.lane.b32.xlu0 %v2493, 8
  %v2522 = vpop.permute.xlu0 %2521
  %2523 = vrot.lane.b32.xlu0 %v2496, 8
  %v2524 = vpop.permute.xlu0 %2523
  %2525 = vrot.lane.b32.xlu0 %v2499, 8
  %v2526 = vpop.permute.xlu0 %2525
  %2527 = vrot.lane.b32.xlu0 %v2502, 8
  %v2528 = vpop.permute.xlu0 %2527
  %2529 = vrot.lane.b32.xlu0 %v2505, 8
  %v2530 = vpop.permute.xlu0 %2529
  %2539 = vst.msk [vmem:[#allocation3 + $0x40] sm:$0xff] %vm1288, %v2516
  %2540 = vst.msk [vmem:[#allocation3 + $0x48] sm:$0xff] %vm1288, %v2518
  %2541 = vst.msk [vmem:[#allocation3 + $0x50] sm:$0xff] %vm1288, %v2520
  %2542 = vst.msk [vmem:[#allocation3 + $0x58] sm:$0xff] %vm1288, %v2522
  %2543 = vst.msk [vmem:[#allocation3 + $0x60] sm:$0xff] %vm1288, %v2524
  %2544 = vst.msk [vmem:[#allocation3 + $0x68] sm:$0xff] %vm1288, %v2526
  %2545 = vst.msk [vmem:[#allocation3 + $0x70] sm:$0xff] %vm1288, %v2528
  %2546 = vst.msk [vmem:[#allocation3 + $0x78] sm:$0xff] %vm1288, %v2530
  %2547 = vrot.lane.b32.xlu0 %v667, 112
  %v2548 = vpop.permute.xlu0 %2547
  %2549 = vrot.lane.b32.xlu0 %v670, 112
  %v2550 = vpop.permute.xlu0 %2549
  %2551 = vrot.lane.b32.xlu0 %v673, 112
  %v2552 = vpop.permute.xlu0 %2551
  %2553 = vrot.lane.b32.xlu0 %v676, 112
  %v2554 = vpop.permute.xlu0 %2553
  %2555 = vrot.lane.b32.xlu0 %v679, 112
  %v2556 = vpop.permute.xlu0 %2555
  %2557 = vrot.lane.b32.xlu0 %v682, 112
  %v2558 = vpop.permute.xlu0 %2557
  %2559 = vrot.lane.b32.xlu0 %v685, 112
  %v2560 = vpop.permute.xlu0 %2559
  %2561 = vrot.lane.b32.xlu0 %v688, 112
  %v2562 = vpop.permute.xlu0 %2561
  %2563 = vrot.lane.b32.xlu0 %v667, 80
  %v2564 = vpop.permute.xlu0 %2563
  %2565 = vrot.lane.b32.xlu0 %v670, 80
  %v2566 = vpop.permute.xlu0 %2565
  %2567 = vrot.lane.b32.xlu0 %v673, 80
  %v2568 = vpop.permute.xlu0 %2567
  %2569 = vrot.lane.b32.xlu0 %v676, 80
  %v2570 = vpop.permute.xlu0 %2569
  %2571 = vrot.lane.b32.xlu0 %v679, 80
  %v2572 = vpop.permute.xlu0 %2571
  %2573 = vrot.lane.b32.xlu0 %v682, 80
  %v2574 = vpop.permute.xlu0 %2573
  %2575 = vrot.lane.b32.xlu0 %v685, 80
  %v2576 = vpop.permute.xlu0 %2575
  %2577 = vrot.lane.b32.xlu0 %v688, 80
  %v2578 = vpop.permute.xlu0 %2577
  %v2579 = vsel %vm714, %v2548, 0
  %v2581 = vsel %vm714, %v2550, 0
  %v2583 = vsel %vm714, %v2552, 0
  %v2585 = vsel %vm714, %v2554, 0
  %v2587 = vsel %vm714, %v2556, 0
  %v2589 = vsel %vm714, %v2558, 0
  %v2591 = vsel %vm714, %v2560, 0
  %v2593 = vsel %vm714, %v2562, 0
  %v2595 = vsel %vm714, %v2564, 0
  %v2597 = vsel %vm714, %v2566, 0
  %v2599 = vsel %vm714, %v2568, 0
  %v2601 = vsel %vm714, %v2570, 0
  %v2603 = vsel %vm714, %v2572, 0
  %v2605 = vsel %vm714, %v2574, 0
  %v2607 = vsel %vm714, %v2576, 0
  %v2609 = vsel %vm714, %v2578, 0
  %2611 = vmatpush.xpose.msra.mxu0 0.0
  %2612 = vmatpush.xpose.msra.mxu0 0.0
  %2613 = vmatpush.xpose.msra.mxu0 0.0
  %2614 = vmatpush.xpose.msra.mxu0 0.0
  %2615 = vmatpush.xpose.msra.mxu0 0.0
  %2616 = vmatpush.xpose.msra.mxu0 0.0
  %2617 = vmatpush.xpose.msra.mxu0 0.0
  %2618 = vmatpush.xpose.msra.mxu0 0.0
  %2619 = vmatpush.xpose.msra.mxu0 %v2609
  %2620 = vmatpush.xpose.msra.mxu0 %v2607
  %2621 = vmatpush.xpose.msra.mxu0 %v2605
  %2622 = vmatpush.xpose.msra.mxu0 %v2603
  %2623 = vmatpush.xpose.msra.mxu0 %v2601
  %2624 = vmatpush.xpose.msra.mxu0 %v2599
  %2625 = vmatpush.xpose.msra.mxu0 %v2597
  %2626 = vmatpush.xpose.msra.mxu0 %v2595
  %2627 = vmatmul.f32.gmra.mxu0 %v2579
  %v2628 = vpop.f32.mrf.mxu0
  %v2629 = vadd.f32 0.0, %v2628
  %2630 = vmatmul.f32.gmra.mxu0 %v2581
  %v2631 = vpop.f32.mrf.mxu0
  %v2632 = vadd.f32 0.0, %v2631
  %2633 = vmatmul.f32.gmra.mxu0 %v2583
  %v2634 = vpop.f32.mrf.mxu0
  %v2635 = vadd.f32 0.0, %v2634
  %2636 = vmatmul.f32.gmra.mxu0 %v2585
  %v2637 = vpop.f32.mrf.mxu0
  %v2638 = vadd.f32 0.0, %v2637
  %2639 = vmatmul.f32.gmra.mxu0 %v2587
  %v2640 = vpop.f32.mrf.mxu0
  %v2641 = vadd.f32 0.0, %v2640
  %2642 = vmatmul.f32.gmra.mxu0 %v2589
  %v2643 = vpop.f32.mrf.mxu0
  %v2644 = vadd.f32 0.0, %v2643
  %2645 = vmatmul.f32.gmra.mxu0 %v2591
  %v2646 = vpop.f32.mrf.mxu0
  %v2647 = vadd.f32 0.0, %v2646
  %2648 = vmatmul.f32.gmra.mxu0 %v2593
  %v2649 = vpop.f32.mrf.mxu0
  %v2650 = vadd.f32 0.0, %v2649
  %2651 = vdwg.mxu0
  %v2652 = vsel %vm788, %v2629, -inf
  %2653 = vmax.xlane.f32.xlu0 %v2652
  %v2654 = vpop.xlane.xlu0 %2653
  %v2655 = vsel %vm788, %v2632, -inf
  %2656 = vmax.xlane.f32.xlu0 %v2655
  %v2657 = vpop.xlane.xlu0 %2656
  %v2658 = vsel %vm788, %v2635, -inf
  %2659 = vmax.xlane.f32.xlu0 %v2658
  %v2660 = vpop.xlane.xlu0 %2659
  %v2661 = vsel %vm788, %v2638, -inf
  %2662 = vmax.xlane.f32.xlu0 %v2661
  %v2663 = vpop.xlane.xlu0 %2662
  %v2664 = vsel %vm788, %v2641, -inf
  %2665 = vmax.xlane.f32.xlu0 %v2664
  %v2666 = vpop.xlane.xlu0 %2665
  %v2667 = vsel %vm788, %v2644, -inf
  %2668 = vmax.xlane.f32.xlu0 %v2667
  %v2669 = vpop.xlane.xlu0 %2668
  %v2670 = vsel %vm788, %v2647, -inf
  %2671 = vmax.xlane.f32.xlu0 %v2670
  %v2672 = vpop.xlane.xlu0 %2671
  %v2673 = vsel %vm788, %v2650, -inf
  %2674 = vmax.xlane.f32.xlu0 %v2673
  %v2675 = vpop.xlane.xlu0 %2674
  %v2676 = vsub.f32 %v2629, %v2654
  %v2677 = vsub.f32 %v2632, %v2657
  %v2678 = vsub.f32 %v2635, %v2660
  %v2679 = vsub.f32 %v2638, %v2663
  %v2680 = vsub.f32 %v2641, %v2666
  %v2681 = vsub.f32 %v2644, %v2669
  %v2682 = vsub.f32 %v2647, %v2672
  %v2683 = vsub.f32 %v2650, %v2675
  %v2684 = vmul.f32 %v2676, 1.442695
  %v2685 = vpow.pop %v2684
  %v2686 = vmul.f32 %v2677, 1.442695
  %v2687 = vpow.pop %v2686
  %v2688 = vmul.f32 %v2678, 1.442695
  %v2689 = vpow.pop %v2688
  %v2690 = vmul.f32 %v2679, 1.442695
  %v2691 = vpow.pop %v2690
  %v2692 = vmul.f32 %v2680, 1.442695
  %v2693 = vpow.pop %v2692
  %v2694 = vmul.f32 %v2681, 1.442695
  %v2695 = vpow.pop %v2694
  %v2696 = vmul.f32 %v2682, 1.442695
  %v2697 = vpow.pop %v2696
  %v2698 = vmul.f32 %v2683, 1.442695
  %v2699 = vpow.pop %v2698
  %v2700 = vsel %vm788, %v2685, 0.0
  %2701 = vadd.xlane.f32.xlu0 %v2700
  %v2702 = vpop.xlane.xlu0 %2701
  %v2703 = vsel %vm788, %v2687, 0.0
  %2704 = vadd.xlane.f32.xlu0 %v2703
  %v2705 = vpop.xlane.xlu0 %2704
  %v2706 = vsel %vm788, %v2689, 0.0
  %2707 = vadd.xlane.f32.xlu0 %v2706
  %v2708 = vpop.xlane.xlu0 %2707
  %v2709 = vsel %vm788, %v2691, 0.0
  %2710 = vadd.xlane.f32.xlu0 %v2709
  %v2711 = vpop.xlane.xlu0 %2710
  %v2712 = vsel %vm788, %v2693, 0.0
  %2713 = vadd.xlane.f32.xlu0 %v2712
  %v2714 = vpop.xlane.xlu0 %2713
  %v2715 = vsel %vm788, %v2695, 0.0
  %2716 = vadd.xlane.f32.xlu0 %v2715
  %v2717 = vpop.xlane.xlu0 %2716
  %v2718 = vsel %vm788, %v2697, 0.0
  %2719 = vadd.xlane.f32.xlu0 %v2718
  %v2720 = vpop.xlane.xlu0 %2719
  %v2721 = vsel %vm788, %v2699, 0.0
  %2722 = vadd.xlane.f32.xlu0 %v2721
  %v2723 = vpop.xlane.xlu0 %2722
  %v2724 = vrcp.pop %v2702
  %v2725 = vrcp.pop %v2705
  %v2726 = vrcp.pop %v2708
  %v2727 = vrcp.pop %v2711
  %v2728 = vrcp.pop %v2714
  %v2729 = vrcp.pop %v2717
  %v2730 = vrcp.pop %v2720
  %v2731 = vrcp.pop %v2723
  %v2732 = vmul.f32 %v2685, %v2724
  %v2733 = vmul.f32 %v2687, %v2725
  %v2734 = vmul.f32 %v2689, %v2726
  %v2735 = vmul.f32 %v2691, %v2727
  %v2736 = vmul.f32 %v2693, %v2728
  %v2737 = vmul.f32 %v2695, %v2729
  %v2738 = vmul.f32 %v2697, %v2730
  %v2739 = vmul.f32 %v2699, %v2731
  %2740 = vrot.lane.b32.xlu0 %v667, 48
  %v2741 = vpop.permute.xlu0 %2740
  %2742 = vrot.lane.b32.xlu0 %v670, 48
  %v2743 = vpop.permute.xlu0 %2742
  %2744 = vrot.lane.b32.xlu0 %v673, 48
  %v2745 = vpop.permute.xlu0 %2744
  %2746 = vrot.lane.b32.xlu0 %v676, 48
  %v2747 = vpop.permute.xlu0 %2746
  %2748 = vrot.lane.b32.xlu0 %v679, 48
  %v2749 = vpop.permute.xlu0 %2748
  %2750 = vrot.lane.b32.xlu0 %v682, 48
  %v2751 = vpop.permute.xlu0 %2750
  %2752 = vrot.lane.b32.xlu0 %v685, 48
  %v2753 = vpop.permute.xlu0 %2752
  %2754 = vrot.lane.b32.xlu0 %v688, 48
  %v2755 = vpop.permute.xlu0 %2754
  %v2765 = vsel %vm788, %v2732, 0
  %v2768 = vsel %vm788, %v2733, 0
  %v2771 = vsel %vm788, %v2734, 0
  %v2774 = vsel %vm788, %v2735, 0
  %v2777 = vsel %vm788, %v2736, 0
  %v2780 = vsel %vm788, %v2737, 0
  %v2783 = vsel %vm788, %v2738, 0
  %v2786 = vsel %vm788, %v2739, 0
  %2788 = vmatpush.msra.mxu0 0.0
  %2789 = vmatpush.msra.mxu0 0.0
  %2790 = vmatpush.msra.mxu0 0.0
  %2791 = vmatpush.msra.mxu0 0.0
  %2792 = vmatpush.msra.mxu0 0.0
  %2793 = vmatpush.msra.mxu0 0.0
  %2794 = vmatpush.msra.mxu0 0.0
  %2795 = vmatpush.msra.mxu0 0.0
  %2796 = vmatpush.msra.mxu0 %v2755
  %2797 = vmatpush.msra.mxu0 %v2753
  %2798 = vmatpush.msra.mxu0 %v2751
  %2799 = vmatpush.msra.mxu0 %v2749
  %2800 = vmatpush.msra.mxu0 %v2747
  %2801 = vmatpush.msra.mxu0 %v2745
  %2802 = vmatpush.msra.mxu0 %v2743
  %2803 = vmatpush.msra.mxu0 %v2741
  %2804 = vmatmul.f32.gmra.mxu0 %v2765
  %v2805 = vpop.f32.mrf.mxu0
  %v2806 = vadd.f32 0.0, %v2805
  %2807 = vmatmul.f32.gmra.mxu0 %v2768
  %v2808 = vpop.f32.mrf.mxu0
  %v2809 = vadd.f32 0.0, %v2808
  %2810 = vmatmul.f32.gmra.mxu0 %v2771
  %v2811 = vpop.f32.mrf.mxu0
  %v2812 = vadd.f32 0.0, %v2811
  %2813 = vmatmul.f32.gmra.mxu0 %v2774
  %v2814 = vpop.f32.mrf.mxu0
  %v2815 = vadd.f32 0.0, %v2814
  %2816 = vmatmul.f32.gmra.mxu0 %v2777
  %v2817 = vpop.f32.mrf.mxu0
  %v2818 = vadd.f32 0.0, %v2817
  %2819 = vmatmul.f32.gmra.mxu0 %v2780
  %v2820 = vpop.f32.mrf.mxu0
  %v2821 = vadd.f32 0.0, %v2820
  %2822 = vmatmul.f32.gmra.mxu0 %v2783
  %v2823 = vpop.f32.mrf.mxu0
  %v2824 = vadd.f32 0.0, %v2823
  %2825 = vmatmul.f32.gmra.mxu0 %v2786
  %v2826 = vpop.f32.mrf.mxu0
  %v2827 = vadd.f32 0.0, %v2826
  %2828 = vdwg.mxu0
  %2837 = vrot.lane.b32.xlu0 %v2806, 16
  %v2838 = vpop.permute.xlu0 %2837
  %2839 = vrot.lane.b32.xlu0 %v2809, 16
  %v2840 = vpop.permute.xlu0 %2839
  %2841 = vrot.lane.b32.xlu0 %v2812, 16
  %v2842 = vpop.permute.xlu0 %2841
  %2843 = vrot.lane.b32.xlu0 %v2815, 16
  %v2844 = vpop.permute.xlu0 %2843
  %2845 = vrot.lane.b32.xlu0 %v2818, 16
  %v2846 = vpop.permute.xlu0 %2845
  %2847 = vrot.lane.b32.xlu0 %v2821, 16
  %v2848 = vpop.permute.xlu0 %2847
  %2849 = vrot.lane.b32.xlu0 %v2824, 16
  %v2850 = vpop.permute.xlu0 %2849
  %2851 = vrot.lane.b32.xlu0 %v2827, 16
  %v2852 = vpop.permute.xlu0 %2851
  %2861 = vst.msk [vmem:[#allocation3 + $0x40] sm:$0xff] %vm1611, %v2838
  %2862 = vst.msk [vmem:[#allocation3 + $0x48] sm:$0xff] %vm1611, %v2840
  %2863 = vst.msk [vmem:[#allocation3 + $0x50] sm:$0xff] %vm1611, %v2842
  %2864 = vst.msk [vmem:[#allocation3 + $0x58] sm:$0xff] %vm1611, %v2844
  %2865 = vst.msk [vmem:[#allocation3 + $0x60] sm:$0xff] %vm1611, %v2846
  %2866 = vst.msk [vmem:[#allocation3 + $0x68] sm:$0xff] %vm1611, %v2848
  %2867 = vst.msk [vmem:[#allocation3 + $0x70] sm:$0xff] %vm1611, %v2850
  %2868 = vst.msk [vmem:[#allocation3 + $0x78] sm:$0xff] %vm1611, %v2852
  %2869 = vrot.lane.b32.xlu0 %v667, 104
  %v2870 = vpop.permute.xlu0 %2869
  %2871 = vrot.lane.b32.xlu0 %v670, 104
  %v2872 = vpop.permute.xlu0 %2871
  %2873 = vrot.lane.b32.xlu0 %v673, 104
  %v2874 = vpop.permute.xlu0 %2873
  %2875 = vrot.lane.b32.xlu0 %v676, 104
  %v2876 = vpop.permute.xlu0 %2875
  %2877 = vrot.lane.b32.xlu0 %v679, 104
  %v2878 = vpop.permute.xlu0 %2877
  %2879 = vrot.lane.b32.xlu0 %v682, 104
  %v2880 = vpop.permute.xlu0 %2879
  %2881 = vrot.lane.b32.xlu0 %v685, 104
  %v2882 = vpop.permute.xlu0 %2881
  %2883 = vrot.lane.b32.xlu0 %v688, 104
  %v2884 = vpop.permute.xlu0 %2883
  %2885 = vrot.lane.b32.xlu0 %v667, 72
  %v2886 = vpop.permute.xlu0 %2885
  %2887 = vrot.lane.b32.xlu0 %v670, 72
  %v2888 = vpop.permute.xlu0 %2887
  %2889 = vrot.lane.b32.xlu0 %v673, 72
  %v2890 = vpop.permute.xlu0 %2889
  %2891 = vrot.lane.b32.xlu0 %v676, 72
  %v2892 = vpop.permute.xlu0 %2891
  %2893 = vrot.lane.b32.xlu0 %v679, 72
  %v2894 = vpop.permute.xlu0 %2893
  %2895 = vrot.lane.b32.xlu0 %v682, 72
  %v2896 = vpop.permute.xlu0 %2895
  %2897 = vrot.lane.b32.xlu0 %v685, 72
  %v2898 = vpop.permute.xlu0 %2897
  %2899 = vrot.lane.b32.xlu0 %v688, 72
  %v2900 = vpop.permute.xlu0 %2899
  %v2901 = vsel %vm714, %v2870, 0
  %v2903 = vsel %vm714, %v2872, 0
  %v2905 = vsel %vm714, %v2874, 0
  %v2907 = vsel %vm714, %v2876, 0
  %v2909 = vsel %vm714, %v2878, 0
  %v2911 = vsel %vm714, %v2880, 0
  %v2913 = vsel %vm714, %v2882, 0
  %v2915 = vsel %vm714, %v2884, 0
  %v2917 = vsel %vm714, %v2886, 0
  %v2919 = vsel %vm714, %v2888, 0
  %v2921 = vsel %vm714, %v2890, 0
  %v2923 = vsel %vm714, %v2892, 0
  %v2925 = vsel %vm714, %v2894, 0
  %v2927 = vsel %vm714, %v2896, 0
  %v2929 = vsel %vm714, %v2898, 0
  %v2931 = vsel %vm714, %v2900, 0
  %2933 = vmatpush.xpose.msra.mxu0 0.0
  %2934 = vmatpush.xpose.msra.mxu0 0.0
  %2935 = vmatpush.xpose.msra.mxu0 0.0
  %2936 = vmatpush.xpose.msra.mxu0 0.0
  %2937 = vmatpush.xpose.msra.mxu0 0.0
  %2938 = vmatpush.xpose.msra.mxu0 0.0
  %2939 = vmatpush.xpose.msra.mxu0 0.0
  %2940 = vmatpush.xpose.msra.mxu0 0.0
  %2941 = vmatpush.xpose.msra.mxu0 %v2931
  %2942 = vmatpush.xpose.msra.mxu0 %v2929
  %2943 = vmatpush.xpose.msra.mxu0 %v2927
  %2944 = vmatpush.xpose.msra.mxu0 %v2925
  %2945 = vmatpush.xpose.msra.mxu0 %v2923
  %2946 = vmatpush.xpose.msra.mxu0 %v2921
  %2947 = vmatpush.xpose.msra.mxu0 %v2919
  %2948 = vmatpush.xpose.msra.mxu0 %v2917
  %2949 = vmatmul.f32.gmra.mxu0 %v2901
  %v2950 = vpop.f32.mrf.mxu0
  %v2951 = vadd.f32 0.0, %v2950
  %2952 = vmatmul.f32.gmra.mxu0 %v2903
  %v2953 = vpop.f32.mrf.mxu0
  %v2954 = vadd.f32 0.0, %v2953
  %2955 = vmatmul.f32.gmra.mxu0 %v2905
  %v2956 = vpop.f32.mrf.mxu0
  %v2957 = vadd.f32 0.0, %v2956
  %2958 = vmatmul.f32.gmra.mxu0 %v2907
  %v2959 = vpop.f32.mrf.mxu0
  %v2960 = vadd.f32 0.0, %v2959
  %2961 = vmatmul.f32.gmra.mxu0 %v2909
  %v2962 = vpop.f32.mrf.mxu0
  %v2963 = vadd.f32 0.0, %v2962
  %2964 = vmatmul.f32.gmra.mxu0 %v2911
  %v2965 = vpop.f32.mrf.mxu0
  %v2966 = vadd.f32 0.0, %v2965
  %2967 = vmatmul.f32.gmra.mxu0 %v2913
  %v2968 = vpop.f32.mrf.mxu0
  %v2969 = vadd.f32 0.0, %v2968
  %2970 = vmatmul.f32.gmra.mxu0 %v2915
  %v2971 = vpop.f32.mrf.mxu0
  %v2972 = vadd.f32 0.0, %v2971
  %2973 = vdwg.mxu0
  %v2974 = vsel %vm788, %v2951, -inf
  %2975 = vmax.xlane.f32.xlu0 %v2974
  %v2976 = vpop.xlane.xlu0 %2975
  %v2977 = vsel %vm788, %v2954, -inf
  %2978 = vmax.xlane.f32.xlu0 %v2977
  %v2979 = vpop.xlane.xlu0 %2978
  %v2980 = vsel %vm788, %v2957, -inf
  %2981 = vmax.xlane.f32.xlu0 %v2980
  %v2982 = vpop.xlane.xlu0 %2981
  %v2983 = vsel %vm788, %v2960, -inf
  %2984 = vmax.xlane.f32.xlu0 %v2983
  %v2985 = vpop.xlane.xlu0 %2984
  %v2986 = vsel %vm788, %v2963, -inf
  %2987 = vmax.xlane.f32.xlu0 %v2986
  %v2988 = vpop.xlane.xlu0 %2987
  %v2989 = vsel %vm788, %v2966, -inf
  %2990 = vmax.xlane.f32.xlu0 %v2989
  %v2991 = vpop.xlane.xlu0 %2990
  %v2992 = vsel %vm788, %v2969, -inf
  %2993 = vmax.xlane.f32.xlu0 %v2992
  %v2994 = vpop.xlane.xlu0 %2993
  %v2995 = vsel %vm788, %v2972, -inf
  %2996 = vmax.xlane.f32.xlu0 %v2995
  %v2997 = vpop.xlane.xlu0 %2996
  %v2998 = vsub.f32 %v2951, %v2976
  %v2999 = vsub.f32 %v2954, %v2979
  %v3000 = vsub.f32 %v2957, %v2982
  %v3001 = vsub.f32 %v2960, %v2985
  %v3002 = vsub.f32 %v2963, %v2988
  %v3003 = vsub.f32 %v2966, %v2991
  %v3004 = vsub.f32 %v2969, %v2994
  %v3005 = vsub.f32 %v2972, %v2997
  %v3006 = vmul.f32 %v2998, 1.442695
  %v3007 = vpow.pop %v3006
  %v3008 = vmul.f32 %v2999, 1.442695
  %v3009 = vpow.pop %v3008
  %v3010 = vmul.f32 %v3000, 1.442695
  %v3011 = vpow.pop %v3010
  %v3012 = vmul.f32 %v3001, 1.442695
  %v3013 = vpow.pop %v3012
  %v3014 = vmul.f32 %v3002, 1.442695
  %v3015 = vpow.pop %v3014
  %v3016 = vmul.f32 %v3003, 1.442695
  %v3017 = vpow.pop %v3016
  %v3018 = vmul.f32 %v3004, 1.442695
  %v3019 = vpow.pop %v3018
  %v3020 = vmul.f32 %v3005, 1.442695
  %v3021 = vpow.pop %v3020
  %v3022 = vsel %vm788, %v3007, 0.0
  %3023 = vadd.xlane.f32.xlu0 %v3022
  %v3024 = vpop.xlane.xlu0 %3023
  %v3025 = vsel %vm788, %v3009, 0.0
  %3026 = vadd.xlane.f32.xlu0 %v3025
  %v3027 = vpop.xlane.xlu0 %3026
  %v3028 = vsel %vm788, %v3011, 0.0
  %3029 = vadd.xlane.f32.xlu0 %v3028
  %v3030 = vpop.xlane.xlu0 %3029
  %v3031 = vsel %vm788, %v3013, 0.0
  %3032 = vadd.xlane.f32.xlu0 %v3031
  %v3033 = vpop.xlane.xlu0 %3032
  %v3034 = vsel %vm788, %v3015, 0.0
  %3035 = vadd.xlane.f32.xlu0 %v3034
  %v3036 = vpop.xlane.xlu0 %3035
  %v3037 = vsel %vm788, %v3017, 0.0
  %3038 = vadd.xlane.f32.xlu0 %v3037
  %v3039 = vpop.xlane.xlu0 %3038
  %v3040 = vsel %vm788, %v3019, 0.0
  %3041 = vadd.xlane.f32.xlu0 %v3040
  %v3042 = vpop.xlane.xlu0 %3041
  %v3043 = vsel %vm788, %v3021, 0.0
  %3044 = vadd.xlane.f32.xlu0 %v3043
  %v3045 = vpop.xlane.xlu0 %3044
  %v3046 = vrcp.pop %v3024
  %v3047 = vrcp.pop %v3027
  %v3048 = vrcp.pop %v3030
  %v3049 = vrcp.pop %v3033
  %v3050 = vrcp.pop %v3036
  %v3051 = vrcp.pop %v3039
  %v3052 = vrcp.pop %v3042
  %v3053 = vrcp.pop %v3045
  %v3054 = vmul.f32 %v3007, %v3046
  %v3055 = vmul.f32 %v3009, %v3047
  %v3056 = vmul.f32 %v3011, %v3048
  %v3057 = vmul.f32 %v3013, %v3049
  %v3058 = vmul.f32 %v3015, %v3050
  %v3059 = vmul.f32 %v3017, %v3051
  %v3060 = vmul.f32 %v3019, %v3052
  %v3061 = vmul.f32 %v3021, %v3053
  %3062 = vrot.lane.b32.xlu0 %v667, 40
  %v3063 = vpop.permute.xlu0 %3062
  %3064 = vrot.lane.b32.xlu0 %v670, 40
  %v3065 = vpop.permute.xlu0 %3064
  %3066 = vrot.lane.b32.xlu0 %v673, 40
  %v3067 = vpop.permute.xlu0 %3066
  %3068 = vrot.lane.b32.xlu0 %v676, 40
  %v3069 = vpop.permute.xlu0 %3068
  %3070 = vrot.lane.b32.xlu0 %v679, 40
  %v3071 = vpop.permute.xlu0 %3070
  %3072 = vrot.lane.b32.xlu0 %v682, 40
  %v3073 = vpop.permute.xlu0 %3072
  %3074 = vrot.lane.b32.xlu0 %v685, 40
  %v3075 = vpop.permute.xlu0 %3074
  %3076 = vrot.lane.b32.xlu0 %v688, 40
  %v3077 = vpop.permute.xlu0 %3076
  %v3087 = vsel %vm788, %v3054, 0
  %v3090 = vsel %vm788, %v3055, 0
  %v3093 = vsel %vm788, %v3056, 0
  %v3096 = vsel %vm788, %v3057, 0
  %v3099 = vsel %vm788, %v3058, 0
  %v3102 = vsel %vm788, %v3059, 0
  %v3105 = vsel %vm788, %v3060, 0
  %v3108 = vsel %vm788, %v3061, 0
  %3110 = vmatpush.msra.mxu0 0.0
  %3111 = vmatpush.msra.mxu0 0.0
  %3112 = vmatpush.msra.mxu0 0.0
  %3113 = vmatpush.msra.mxu0 0.0
  %3114 = vmatpush.msra.mxu0 0.0
  %3115 = vmatpush.msra.mxu0 0.0
  %3116 = vmatpush.msra.mxu0 0.0
  %3117 = vmatpush.msra.mxu0 0.0
  %3118 = vmatpush.msra.mxu0 %v3077
  %3119 = vmatpush.msra.mxu0 %v3075
  %3120 = vmatpush.msra.mxu0 %v3073
  %3121 = vmatpush.msra.mxu0 %v3071
  %3122 = vmatpush.msra.mxu0 %v3069
  %3123 = vmatpush.msra.mxu0 %v3067
  %3124 = vmatpush.msra.mxu0 %v3065
  %3125 = vmatpush.msra.mxu0 %v3063
  %3126 = vmatmul.f32.gmra.mxu0 %v3087
  %v3127 = vpop.f32.mrf.mxu0
  %v3128 = vadd.f32 0.0, %v3127
  %3129 = vmatmul.f32.gmra.mxu0 %v3090
  %v3130 = vpop.f32.mrf.mxu0
  %v3131 = vadd.f32 0.0, %v3130
  %3132 = vmatmul.f32.gmra.mxu0 %v3093
  %v3133 = vpop.f32.mrf.mxu0
  %v3134 = vadd.f32 0.0, %v3133
  %3135 = vmatmul.f32.gmra.mxu0 %v3096
  %v3136 = vpop.f32.mrf.mxu0
  %v3137 = vadd.f32 0.0, %v3136
  %3138 = vmatmul.f32.gmra.mxu0 %v3099
  %v3139 = vpop.f32.mrf.mxu0
  %v3140 = vadd.f32 0.0, %v3139
  %3141 = vmatmul.f32.gmra.mxu0 %v3102
  %v3142 = vpop.f32.mrf.mxu0
  %v3143 = vadd.f32 0.0, %v3142
  %3144 = vmatmul.f32.gmra.mxu0 %v3105
  %v3145 = vpop.f32.mrf.mxu0
  %v3146 = vadd.f32 0.0, %v3145
  %3147 = vmatmul.f32.gmra.mxu0 %v3108
  %v3148 = vpop.f32.mrf.mxu0
  %v3149 = vadd.f32 0.0, %v3148
  %3150 = vdwg.mxu0
  %3159 = vrot.lane.b32.xlu0 %v3128, 24
  %v3160 = vpop.permute.xlu0 %3159
  %3161 = vrot.lane.b32.xlu0 %v3131, 24
  %v3162 = vpop.permute.xlu0 %3161
  %3163 = vrot.lane.b32.xlu0 %v3134, 24
  %v3164 = vpop.permute.xlu0 %3163
  %3165 = vrot.lane.b32.xlu0 %v3137, 24
  %v3166 = vpop.permute.xlu0 %3165
  %3167 = vrot.lane.b32.xlu0 %v3140, 24
  %v3168 = vpop.permute.xlu0 %3167
  %3169 = vrot.lane.b32.xlu0 %v3143, 24
  %v3170 = vpop.permute.xlu0 %3169
  %3171 = vrot.lane.b32.xlu0 %v3146, 24
  %v3172 = vpop.permute.xlu0 %3171
  %3173 = vrot.lane.b32.xlu0 %v3149, 24
  %v3174 = vpop.permute.xlu0 %3173
  %3183 = vst.msk [vmem:[#allocation3 + $0x40] sm:$0xff] %vm1934, %v3160
  %3184 = vst.msk [vmem:[#allocation3 + $0x48] sm:$0xff] %vm1934, %v3162
  %3185 = vst.msk [vmem:[#allocation3 + $0x50] sm:$0xff] %vm1934, %v3164
  %3186 = vst.msk [vmem:[#allocation3 + $0x58] sm:$0xff] %vm1934, %v3166
  %3187 = vst.msk [vmem:[#allocation3 + $0x60] sm:$0xff] %vm1934, %v3168
  %3188 = vst.msk [vmem:[#allocation3 + $0x68] sm:$0xff] %vm1934, %v3170
  %3189 = vst.msk [vmem:[#allocation3 + $0x70] sm:$0xff] %vm1934, %v3172
  %3190 = vst.msk [vmem:[#allocation3 + $0x78] sm:$0xff] %vm1934, %v3174
  %v3191 = vld [vmem:[#allocation3] sm:$0xff]
  %v3192 = vld [vmem:[#allocation3 + $0x8] sm:$0xff]
  %v3193 = vld [vmem:[#allocation3 + $0x10] sm:$0xff]
  %v3194 = vld [vmem:[#allocation3 + $0x18] sm:$0xff]
  %v3195 = vld [vmem:[#allocation3 + $0x20] sm:$0xff]
  %v3196 = vld [vmem:[#allocation3 + $0x28] sm:$0xff]
  %v3197 = vld [vmem:[#allocation3 + $0x30] sm:$0xff]
  %v3198 = vld [vmem:[#allocation3 + $0x38] sm:$0xff]
  %v3199 = vld [vmem:[#allocation3 + $0x40] sm:$0xff]
  %v3200 = vld [vmem:[#allocation3 + $0x48] sm:$0xff]
  %v3201 = vld [vmem:[#allocation3 + $0x50] sm:$0xff]
  %v3202 = vld [vmem:[#allocation3 + $0x58] sm:$0xff]
  %v3203 = vld [vmem:[#allocation3 + $0x60] sm:$0xff]
  %v3204 = vld [vmem:[#allocation3 + $0x68] sm:$0xff]
  %v3205 = vld [vmem:[#allocation3 + $0x70] sm:$0xff]
  %v3206 = vld [vmem:[#allocation3 + $0x78] sm:$0xff]
  %v3207 = vld [vmem:[%s5] sm:$0xff]
  %v3208 = vld [vmem:[%s5 + $0x8] sm:$0xff]
  %v3209 = vld [vmem:[%s5 + $0x10] sm:$0xff]
  %v3210 = vld [vmem:[%s5 + $0x18] sm:$0xff]
  %v3211 = vld [vmem:[%s6] sm:$0x1]
  %v3213 = vperm.slane %v3211, 0
  %v3216 = vsel %vm68, %v3191, 0
  %v3219 = vsel %vm68, %v3192, 0
  %v3222 = vsel %vm68, %v3193, 0
  %v3225 = vsel %vm68, %v3194, 0
  %v3228 = vsel %vm68, %v3195, 0
  %v3231 = vsel %vm68, %v3196, 0
  %v3234 = vsel %vm68, %v3197, 0
  %v3237 = vsel %vm68, %v3198, 0
  %v3240 = vsel %vm68, %v3199, 0
  %v3243 = vsel %vm68, %v3200, 0
  %v3246 = vsel %vm68, %v3201, 0
  %v3249 = vsel %vm68, %v3202, 0
  %v3252 = vsel %vm68, %v3203, 0
  %v3255 = vsel %vm68, %v3204, 0
  %v3258 = vsel %vm68, %v3205, 0
  %v3261 = vsel %vm68, %v3206, 0
  %3263 = vmatpush.msra.mxu0 0.0
  %3264 = vmatpush.msra.mxu0 0.0
  %3265 = vmatpush.msra.mxu0 0.0
  %3266 = vmatpush.msra.mxu0 0.0
  %3267 = vmatpush.msra.mxu0 0.0
  %3268 = vmatpush.msra.mxu0 0.0
  %3269 = vmatpush.msra.mxu0 0.0
  %3270 = vmatpush.msra.mxu0 0.0
  %3271 = vmatpush.msra.mxu0 0.0
  %3272 = vmatpush.msra.mxu0 0.0
  %3273 = vmatpush.msra.mxu0 0.0
  %3274 = vmatpush.msra.mxu0 0.0
  %3275 = vmatpush.msra.mxu0 %v3210
  %3276 = vmatpush.msra.mxu0 %v3209
  %3277 = vmatpush.msra.mxu0 %v3208
  %3278 = vmatpush.msra.mxu0 %v3207
  %3279 = vmatmul.f32.gmra.mxu0 %v3216
  %v3280 = vpop.f32.mrf.mxu0
  %v3281 = vadd.f32 %v3213, %v3280
  %3282 = vmatmul.f32.gmra.mxu0 %v3219
  %v3283 = vpop.f32.mrf.mxu0
  %v3284 = vadd.f32 %v3213, %v3283
  %3285 = vmatmul.f32.gmra.mxu0 %v3222
  %v3286 = vpop.f32.mrf.mxu0
  %v3287 = vadd.f32 %v3213, %v3286
  %3288 = vmatmul.f32.gmra.mxu0 %v3225
  %v3289 = vpop.f32.mrf.mxu0
  %v3290 = vadd.f32 %v3213, %v3289
  %3291 = vmatmul.f32.gmra.mxu0 %v3228
  %v3292 = vpop.f32.mrf.mxu0
  %v3293 = vadd.f32 %v3213, %v3292
  %3294 = vmatmul.f32.gmra.mxu0 %v3231
  %v3295 = vpop.f32.mrf.mxu0
  %v3296 = vadd.f32 %v3213, %v3295
  %3297 = vmatmul.f32.gmra.mxu0 %v3234
  %v3298 = vpop.f32.mrf.mxu0
  %v3299 = vadd.f32 %v3213, %v3298
  %3300 = vmatmul.f32.gmra.mxu0 %v3237
  %v3301 = vpop.f32.mrf.mxu0
  %v3302 = vadd.f32 %v3213, %v3301
  %3303 = vmatmul.f32.gmra.mxu0 %v3240
  %v3304 = vpop.f32.mrf.mxu0
  %v3305 = vadd.f32 %v3213, %v3304
  %3306 = vmatmul.f32.gmra.mxu0 %v3243
  %v3307 = vpop.f32.mrf.mxu0
  %v3308 = vadd.f32 %v3213, %v3307
  %3309 = vmatmul.f32.gmra.mxu0 %v3246
  %v3310 = vpop.f32.mrf.mxu0
  %v3311 = vadd.f32 %v3213, %v3310
  %3312 = vmatmul.f32.gmra.mxu0 %v3249
  %v3313 = vpop.f32.mrf.mxu0
  %v3314 = vadd.f32 %v3213, %v3313
  %3315 = vmatmul.f32.gmra.mxu0 %v3252
  %v3316 = vpop.f32.mrf.mxu0
  %v3317 = vadd.f32 %v3213, %v3316
  %3318 = vmatmul.f32.gmra.mxu0 %v3255
  %v3319 = vpop.f32.mrf.mxu0
  %v3320 = vadd.f32 %v3213, %v3319
  %3321 = vmatmul.f32.gmra.mxu0 %v3258
  %v3322 = vpop.f32.mrf.mxu0
  %v3323 = vadd.f32 %v3213, %v3322
  %3324 = vmatmul.f32.gmra.mxu0 %v3261
  %v3325 = vpop.f32.mrf.mxu0
  %v3326 = vadd.f32 %v3213, %v3325
  %3327 = vdwg.mxu0
  %v3328 = vadd.f32 %v3281, %v122
  %v3329 = vadd.f32 %v3284, %v123
  %v3330 = vadd.f32 %v3287, %v124
  %v3331 = vadd.f32 %v3290, %v125
  %v3332 = vadd.f32 %v3293, %v126
  %v3333 = vadd.f32 %v3296, %v127
  %v3334 = vadd.f32 %v3299, %v128
  %v3335 = vadd.f32 %v3302, %v129
  %v3336 = vadd.f32 %v3305, %v130
  %v3337 = vadd.f32 %v3308, %v131
  %v3338 = vadd.f32 %v3311, %v132
  %v3339 = vadd.f32 %v3314, %v133
  %v3340 = vadd.f32 %v3317, %v134
  %v3341 = vadd.f32 %v3320, %v135
  %v3342 = vadd.f32 %v3323, %v136
  %v3343 = vadd.f32 %v3326, %v137
  %v3344 = vsel %vm68, %v3328, 0.0
  %3345 = vadd.xlane.f32.xlu0 %v3344
  %v3346 = vpop.xlane.xlu0 %3345
  %v3347 = vsel %vm68, %v3329, 0.0
  %3348 = vadd.xlane.f32.xlu0 %v3347
  %v3349 = vpop.xlane.xlu0 %3348
  %v3350 = vsel %vm68, %v3330, 0.0
  %3351 = vadd.xlane.f32.xlu0 %v3350
  %v3352 = vpop.xlane.xlu0 %3351
  %v3353 = vsel %vm68, %v3331, 0.0
  %3354 = vadd.xlane.f32.xlu0 %v3353
  %v3355 = vpop.xlane.xlu0 %3354
  %v3356 = vsel %vm68, %v3332, 0.0
  %3357 = vadd.xlane.f32.xlu0 %v3356
  %v3358 = vpop.xlane.xlu0 %3357
  %v3359 = vsel %vm68, %v3333, 0.0
  %3360 = vadd.xlane.f32.xlu0 %v3359
  %v3361 = vpop.xlane.xlu0 %3360
  %v3362 = vsel %vm68, %v3334, 0.0
  %3363 = vadd.xlane.f32.xlu0 %v3362
  %v3364 = vpop.xlane.xlu0 %3363
  %v3365 = vsel %vm68, %v3335, 0.0
  %3366 = vadd.xlane.f32.xlu0 %v3365
  %v3367 = vpop.xlane.xlu0 %3366
  %v3368 = vsel %vm68, %v3336, 0.0
  %3369 = vadd.xlane.f32.xlu0 %v3368
  %v3370 = vpop.xlane.xlu0 %3369
  %v3371 = vsel %vm68, %v3337, 0.0
  %3372 = vadd.xlane.f32.xlu0 %v3371
  %v3373 = vpop.xlane.xlu0 %3372
  %v3374 = vsel %vm68, %v3338, 0.0
  %3375 = vadd.xlane.f32.xlu0 %v3374
  %v3376 = vpop.xlane.xlu0 %3375
  %v3377 = vsel %vm68, %v3339, 0.0
  %3378 = vadd.xlane.f32.xlu0 %v3377
  %v3379 = vpop.xlane.xlu0 %3378
  %v3380 = vsel %vm68, %v3340, 0.0
  %3381 = vadd.xlane.f32.xlu0 %v3380
  %v3382 = vpop.xlane.xlu0 %3381
  %v3383 = vsel %vm68, %v3341, 0.0
  %3384 = vadd.xlane.f32.xlu0 %v3383
  %v3385 = vpop.xlane.xlu0 %3384
  %v3386 = vsel %vm68, %v3342, 0.0
  %3387 = vadd.xlane.f32.xlu0 %v3386
  %v3388 = vpop.xlane.xlu0 %3387
  %v3389 = vsel %vm68, %v3343, 0.0
  %3390 = vadd.xlane.f32.xlu0 %v3389
  %v3391 = vpop.xlane.xlu0 %3390
  %v3392 = vmul.f32 %v3346, %v194
  %v3393 = vmul.f32 %v3349, %v194
  %v3394 = vmul.f32 %v3352, %v194
  %v3395 = vmul.f32 %v3355, %v194
  %v3396 = vmul.f32 %v3358, %v194
  %v3397 = vmul.f32 %v3361, %v194
  %v3398 = vmul.f32 %v3364, %v194
  %v3399 = vmul.f32 %v3367, %v194
  %v3400 = vmul.f32 %v3370, %v194
  %v3401 = vmul.f32 %v3373, %v194
  %v3402 = vmul.f32 %v3376, %v194
  %v3403 = vmul.f32 %v3379, %v194
  %v3404 = vmul.f32 %v3382, %v194
  %v3405 = vmul.f32 %v3385, %v194
  %v3406 = vmul.f32 %v3388, %v194
  %v3407 = vmul.f32 %v3391, %v194
  %v3408 = vmul.f32 %v3328, %v3328
  %v3409 = vmul.f32 %v3329, %v3329
  %v3410 = vmul.f32 %v3330, %v3330
  %v3411 = vmul.f32 %v3331, %v3331
  %v3412 = vmul.f32 %v3332, %v3332
  %v3413 = vmul.f32 %v3333, %v3333
  %v3414 = vmul.f32 %v3334, %v3334
  %v3415 = vmul.f32 %v3335, %v3335
  %v3416 = vmul.f32 %v3336, %v3336
  %v3417 = vmul.f32 %v3337, %v3337
  %v3418 = vmul.f32 %v3338, %v3338
  %v3419 = vmul.f32 %v3339, %v3339
  %v3420 = vmul.f32 %v3340, %v3340
  %v3421 = vmul.f32 %v3341, %v3341
  %v3422 = vmul.f32 %v3342, %v3342
  %v3423 = vmul.f32 %v3343, %v3343
  %v3424 = vsel %vm68, %v3408, 0.0
  %3425 = vadd.xlane.f32.xlu0 %v3424
  %v3426 = vpop.xlane.xlu0 %3425
  %v3427 = vsel %vm68, %v3409, 0.0
  %3428 = vadd.xlane.f32.xlu0 %v3427
  %v3429 = vpop.xlane.xlu0 %3428
  %v3430 = vsel %vm68, %v3410, 0.0
  %3431 = vadd.xlane.f32.xlu0 %v3430
  %v3432 = vpop.xlane.xlu0 %3431
  %v3433 = vsel %vm68, %v3411, 0.0
  %3434 = vadd.xlane.f32.xlu0 %v3433
  %v3435 = vpop.xlane.xlu0 %3434
  %v3436 = vsel %vm68, %v3412, 0.0
  %3437 = vadd.xlane.f32.xlu0 %v3436
  %v3438 = vpop.xlane.xlu0 %3437
  %v3439 = vsel %vm68, %v3413, 0.0
  %3440 = vadd.xlane.f32.xlu0 %v3439
  %v3441 = vpop.xlane.xlu0 %3440
  %v3442 = vsel %vm68, %v3414, 0.0
  %3443 = vadd.xlane.f32.xlu0 %v3442
  %v3444 = vpop.xlane.xlu0 %3443
  %v3445 = vsel %vm68, %v3415, 0.0
  %3446 = vadd.xlane.f32.xlu0 %v3445
  %v3447 = vpop.xlane.xlu0 %3446
  %v3448 = vsel %vm68, %v3416, 0.0
  %3449 = vadd.xlane.f32.xlu0 %v3448
  %v3450 = vpop.xlane.xlu0 %3449
  %v3451 = vsel %vm68, %v3417, 0.0
  %3452 = vadd.xlane.f32.xlu0 %v3451
  %v3453 = vpop.xlane.xlu0 %3452
  %v3454 = vsel %vm68, %v3418, 0.0
  %3455 = vadd.xlane.f32.xlu0 %v3454
  %v3456 = vpop.xlane.xlu0 %3455
  %v3457 = vsel %vm68, %v3419, 0.0
  %3458 = vadd.xlane.f32.xlu0 %v3457
  %v3459 = vpop.xlane.xlu0 %3458
  %v3460 = vsel %vm68, %v3420, 0.0
  %3461 = vadd.xlane.f32.xlu0 %v3460
  %v3462 = vpop.xlane.xlu0 %3461
  %v3463 = vsel %vm68, %v3421, 0.0
  %3464 = vadd.xlane.f32.xlu0 %v3463
  %v3465 = vpop.xlane.xlu0 %3464
  %v3466 = vsel %vm68, %v3422, 0.0
  %3467 = vadd.xlane.f32.xlu0 %v3466
  %v3468 = vpop.xlane.xlu0 %3467
  %v3469 = vsel %vm68, %v3423, 0.0
  %3470 = vadd.xlane.f32.xlu0 %v3469
  %v3471 = vpop.xlane.xlu0 %3470
  %v3472 = vmul.f32 %v3426, %v194
  %v3473 = vmul.f32 %v3429, %v194
  %v3474 = vmul.f32 %v3432, %v194
  %v3475 = vmul.f32 %v3435, %v194
  %v3476 = vmul.f32 %v3438, %v194
  %v3477 = vmul.f32 %v3441, %v194
  %v3478 = vmul.f32 %v3444, %v194
  %v3479 = vmul.f32 %v3447, %v194
  %v3480 = vmul.f32 %v3450, %v194
  %v3481 = vmul.f32 %v3453, %v194
  %v3482 = vmul.f32 %v3456, %v194
  %v3483 = vmul.f32 %v3459, %v194
  %v3484 = vmul.f32 %v3462, %v194
  %v3485 = vmul.f32 %v3465, %v194
  %v3486 = vmul.f32 %v3468, %v194
  %v3487 = vmul.f32 %v3471, %v194
  %v3488 = vmul.f32 %v3392, %v3392
  %v3489 = vmul.f32 %v3393, %v3393
  %v3490 = vmul.f32 %v3394, %v3394
  %v3491 = vmul.f32 %v3395, %v3395
  %v3492 = vmul.f32 %v3396, %v3396
  %v3493 = vmul.f32 %v3397, %v3397
  %v3494 = vmul.f32 %v3398, %v3398
  %v3495 = vmul.f32 %v3399, %v3399
  %v3496 = vmul.f32 %v3400, %v3400
  %v3497 = vmul.f32 %v3401, %v3401
  %v3498 = vmul.f32 %v3402, %v3402
  %v3499 = vmul.f32 %v3403, %v3403
  %v3500 = vmul.f32 %v3404, %v3404
  %v3501 = vmul.f32 %v3405, %v3405
  %v3502 = vmul.f32 %v3406, %v3406
  %v3503 = vmul.f32 %v3407, %v3407
  %v3504 = vsub.f32 %v3472, %v3488
  %v3505 = vsub.f32 %v3473, %v3489
  %v3506 = vsub.f32 %v3474, %v3490
  %v3507 = vsub.f32 %v3475, %v3491
  %v3508 = vsub.f32 %v3476, %v3492
  %v3509 = vsub.f32 %v3477, %v3493
  %v3510 = vsub.f32 %v3478, %v3494
  %v3511 = vsub.f32 %v3479, %v3495
  %v3512 = vsub.f32 %v3480, %v3496
  %v3513 = vsub.f32 %v3481, %v3497
  %v3514 = vsub.f32 %v3482, %v3498
  %v3515 = vsub.f32 %v3483, %v3499
  %v3516 = vsub.f32 %v3484, %v3500
  %v3517 = vsub.f32 %v3485, %v3501
  %v3518 = vsub.f32 %v3486, %v3502
  %v3519 = vsub.f32 %v3487, %v3503
  %v3520 = vsub.f32 %v3328, %v3392
  %v3521 = vsub.f32 %v3329, %v3393
  %v3522 = vsub.f32 %v3330, %v3394
  %v3523 = vsub.f32 %v3331, %v3395
  %v3524 = vsub.f32 %v3332, %v3396
  %v3525 = vsub.f32 %v3333, %v3397
  %v3526 = vsub.f32 %v3334, %v3398
  %v3527 = vsub.f32 %v3335, %v3399
  %v3528 = vsub.f32 %v3336, %v3400
  %v3529 = vsub.f32 %v3337, %v3401
  %v3530 = vsub.f32 %v3338, %v3402
  %v3531 = vsub.f32 %v3339, %v3403
  %v3532 = vsub.f32 %v3340, %v3404
  %v3533 = vsub.f32 %v3341, %v3405
  %v3534 = vsub.f32 %v3342, %v3406
  %v3535 = vsub.f32 %v3343, %v3407
  %v3536 = vadd.f32 %v3504, 1e-05
  %v3537 = vadd.f32 %v3505, 1e-05
  %v3538 = vadd.f32 %v3506, 1e-05
  %v3539 = vadd.f32 %v3507, 1e-05
  %v3540 = vadd.f32 %v3508, 1e-05
  %v3541 = vadd.f32 %v3509, 1e-05
  %v3542 = vadd.f32 %v3510, 1e-05
  %v3543 = vadd.f32 %v3511, 1e-05
  %v3544 = vadd.f32 %v3512, 1e-05
  %v3545 = vadd.f32 %v3513, 1e-05
  %v3546 = vadd.f32 %v3514, 1e-05
  %v3547 = vadd.f32 %v3515, 1e-05
  %v3548 = vadd.f32 %v3516, 1e-05
  %v3549 = vadd.f32 %v3517, 1e-05
  %v3550 = vadd.f32 %v3518, 1e-05
  %v3551 = vadd.f32 %v3519, 1e-05
  %v3552 = vrsqrt.pop %v3536
  %v3553 = vmul.f32 %v3552, %v3536
  %v3554 = vmul.f32 %v3553, %v3552
  %v3555 = vmul.f32 0.5, %v3554
  %v3556 = vsub.f32 1.5, %v3555
  %v3557 = vmul.f32 %v3552, %v3556
  %vm3558 = vweird.f32 %v3536
  %vm3559 = vweird.f32 %v3552
  %vm3560 = vmor %vm3558, %vm3559
  %v3561 = vsel %vm3560, %v3552, %v3557
  %v3562 = vrsqrt.pop %v3537
  %v3563 = vmul.f32 %v3562, %v3537
  %v3564 = vmul.f32 %v3563, %v3562
  %v3565 = vmul.f32 0.5, %v3564
  %v3566 = vsub.f32 1.5, %v3565
  %v3567 = vmul.f32 %v3562, %v3566
  %vm3568 = vweird.f32 %v3537
  %vm3569 = vweird.f32 %v3562
  %vm3570 = vmor %vm3568, %vm3569
  %v3571 = vsel %vm3570, %v3562, %v3567
  %v3572 = vrsqrt.pop %v3538
  %v3573 = vmul.f32 %v3572, %v3538
  %v3574 = vmul.f32 %v3573, %v3572
  %v3575 = vmul.f32 0.5, %v3574
  %v3576 = vsub.f32 1.5, %v3575
  %v3577 = vmul.f32 %v3572, %v3576
  %vm3578 = vweird.f32 %v3538
  %vm3579 = vweird.f32 %v3572
  %vm3580 = vmor %vm3578, %vm3579
  %v3581 = vsel %vm3580, %v3572, %v3577
  %v3582 = vrsqrt.pop %v3539
  %v3583 = vmul.f32 %v3582, %v3539
  %v3584 = vmul.f32 %v3583, %v3582
  %v3585 = vmul.f32 0.5, %v3584
  %v3586 = vsub.f32 1.5, %v3585
  %v3587 = vmul.f32 %v3582, %v3586
  %vm3588 = vweird.f32 %v3539
  %vm3589 = vweird.f32 %v3582
  %vm3590 = vmor %vm3588, %vm3589
  %v3591 = vsel %vm3590, %v3582, %v3587
  %v3592 = vrsqrt.pop %v3540
  %v3593 = vmul.f32 %v3592, %v3540
  %v3594 = vmul.f32 %v3593, %v3592
  %v3595 = vmul.f32 0.5, %v3594
  %v3596 = vsub.f32 1.5, %v3595
  %v3597 = vmul.f32 %v3592, %v3596
  %vm3598 = vweird.f32 %v3540
  %vm3599 = vweird.f32 %v3592
  %vm3600 = vmor %vm3598, %vm3599
  %v3601 = vsel %vm3600, %v3592, %v3597
  %v3602 = vrsqrt.pop %v3541
  %v3603 = vmul.f32 %v3602, %v3541
  %v3604 = vmul.f32 %v3603, %v3602
  %v3605 = vmul.f32 0.5, %v3604
  %v3606 = vsub.f32 1.5, %v3605
  %v3607 = vmul.f32 %v3602, %v3606
  %vm3608 = vweird.f32 %v3541
  %vm3609 = vweird.f32 %v3602
  %vm3610 = vmor %vm3608, %vm3609
  %v3611 = vsel %vm3610, %v3602, %v3607
  %v3612 = vrsqrt.pop %v3542
  %v3613 = vmul.f32 %v3612, %v3542
  %v3614 = vmul.f32 %v3613, %v3612
  %v3615 = vmul.f32 0.5, %v3614
  %v3616 = vsub.f32 1.5, %v3615
  %v3617 = vmul.f32 %v3612, %v3616
  %vm3618 = vweird.f32 %v3542
  %vm3619 = vweird.f32 %v3612
  %vm3620 = vmor %vm3618, %vm3619
  %v3621 = vsel %vm3620, %v3612, %v3617
  %v3622 = vrsqrt.pop %v3543
  %v3623 = vmul.f32 %v3622, %v3543
  %v3624 = vmul.f32 %v3623, %v3622
  %v3625 = vmul.f32 0.5, %v3624
  %v3626 = vsub.f32 1.5, %v3625
  %v3627 = vmul.f32 %v3622, %v3626
  %vm3628 = vweird.f32 %v3543
  %vm3629 = vweird.f32 %v3622
  %vm3630 = vmor %vm3628, %vm3629
  %v3631 = vsel %vm3630, %v3622, %v3627
  %v3632 = vrsqrt.pop %v3544
  %v3633 = vmul.f32 %v3632, %v3544
  %v3634 = vmul.f32 %v3633, %v3632
  %v3635 = vmul.f32 0.5, %v3634
  %v3636 = vsub.f32 1.5, %v3635
  %v3637 = vmul.f32 %v3632, %v3636
  %vm3638 = vweird.f32 %v3544
  %vm3639 = vweird.f32 %v3632
  %vm3640 = vmor %vm3638, %vm3639
  %v3641 = vsel %vm3640, %v3632, %v3637
  %v3642 = vrsqrt.pop %v3545
  %v3643 = vmul.f32 %v3642, %v3545
  %v3644 = vmul.f32 %v3643, %v3642
  %v3645 = vmul.f32 0.5, %v3644
  %v3646 = vsub.f32 1.5, %v3645
  %v3647 = vmul.f32 %v3642, %v3646
  %vm3648 = vweird.f32 %v3545
  %vm3649 = vweird.f32 %v3642
  %vm3650 = vmor %vm3648, %vm3649
  %v3651 = vsel %vm3650, %v3642, %v3647
  %v3652 = vrsqrt.pop %v3546
  %v3653 = vmul.f32 %v3652, %v3546
  %v3654 = vmul.f32 %v3653, %v3652
  %v3655 = vmul.f32 0.5, %v3654
  %v3656 = vsub.f32 1.5, %v3655
  %v3657 = vmul.f32 %v3652, %v3656
  %vm3658 = vweird.f32 %v3546
  %vm3659 = vweird.f32 %v3652
  %vm3660 = vmor %vm3658, %vm3659
  %v3661 = vsel %vm3660, %v3652, %v3657
  %v3662 = vrsqrt.pop %v3547
  %v3663 = vmul.f32 %v3662, %v3547
  %v3664 = vmul.f32 %v3663, %v3662
  %v3665 = vmul.f32 0.5, %v3664
  %v3666 = vsub.f32 1.5, %v3665
  %v3667 = vmul.f32 %v3662, %v3666
  %vm3668 = vweird.f32 %v3547
  %vm3669 = vweird.f32 %v3662
  %vm3670 = vmor %vm3668, %vm3669
  %v3671 = vsel %vm3670, %v3662, %v3667
  %v3672 = vrsqrt.pop %v3548
  %v3673 = vmul.f32 %v3672, %v3548
  %v3674 = vmul.f32 %v3673, %v3672
  %v3675 = vmul.f32 0.5, %v3674
  %v3676 = vsub.f32 1.5, %v3675
  %v3677 = vmul.f32 %v3672, %v3676
  %vm3678 = vweird.f32 %v3548
  %vm3679 = vweird.f32 %v3672
  %vm3680 = vmor %vm3678, %vm3679
  %v3681 = vsel %vm3680, %v3672, %v3677
  %v3682 = vrsqrt.pop %v3549
  %v3683 = vmul.f32 %v3682, %v3549
  %v3684 = vmul.f32 %v3683, %v3682
  %v3685 = vmul.f32 0.5, %v3684
  %v3686 = vsub.f32 1.5, %v3685
  %v3687 = vmul.f32 %v3682, %v3686
  %vm3688 = vweird.f32 %v3549
  %vm3689 = vweird.f32 %v3682
  %vm3690 = vmor %vm3688, %vm3689
  %v3691 = vsel %vm3690, %v3682, %v3687
  %v3692 = vrsqrt.pop %v3550
  %v3693 = vmul.f32 %v3692, %v3550
  %v3694 = vmul.f32 %v3693, %v3692
  %v3695 = vmul.f32 0.5, %v3694
  %v3696 = vsub.f32 1.5, %v3695
  %v3697 = vmul.f32 %v3692, %v3696
  %vm3698 = vweird.f32 %v3550
  %vm3699 = vweird.f32 %v3692
  %vm3700 = vmor %vm3698, %vm3699
  %v3701 = vsel %vm3700, %v3692, %v3697
  %v3702 = vrsqrt.pop %v3551
  %v3703 = vmul.f32 %v3702, %v3551
  %v3704 = vmul.f32 %v3703, %v3702
  %v3705 = vmul.f32 0.5, %v3704
  %v3706 = vsub.f32 1.5, %v3705
  %v3707 = vmul.f32 %v3702, %v3706
  %vm3708 = vweird.f32 %v3551
  %vm3709 = vweird.f32 %v3702
  %vm3710 = vmor %vm3708, %vm3709
  %v3711 = vsel %vm3710, %v3702, %v3707
  %v3712 = vmul.f32 %v3520, %v3561
  %v3713 = vmul.f32 %v3521, %v3571
  %v3714 = vmul.f32 %v3522, %v3581
  %v3715 = vmul.f32 %v3523, %v3591
  %v3716 = vmul.f32 %v3524, %v3601
  %v3717 = vmul.f32 %v3525, %v3611
  %v3718 = vmul.f32 %v3526, %v3621
  %v3719 = vmul.f32 %v3527, %v3631
  %v3720 = vmul.f32 %v3528, %v3641
  %v3721 = vmul.f32 %v3529, %v3651
  %v3722 = vmul.f32 %v3530, %v3661
  %v3723 = vmul.f32 %v3531, %v3671
  %v3724 = vmul.f32 %v3532, %v3681
  %v3725 = vmul.f32 %v3533, %v3691
  %v3726 = vmul.f32 %v3534, %v3701
  %v3727 = vmul.f32 %v3535, %v3711
  %v3728 = vmul.f32 %v3712, %v532
  %v3729 = vmul.f32 %v3713, %v532
  %v3730 = vmul.f32 %v3714, %v532
  %v3731 = vmul.f32 %v3715, %v532
  %v3732 = vmul.f32 %v3716, %v532
  %v3733 = vmul.f32 %v3717, %v532
  %v3734 = vmul.f32 %v3718, %v532
  %v3735 = vmul.f32 %v3719, %v532
  %v3736 = vmul.f32 %v3720, %v532
  %v3737 = vmul.f32 %v3721, %v532
  %v3738 = vmul.f32 %v3722, %v532
  %v3739 = vmul.f32 %v3723, %v532
  %v3740 = vmul.f32 %v3724, %v532
  %v3741 = vmul.f32 %v3725, %v532
  %v3742 = vmul.f32 %v3726, %v532
  %v3743 = vmul.f32 %v3727, %v532
  %v3744 = vadd.f32 %v3728, %v551
  %v3745 = vadd.f32 %v3729, %v551
  %v3746 = vadd.f32 %v3730, %v551
  %v3747 = vadd.f32 %v3731, %v551
  %v3748 = vadd.f32 %v3732, %v551
  %v3749 = vadd.f32 %v3733, %v551
  %v3750 = vadd.f32 %v3734, %v551
  %v3751 = vadd.f32 %v3735, %v551
  %v3752 = vadd.f32 %v3736, %v551
  %v3753 = vadd.f32 %v3737, %v551
  %v3754 = vadd.f32 %v3738, %v551
  %v3755 = vadd.f32 %v3739, %v551
  %v3756 = vadd.f32 %v3740, %v551
  %v3757 = vadd.f32 %v3741, %v551
  %v3758 = vadd.f32 %v3742, %v551
  %v3759 = vadd.f32 %v3743, %v551
  %v3760 = vld [vmem:[%s7] sm:$0xff]
  %v3761 = vld [vmem:[%s7 + $0x8] sm:$0xff]
  %v3762 = vld [vmem:[%s7 + $0x10] sm:$0xff]
  %v3763 = vld [vmem:[%s7 + $0x18] sm:$0xff]
  %v3764 = vld [vmem:[%s8] sm:$0x1]
  %v3766 = vperm.slane %v3764, 0
  %v3769 = vsel %vm68, %v3744, 0
  %v3772 = vsel %vm68, %v3745, 0
  %v3775 = vsel %vm68, %v3746, 0
  %v3778 = vsel %vm68, %v3747, 0
  %v3781 = vsel %vm68, %v3748, 0
  %v3784 = vsel %vm68, %v3749, 0
  %v3787 = vsel %vm68, %v3750, 0
  %v3790 = vsel %vm68, %v3751, 0
  %v3793 = vsel %vm68, %v3752, 0
  %v3796 = vsel %vm68, %v3753, 0
  %v3799 = vsel %vm68, %v3754, 0
  %v3802 = vsel %vm68, %v3755, 0
  %v3805 = vsel %vm68, %v3756, 0
  %v3808 = vsel %vm68, %v3757, 0
  %v3811 = vsel %vm68, %v3758, 0
  %v3814 = vsel %vm68, %v3759, 0
  %3816 = vmatpush.msra.mxu0 0.0
  %3817 = vmatpush.msra.mxu0 0.0
  %3818 = vmatpush.msra.mxu0 0.0
  %3819 = vmatpush.msra.mxu0 0.0
  %3820 = vmatpush.msra.mxu0 0.0
  %3821 = vmatpush.msra.mxu0 0.0
  %3822 = vmatpush.msra.mxu0 0.0
  %3823 = vmatpush.msra.mxu0 0.0
  %3824 = vmatpush.msra.mxu0 0.0
  %3825 = vmatpush.msra.mxu0 0.0
  %3826 = vmatpush.msra.mxu0 0.0
  %3827 = vmatpush.msra.mxu0 0.0
  %3828 = vmatpush.msra.mxu0 %v3763
  %3829 = vmatpush.msra.mxu0 %v3762
  %3830 = vmatpush.msra.mxu0 %v3761
  %3831 = vmatpush.msra.mxu0 %v3760
  %3832 = vmatmul.f32.gmra.mxu0 %v3769
  %v3833 = vpop.f32.mrf.mxu0
  %v3834 = vadd.f32 %v3766, %v3833
  %3835 = vmatmul.f32.gmra.mxu0 %v3772
  %v3836 = vpop.f32.mrf.mxu0
  %v3837 = vadd.f32 %v3766, %v3836
  %3838 = vmatmul.f32.gmra.mxu0 %v3775
  %v3839 = vpop.f32.mrf.mxu0
  %v3840 = vadd.f32 %v3766, %v3839
  %3841 = vmatmul.f32.gmra.mxu0 %v3778
  %v3842 = vpop.f32.mrf.mxu0
  %v3843 = vadd.f32 %v3766, %v3842
  %3844 = vmatmul.f32.gmra.mxu0 %v3781
  %v3845 = vpop.f32.mrf.mxu0
  %v3846 = vadd.f32 %v3766, %v3845
  %3847 = vmatmul.f32.gmra.mxu0 %v3784
  %v3848 = vpop.f32.mrf.mxu0
  %v3849 = vadd.f32 %v3766, %v3848
  %3850 = vmatmul.f32.gmra.mxu0 %v3787
  %v3851 = vpop.f32.mrf.mxu0
  %v3852 = vadd.f32 %v3766, %v3851
  %3853 = vmatmul.f32.gmra.mxu0 %v3790
  %v3854 = vpop.f32.mrf.mxu0
  %v3855 = vadd.f32 %v3766, %v3854
  %3856 = vmatmul.f32.gmra.mxu0 %v3793
  %v3857 = vpop.f32.mrf.mxu0
  %v3858 = vadd.f32 %v3766, %v3857
  %3859 = vmatmul.f32.gmra.mxu0 %v3796
  %v3860 = vpop.f32.mrf.mxu0
  %v3861 = vadd.f32 %v3766, %v3860
  %3862 = vmatmul.f32.gmra.mxu0 %v3799
  %v3863 = vpop.f32.mrf.mxu0
  %v3864 = vadd.f32 %v3766, %v3863
  %3865 = vmatmul.f32.gmra.mxu0 %v3802
  %v3866 = vpop.f32.mrf.mxu0
  %v3867 = vadd.f32 %v3766, %v3866
  %3868 = vmatmul.f32.gmra.mxu0 %v3805
  %v3869 = vpop.f32.mrf.mxu0
  %v3870 = vadd.f32 %v3766, %v3869
  %3871 = vmatmul.f32.gmra.mxu0 %v3808
  %v3872 = vpop.f32.mrf.mxu0
  %v3873 = vadd.f32 %v3766, %v3872
  %3874 = vmatmul.f32.gmra.mxu0 %v3811
  %v3875 = vpop.f32.mrf.mxu0
  %v3876 = vadd.f32 %v3766, %v3875
  %3877 = vmatmul.f32.gmra.mxu0 %v3814
  %v3878 = vpop.f32.mrf.mxu0
  %v3879 = vadd.f32 %v3766, %v3878
  %3880 = vdwg.mxu0
  %v3881 = vmul.f32 %v3834, 0.5
  %v3882 = vmul.f32 %v3837, 0.5
  %v3883 = vmul.f32 %v3840, 0.5
  %v3884 = vmul.f32 %v3843, 0.5
  %v3885 = vmul.f32 %v3846, 0.5
  %v3886 = vmul.f32 %v3849, 0.5
  %v3887 = vmul.f32 %v3852, 0.5
  %v3888 = vmul.f32 %v3855, 0.5
  %v3889 = vmul.f32 %v3858, 0.5
  %v3890 = vmul.f32 %v3861, 0.5
  %v3891 = vmul.f32 %v3864, 0.5
  %v3892 = vmul.f32 %v3867, 0.5
  %v3893 = vmul.f32 %v3870, 0.5
  %v3894 = vmul.f32 %v3873, 0.5
  %v3895 = vmul.f32 %v3876, 0.5
  %v3896 = vmul.f32 %v3879, 0.5
  %v3897 = vmul.f32 %v3834, 0.70710677
  %v3898 = vmul.f32 %v3837, 0.70710677
  %v3899 = vmul.f32 %v3840, 0.70710677
  %v3900 = vmul.f32 %v3843, 0.70710677
  %v3901 = vmul.f32 %v3846, 0.70710677
  %v3902 = vmul.f32 %v3849, 0.70710677
  %v3903 = vmul.f32 %v3852, 0.70710677
  %v3904 = vmul.f32 %v3855, 0.70710677
  %v3905 = vmul.f32 %v3858, 0.70710677
  %v3906 = vmul.f32 %v3861, 0.70710677
  %v3907 = vmul.f32 %v3864, 0.70710677
  %v3908 = vmul.f32 %v3867, 0.70710677
  %v3909 = vmul.f32 %v3870, 0.70710677
  %v3910 = vmul.f32 %v3873, 0.70710677
  %v3911 = vmul.f32 %v3876, 0.70710677
  %v3912 = vmul.f32 %v3879, 0.70710677
  %v3913 = vmul.f32 %v3897, %v3897
  %v3914 = vmin.f32 16.0, %v3913
  %v3915 = vmul.f32 %v3914, 2.1237322e-06
  %v3916 = vadd.f32 %v3915, 0.00028619796
  %v3917 = vmul.f32 %v3914, %v3916
  %v3918 = vadd.f32 %v3917, 0.0036580483
  %v3919 = vmul.f32 %v3914, %v3918
  %v3920 = vadd.f32 %v3919, 0.05243302
  %v3921 = vmul.f32 %v3914, %v3920
  %v3922 = vadd.f32 %v3921, 0.18741608
  %v3923 = vmul.f32 %v3914, %v3922
  %v3924 = vadd.f32 %v3923, 1.1283791
  %v3925 = vmul.f32 %v3897, %v3924
  %v3926 = vmul.f32 %v3914, 3.8918573e-05
  %v3927 = vadd.f32 %v3926, 0.001143296
  %v3928 = vmul.f32 %v3914, %v3927
  %v3929 = vadd.f32 %v3928, 0.014752088
  %v3930 = vmul.f32 %v3914, %v3929
  %v3931 = vadd.f32 %v3930, 0.112945676
  %v3932 = vmul.f32 %v3914, %v3931
  %v3933 = vadd.f32 %v3932, 0.4994258
  %v3934 = vmul.f32 %v3914, %v3933
  %v3935 = vadd.f32 %v3934, 1.0
  %v3936 = vrcp.pop %v3935
  %v3937 = vmul.f32 %v3935, %v3936
  %v3938 = vsub.f32 1.0, %v3937
  %v3939 = vmul.f32 %v3936, %v3938
  %v3940 = vadd.f32 %v3936, %v3939
  %vm3941 = vweird.f32 %v3935
  %vm3942 = vweird.f32 %v3936
  %vm3943 = vmor %vm3941, %vm3942
  %v3944 = vsel %vm3943, %v3936, %v3940
  %v3945 = vand.u32 2147483647, %v3935
  %vm3946 = vcmp.eq.f32.partialorder %v3945, 8.507059e+37
  %v3947 = vand.u32 %v3935, 2147483648
  %v3948 = vor.u32 1.1754944e-38, %v3947
  %v3949 = vsel %vm3946, %v3948, %v3944
  %v3950 = vmul.f32 %v3925, %v3949
  %v3951 = vmin.f32 %v3950, 1.0
  %v3952 = vmax.f32 %v3951, -1.0
  %v3953 = vmul.f32 %v3898, %v3898
  %v3954 = vmin.f32 16.0, %v3953
  %v3955 = vmul.f32 %v3954, 2.1237322e-06
  %v3956 = vadd.f32 %v3955, 0.00028619796
  %v3957 = vmul.f32 %v3954, %v3956
  %v3958 = vadd.f32 %v3957, 0.0036580483
  %v3959 = vmul.f32 %v3954, %v3958
  %v3960 = vadd.f32 %v3959, 0.05243302
  %v3961 = vmul.f32 %v3954, %v3960
  %v3962 = vadd.f32 %v3961, 0.18741608
  %v3963 = vmul.f32 %v3954, %v3962
  %v3964 = vadd.f32 %v3963, 1.1283791
  %v3965 = vmul.f32 %v3898, %v3964
  %v3966 = vmul.f32 %v3954, 3.8918573e-05
  %v3967 = vadd.f32 %v3966, 0.001143296
  %v3968 = vmul.f32 %v3954, %v3967
  %v3969 = vadd.f32 %v3968, 0.014752088
  %v3970 = vmul.f32 %v3954, %v3969
  %v3971 = vadd.f32 %v3970, 0.112945676
  %v3972 = vmul.f32 %v3954, %v3971
  %v3973 = vadd.f32 %v3972, 0.4994258
  %v3974 = vmul.f32 %v3954, %v3973
  %v3975 = vadd.f32 %v3974, 1.0
  %v3976 = vrcp.pop %v3975
  %v3977 = vmul.f32 %v3975, %v3976
  %v3978 = vsub.f32 1.0, %v3977
  %v3979 = vmul.f32 %v3976, %v3978
  %v3980 = vadd.f32 %v3976, %v3979
  %vm3981 = vweird.f32 %v3975
  %vm3982 = vweird.f32 %v3976
  %vm3983 = vmor %vm3981, %vm3982
  %v3984 = vsel %vm3983, %v3976, %v3980
  %v3985 = vand.u32 2147483647, %v3975
  %vm3986 = vcmp.eq.f32.partialorder %v3985, 8.507059e+37
  %v3987 = vand.u32 %v3975, 2147483648
  %v3988 = vor.u32 1.1754944e-38, %v3987
  %v3989 = vsel %vm3986, %v3988, %v3984
  %v3990 = vmul.f32 %v3965, %v3989
  %v3991 = vmin.f32 %v3990, 1.0
  %v3992 = vmax.f32 %v3991, -1.0
  %v3993 = vmul.f32 %v3899, %v3899
  %v3994 = vmin.f32 16.0, %v3993
  %v3995 = vmul.f32 %v3994, 2.1237322e-06
  %v3996 = vadd.f32 %v3995, 0.00028619796
  %v3997 = vmul.f32 %v3994, %v3996
  %v3998 = vadd.f32 %v3997, 0.0036580483
  %v3999 = vmul.f32 %v3994, %v3998
  %v4000 = vadd.f32 %v3999, 0.05243302
  %v4001 = vmul.f32 %v3994, %v4000
  %v4002 = vadd.f32 %v4001, 0.18741608
  %v4003 = vmul.f32 %v3994, %v4002
  %v4004 = vadd.f32 %v4003, 1.1283791
  %v4005 = vmul.f32 %v3899, %v4004
  %v4006 = vmul.f32 %v3994, 3.8918573e-05
  %v4007 = vadd.f32 %v4006, 0.001143296
  %v4008 = vmul.f32 %v3994, %v4007
  %v4009 = vadd.f32 %v4008, 0.014752088
  %v4010 = vmul.f32 %v3994, %v4009
  %v4011 = vadd.f32 %v4010, 0.112945676
  %v4012 = vmul.f32 %v3994, %v4011
  %v4013 = vadd.f32 %v4012, 0.4994258
  %v4014 = vmul.f32 %v3994, %v4013
  %v4015 = vadd.f32 %v4014, 1.0
  %v4016 = vrcp.pop %v4015
  %v4017 = vmul.f32 %v4015, %v4016
  %v4018 = vsub.f32 1.0, %v4017
  %v4019 = vmul.f32 %v4016, %v4018
  %v4020 = vadd.f32 %v4016, %v4019
  %vm4021 = vweird.f32 %v4015
  %vm4022 = vweird.f32 %v4016
  %vm4023 = vmor %vm4021, %vm4022
  %v4024 = vsel %vm4023, %v4016, %v4020
  %v4025 = vand.u32 2147483647, %v4015
  %vm4026 = vcmp.eq.f32.partialorder %v4025, 8.507059e+37
  %v4027 = vand.u32 %v4015, 2147483648
  %v4028 = vor.u32 1.1754944e-38, %v4027
  %v4029 = vsel %vm4026, %v4028, %v4024
  %v4030 = vmul.f32 %v4005, %v4029
  %v4031 = vmin.f32 %v4030, 1.0
  %v4032 = vmax.f32 %v4031, -1.0
  %v4033 = vmul.f32 %v3900, %v3900
  %v4034 = vmin.f32 16.0, %v4033
  %v4035 = vmul.f32 %v4034, 2.1237322e-06
  %v4036 = vadd.f32 %v4035, 0.00028619796
  %v4037 = vmul.f32 %v4034, %v4036
  %v4038 = vadd.f32 %v4037, 0.0036580483
  %v4039 = vmul.f32 %v4034, %v4038
  %v4040 = vadd.f32 %v4039, 0.05243302
  %v4041 = vmul.f32 %v4034, %v4040
  %v4042 = vadd.f32 %v4041, 0.18741608
  %v4043 = vmul.f32 %v4034, %v4042
  %v4044 = vadd.f32 %v4043, 1.1283791
  %v4045 = vmul.f32 %v3900, %v4044
  %v4046 = vmul.f32 %v4034, 3.8918573e-05
  %v4047 = vadd.f32 %v4046, 0.001143296
  %v4048 = vmul.f32 %v4034, %v4047
  %v4049 = vadd.f32 %v4048, 0.014752088
  %v4050 = vmul.f32 %v4034, %v4049
  %v4051 = vadd.f32 %v4050, 0.112945676
  %v4052 = vmul.f32 %v4034, %v4051
  %v4053 = vadd.f32 %v4052, 0.4994258
  %v4054 = vmul.f32 %v4034, %v4053
  %v4055 = vadd.f32 %v4054, 1.0
  %v4056 = vrcp.pop %v4055
  %v4057 = vmul.f32 %v4055, %v4056
  %v4058 = vsub.f32 1.0, %v4057
  %v4059 = vmul.f32 %v4056, %v4058
  %v4060 = vadd.f32 %v4056, %v4059
  %vm4061 = vweird.f32 %v4055
  %vm4062 = vweird.f32 %v4056
  %vm4063 = vmor %vm4061, %vm4062
  %v4064 = vsel %vm4063, %v4056, %v4060
  %v4065 = vand.u32 2147483647, %v4055
  %vm4066 = vcmp.eq.f32.partialorder %v4065, 8.507059e+37
  %v4067 = vand.u32 %v4055, 2147483648
  %v4068 = vor.u32 1.1754944e-38, %v4067
  %v4069 = vsel %vm4066, %v4068, %v4064
  %v4070 = vmul.f32 %v4045, %v4069
  %v4071 = vmin.f32 %v4070, 1.0
  %v4072 = vmax.f32 %v4071, -1.0
  %v4073 = vmul.f32 %v3901, %v3901
  %v4074 = vmin.f32 16.0, %v4073
  %v4075 = vmul.f32 %v4074, 2.1237322e-06
  %v4076 = vadd.f32 %v4075, 0.00028619796
  %v4077 = vmul.f32 %v4074, %v4076
  %v4078 = vadd.f32 %v4077, 0.0036580483
  %v4079 = vmul.f32 %v4074, %v4078
  %v4080 = vadd.f32 %v4079, 0.05243302
  %v4081 = vmul.f32 %v4074, %v4080
  %v4082 = vadd.f32 %v4081, 0.18741608
  %v4083 = vmul.f32 %v4074, %v4082
  %v4084 = vadd.f32 %v4083, 1.1283791
  %v4085 = vmul.f32 %v3901, %v4084
  %v4086 = vmul.f32 %v4074, 3.8918573e-05
  %v4087 = vadd.f32 %v4086, 0.001143296
  %v4088 = vmul.f32 %v4074, %v4087
  %v4089 = vadd.f32 %v4088, 0.014752088
  %v4090 = vmul.f32 %v4074, %v4089
  %v4091 = vadd.f32 %v4090, 0.112945676
  %v4092 = vmul.f32 %v4074, %v4091
  %v4093 = vadd.f32 %v4092, 0.4994258
  %v4094 = vmul.f32 %v4074, %v4093
  %v4095 = vadd.f32 %v4094, 1.0
  %v4096 = vrcp.pop %v4095
  %v4097 = vmul.f32 %v4095, %v4096
  %v4098 = vsub.f32 1.0, %v4097
  %v4099 = vmul.f32 %v4096, %v4098
  %v4100 = vadd.f32 %v4096, %v4099
  %vm4101 = vweird.f32 %v4095
  %vm4102 = vweird.f32 %v4096
  %vm4103 = vmor %vm4101, %vm4102
  %v4104 = vsel %vm4103, %v4096, %v4100
  %v4105 = vand.u32 2147483647, %v4095
  %vm4106 = vcmp.eq.f32.partialorder %v4105, 8.507059e+37
  %v4107 = vand.u32 %v4095, 2147483648
  %v4108 = vor.u32 1.1754944e-38, %v4107
  %v4109 = vsel %vm4106, %v4108, %v4104
  %v4110 = vmul.f32 %v4085, %v4109
  %v4111 = vmin.f32 %v4110, 1.0
  %v4112 = vmax.f32 %v4111, -1.0
  %v4113 = vmul.f32 %v3902, %v3902
  %v4114 = vmin.f32 16.0, %v4113
  %v4115 = vmul.f32 %v4114, 2.1237322e-06
  %v4116 = vadd.f32 %v4115, 0.00028619796
  %v4117 = vmul.f32 %v4114, %v4116
  %v4118 = vadd.f32 %v4117, 0.0036580483
  %v4119 = vmul.f32 %v4114, %v4118
  %v4120 = vadd.f32 %v4119, 0.05243302
  %v4121 = vmul.f32 %v4114, %v4120
  %v4122 = vadd.f32 %v4121, 0.18741608
  %v4123 = vmul.f32 %v4114, %v4122
  %v4124 = vadd.f32 %v4123, 1.1283791
  %v4125 = vmul.f32 %v3902, %v4124
  %v4126 = vmul.f32 %v4114, 3.8918573e-05
  %v4127 = vadd.f32 %v4126, 0.001143296
  %v4128 = vmul.f32 %v4114, %v4127
  %v4129 = vadd.f32 %v4128, 0.014752088
  %v4130 = vmul.f32 %v4114, %v4129
  %v4131 = vadd.f32 %v4130, 0.112945676
  %v4132 = vmul.f32 %v4114, %v4131
  %v4133 = vadd.f32 %v4132, 0.4994258
  %v4134 = vmul.f32 %v4114, %v4133
  %v4135 = vadd.f32 %v4134, 1.0
  %v4136 = vrcp.pop %v4135
  %v4137 = vmul.f32 %v4135, %v4136
  %v4138 = vsub.f32 1.0, %v4137
  %v4139 = vmul.f32 %v4136, %v4138
  %v4140 = vadd.f32 %v4136, %v4139
  %vm4141 = vweird.f32 %v4135
  %vm4142 = vweird.f32 %v4136
  %vm4143 = vmor %vm4141, %vm4142
  %v4144 = vsel %vm4143, %v4136, %v4140
  %v4145 = vand.u32 2147483647, %v4135
  %vm4146 = vcmp.eq.f32.partialorder %v4145, 8.507059e+37
  %v4147 = vand.u32 %v4135, 2147483648
  %v4148 = vor.u32 1.1754944e-38, %v4147
  %v4149 = vsel %vm4146, %v4148, %v4144
  %v4150 = vmul.f32 %v4125, %v4149
  %v4151 = vmin.f32 %v4150, 1.0
  %v4152 = vmax.f32 %v4151, -1.0
  %v4153 = vmul.f32 %v3903, %v3903
  %v4154 = vmin.f32 16.0, %v4153
  %v4155 = vmul.f32 %v4154, 2.1237322e-06
  %v4156 = vadd.f32 %v4155, 0.00028619796
  %v4157 = vmul.f32 %v4154, %v4156
  %v4158 = vadd.f32 %v4157, 0.0036580483
  %v4159 = vmul.f32 %v4154, %v4158
  %v4160 = vadd.f32 %v4159, 0.05243302
  %v4161 = vmul.f32 %v4154, %v4160
  %v4162 = vadd.f32 %v4161, 0.18741608
  %v4163 = vmul.f32 %v4154, %v4162
  %v4164 = vadd.f32 %v4163, 1.1283791
  %v4165 = vmul.f32 %v3903, %v4164
  %v4166 = vmul.f32 %v4154, 3.8918573e-05
  %v4167 = vadd.f32 %v4166, 0.001143296
  %v4168 = vmul.f32 %v4154, %v4167
  %v4169 = vadd.f32 %v4168, 0.014752088
  %v4170 = vmul.f32 %v4154, %v4169
  %v4171 = vadd.f32 %v4170, 0.112945676
  %v4172 = vmul.f32 %v4154, %v4171
  %v4173 = vadd.f32 %v4172, 0.4994258
  %v4174 = vmul.f32 %v4154, %v4173
  %v4175 = vadd.f32 %v4174, 1.0
  %v4176 = vrcp.pop %v4175
  %v4177 = vmul.f32 %v4175, %v4176
  %v4178 = vsub.f32 1.0, %v4177
  %v4179 = vmul.f32 %v4176, %v4178
  %v4180 = vadd.f32 %v4176, %v4179
  %vm4181 = vweird.f32 %v4175
  %vm4182 = vweird.f32 %v4176
  %vm4183 = vmor %vm4181, %vm4182
  %v4184 = vsel %vm4183, %v4176, %v4180
  %v4185 = vand.u32 2147483647, %v4175
  %vm4186 = vcmp.eq.f32.partialorder %v4185, 8.507059e+37
  %v4187 = vand.u32 %v4175, 2147483648
  %v4188 = vor.u32 1.1754944e-38, %v4187
  %v4189 = vsel %vm4186, %v4188, %v4184
  %v4190 = vmul.f32 %v4165, %v4189
  %v4191 = vmin.f32 %v4190, 1.0
  %v4192 = vmax.f32 %v4191, -1.0
  %v4193 = vmul.f32 %v3904, %v3904
  %v4194 = vmin.f32 16.0, %v4193
  %v4195 = vmul.f32 %v4194, 2.1237322e-06
  %v4196 = vadd.f32 %v4195, 0.00028619796
  %v4197 = vmul.f32 %v4194, %v4196
  %v4198 = vadd.f32 %v4197, 0.0036580483
  %v4199 = vmul.f32 %v4194, %v4198
  %v4200 = vadd.f32 %v4199, 0.05243302
  %v4201 = vmul.f32 %v4194, %v4200
  %v4202 = vadd.f32 %v4201, 0.18741608
  %v4203 = vmul.f32 %v4194, %v4202
  %v4204 = vadd.f32 %v4203, 1.1283791
  %v4205 = vmul.f32 %v3904, %v4204
  %v4206 = vmul.f32 %v4194, 3.8918573e-05
  %v4207 = vadd.f32 %v4206, 0.001143296
  %v4208 = vmul.f32 %v4194, %v4207
  %v4209 = vadd.f32 %v4208, 0.014752088
  %v4210 = vmul.f32 %v4194, %v4209
  %v4211 = vadd.f32 %v4210, 0.112945676
  %v4212 = vmul.f32 %v4194, %v4211
  %v4213 = vadd.f32 %v4212, 0.4994258
  %v4214 = vmul.f32 %v4194, %v4213
  %v4215 = vadd.f32 %v4214, 1.0
  %v4216 = vrcp.pop %v4215
  %v4217 = vmul.f32 %v4215, %v4216
  %v4218 = vsub.f32 1.0, %v4217
  %v4219 = vmul.f32 %v4216, %v4218
  %v4220 = vadd.f32 %v4216, %v4219
  %vm4221 = vweird.f32 %v4215
  %vm4222 = vweird.f32 %v4216
  %vm4223 = vmor %vm4221, %vm4222
  %v4224 = vsel %vm4223, %v4216, %v4220
  %v4225 = vand.u32 2147483647, %v4215
  %vm4226 = vcmp.eq.f32.partialorder %v4225, 8.507059e+37
  %v4227 = vand.u32 %v4215, 2147483648
  %v4228 = vor.u32 1.1754944e-38, %v4227
  %v4229 = vsel %vm4226, %v4228, %v4224
  %v4230 = vmul.f32 %v4205, %v4229
  %v4231 = vmin.f32 %v4230, 1.0
  %v4232 = vmax.f32 %v4231, -1.0
  %v4233 = vmul.f32 %v3905, %v3905
  %v4234 = vmin.f32 16.0, %v4233
  %v4235 = vmul.f32 %v4234, 2.1237322e-06
  %v4236 = vadd.f32 %v4235, 0.00028619796
  %v4237 = vmul.f32 %v4234, %v4236
  %v4238 = vadd.f32 %v4237, 0.0036580483
  %v4239 = vmul.f32 %v4234, %v4238
  %v4240 = vadd.f32 %v4239, 0.05243302
  %v4241 = vmul.f32 %v4234, %v4240
  %v4242 = vadd.f32 %v4241, 0.18741608
  %v4243 = vmul.f32 %v4234, %v4242
  %v4244 = vadd.f32 %v4243, 1.1283791
  %v4245 = vmul.f32 %v3905, %v4244
  %v4246 = vmul.f32 %v4234, 3.8918573e-05
  %v4247 = vadd.f32 %v4246, 0.001143296
  %v4248 = vmul.f32 %v4234, %v4247
  %v4249 = vadd.f32 %v4248, 0.014752088
  %v4250 = vmul.f32 %v4234, %v4249
  %v4251 = vadd.f32 %v4250, 0.112945676
  %v4252 = vmul.f32 %v4234, %v4251
  %v4253 = vadd.f32 %v4252, 0.4994258
  %v4254 = vmul.f32 %v4234, %v4253
  %v4255 = vadd.f32 %v4254, 1.0
  %v4256 = vrcp.pop %v4255
  %v4257 = vmul.f32 %v4255, %v4256
  %v4258 = vsub.f32 1.0, %v4257
  %v4259 = vmul.f32 %v4256, %v4258
  %v4260 = vadd.f32 %v4256, %v4259
  %vm4261 = vweird.f32 %v4255
  %vm4262 = vweird.f32 %v4256
  %vm4263 = vmor %vm4261, %vm4262
  %v4264 = vsel %vm4263, %v4256, %v4260
  %v4265 = vand.u32 2147483647, %v4255
  %vm4266 = vcmp.eq.f32.partialorder %v4265, 8.507059e+37
  %v4267 = vand.u32 %v4255, 2147483648
  %v4268 = vor.u32 1.1754944e-38, %v4267
  %v4269 = vsel %vm4266, %v4268, %v4264
  %v4270 = vmul.f32 %v4245, %v4269
  %v4271 = vmin.f32 %v4270, 1.0
  %v4272 = vmax.f32 %v4271, -1.0
  %v4273 = vmul.f32 %v3906, %v3906
  %v4274 = vmin.f32 16.0, %v4273
  %v4275 = vmul.f32 %v4274, 2.1237322e-06
  %v4276 = vadd.f32 %v4275, 0.00028619796
  %v4277 = vmul.f32 %v4274, %v4276
  %v4278 = vadd.f32 %v4277, 0.0036580483
  %v4279 = vmul.f32 %v4274, %v4278
  %v4280 = vadd.f32 %v4279, 0.05243302
  %v4281 = vmul.f32 %v4274, %v4280
  %v4282 = vadd.f32 %v4281, 0.18741608
  %v4283 = vmul.f32 %v4274, %v4282
  %v4284 = vadd.f32 %v4283, 1.1283791
  %v4285 = vmul.f32 %v3906, %v4284
  %v4286 = vmul.f32 %v4274, 3.8918573e-05
  %v4287 = vadd.f32 %v4286, 0.001143296
  %v4288 = vmul.f32 %v4274, %v4287
  %v4289 = vadd.f32 %v4288, 0.014752088
  %v4290 = vmul.f32 %v4274, %v4289
  %v4291 = vadd.f32 %v4290, 0.112945676
  %v4292 = vmul.f32 %v4274, %v4291
  %v4293 = vadd.f32 %v4292, 0.4994258
  %v4294 = vmul.f32 %v4274, %v4293
  %v4295 = vadd.f32 %v4294, 1.0
  %v4296 = vrcp.pop %v4295
  %v4297 = vmul.f32 %v4295, %v4296
  %v4298 = vsub.f32 1.0, %v4297
  %v4299 = vmul.f32 %v4296, %v4298
  %v4300 = vadd.f32 %v4296, %v4299
  %vm4301 = vweird.f32 %v4295
  %vm4302 = vweird.f32 %v4296
  %vm4303 = vmor %vm4301, %vm4302
  %v4304 = vsel %vm4303, %v4296, %v4300
  %v4305 = vand.u32 2147483647, %v4295
  %vm4306 = vcmp.eq.f32.partialorder %v4305, 8.507059e+37
  %v4307 = vand.u32 %v4295, 2147483648
  %v4308 = vor.u32 1.1754944e-38, %v4307
  %v4309 = vsel %vm4306, %v4308, %v4304
  %v4310 = vmul.f32 %v4285, %v4309
  %v4311 = vmin.f32 %v4310, 1.0
  %v4312 = vmax.f32 %v4311, -1.0
  %v4313 = vmul.f32 %v3907, %v3907
  %v4314 = vmin.f32 16.0, %v4313
  %v4315 = vmul.f32 %v4314, 2.1237322e-06
  %v4316 = vadd.f32 %v4315, 0.00028619796
  %v4317 = vmul.f32 %v4314, %v4316
  %v4318 = vadd.f32 %v4317, 0.0036580483
  %v4319 = vmul.f32 %v4314, %v4318
  %v4320 = vadd.f32 %v4319, 0.05243302
  %v4321 = vmul.f32 %v4314, %v4320
  %v4322 = vadd.f32 %v4321, 0.18741608
  %v4323 = vmul.f32 %v4314, %v4322
  %v4324 = vadd.f32 %v4323, 1.1283791
  %v4325 = vmul.f32 %v3907, %v4324
  %v4326 = vmul.f32 %v4314, 3.8918573e-05
  %v4327 = vadd.f32 %v4326, 0.001143296
  %v4328 = vmul.f32 %v4314, %v4327
  %v4329 = vadd.f32 %v4328, 0.014752088
  %v4330 = vmul.f32 %v4314, %v4329
  %v4331 = vadd.f32 %v4330, 0.112945676
  %v4332 = vmul.f32 %v4314, %v4331
  %v4333 = vadd.f32 %v4332, 0.4994258
  %v4334 = vmul.f32 %v4314, %v4333
  %v4335 = vadd.f32 %v4334, 1.0
  %v4336 = vrcp.pop %v4335
  %v4337 = vmul.f32 %v4335, %v4336
  %v4338 = vsub.f32 1.0, %v4337
  %v4339 = vmul.f32 %v4336, %v4338
  %v4340 = vadd.f32 %v4336, %v4339
  %vm4341 = vweird.f32 %v4335
  %vm4342 = vweird.f32 %v4336
  %vm4343 = vmor %vm4341, %vm4342
  %v4344 = vsel %vm4343, %v4336, %v4340
  %v4345 = vand.u32 2147483647, %v4335
  %vm4346 = vcmp.eq.f32.partialorder %v4345, 8.507059e+37
  %v4347 = vand.u32 %v4335, 2147483648
  %v4348 = vor.u32 1.1754944e-38, %v4347
  %v4349 = vsel %vm4346, %v4348, %v4344
  %v4350 = vmul.f32 %v4325, %v4349
  %v4351 = vmin.f32 %v4350, 1.0
  %v4352 = vmax.f32 %v4351, -1.0
  %v4353 = vmul.f32 %v3908, %v3908
  %v4354 = vmin.f32 16.0, %v4353
  %v4355 = vmul.f32 %v4354, 2.1237322e-06
  %v4356 = vadd.f32 %v4355, 0.00028619796
  %v4357 = vmul.f32 %v4354, %v4356
  %v4358 = vadd.f32 %v4357, 0.0036580483
  %v4359 = vmul.f32 %v4354, %v4358
  %v4360 = vadd.f32 %v4359, 0.05243302
  %v4361 = vmul.f32 %v4354, %v4360
  %v4362 = vadd.f32 %v4361, 0.18741608
  %v4363 = vmul.f32 %v4354, %v4362
  %v4364 = vadd.f32 %v4363, 1.1283791
  %v4365 = vmul.f32 %v3908, %v4364
  %v4366 = vmul.f32 %v4354, 3.8918573e-05
  %v4367 = vadd.f32 %v4366, 0.001143296
  %v4368 = vmul.f32 %v4354, %v4367
  %v4369 = vadd.f32 %v4368, 0.014752088
  %v4370 = vmul.f32 %v4354, %v4369
  %v4371 = vadd.f32 %v4370, 0.112945676
  %v4372 = vmul.f32 %v4354, %v4371
  %v4373 = vadd.f32 %v4372, 0.4994258
  %v4374 = vmul.f32 %v4354, %v4373
  %v4375 = vadd.f32 %v4374, 1.0
  %v4376 = vrcp.pop %v4375
  %v4377 = vmul.f32 %v4375, %v4376
  %v4378 = vsub.f32 1.0, %v4377
  %v4379 = vmul.f32 %v4376, %v4378
  %v4380 = vadd.f32 %v4376, %v4379
  %vm4381 = vweird.f32 %v4375
  %vm4382 = vweird.f32 %v4376
  %vm4383 = vmor %vm4381, %vm4382
  %v4384 = vsel %vm4383, %v4376, %v4380
  %v4385 = vand.u32 2147483647, %v4375
  %vm4386 = vcmp.eq.f32.partialorder %v4385, 8.507059e+37
  %v4387 = vand.u32 %v4375, 2147483648
  %v4388 = vor.u32 1.1754944e-38, %v4387
  %v4389 = vsel %vm4386, %v4388, %v4384
  %v4390 = vmul.f32 %v4365, %v4389
  %v4391 = vmin.f32 %v4390, 1.0
  %v4392 = vmax.f32 %v4391, -1.0
  %v4393 = vmul.f32 %v3909, %v3909
  %v4394 = vmin.f32 16.0, %v4393
  %v4395 = vmul.f32 %v4394, 2.1237322e-06
  %v4396 = vadd.f32 %v4395, 0.00028619796
  %v4397 = vmul.f32 %v4394, %v4396
  %v4398 = vadd.f32 %v4397, 0.0036580483
  %v4399 = vmul.f32 %v4394, %v4398
  %v4400 = vadd.f32 %v4399, 0.05243302
  %v4401 = vmul.f32 %v4394, %v4400
  %v4402 = vadd.f32 %v4401, 0.18741608
  %v4403 = vmul.f32 %v4394, %v4402
  %v4404 = vadd.f32 %v4403, 1.1283791
  %v4405 = vmul.f32 %v3909, %v4404
  %v4406 = vmul.f32 %v4394, 3.8918573e-05
  %v4407 = vadd.f32 %v4406, 0.001143296
  %v4408 = vmul.f32 %v4394, %v4407
  %v4409 = vadd.f32 %v4408, 0.014752088
  %v4410 = vmul.f32 %v4394, %v4409
  %v4411 = vadd.f32 %v4410, 0.112945676
  %v4412 = vmul.f32 %v4394, %v4411
  %v4413 = vadd.f32 %v4412, 0.4994258
  %v4414 = vmul.f32 %v4394, %v4413
  %v4415 = vadd.f32 %v4414, 1.0
  %v4416 = vrcp.pop %v4415
  %v4417 = vmul.f32 %v4415, %v4416
  %v4418 = vsub.f32 1.0, %v4417
  %v4419 = vmul.f32 %v4416, %v4418
  %v4420 = vadd.f32 %v4416, %v4419
  %vm4421 = vweird.f32 %v4415
  %vm4422 = vweird.f32 %v4416
  %vm4423 = vmor %vm4421, %vm4422
  %v4424 = vsel %vm4423, %v4416, %v4420
  %v4425 = vand.u32 2147483647, %v4415
  %vm4426 = vcmp.eq.f32.partialorder %v4425, 8.507059e+37
  %v4427 = vand.u32 %v4415, 2147483648
  %v4428 = vor.u32 1.1754944e-38, %v4427
  %v4429 = vsel %vm4426, %v4428, %v4424
  %v4430 = vmul.f32 %v4405, %v4429
  %v4431 = vmin.f32 %v4430, 1.0
  %v4432 = vmax.f32 %v4431, -1.0
  %v4433 = vmul.f32 %v3910, %v3910
  %v4434 = vmin.f32 16.0, %v4433
  %v4435 = vmul.f32 %v4434, 2.1237322e-06
  %v4436 = vadd.f32 %v4435, 0.00028619796
  %v4437 = vmul.f32 %v4434, %v4436
  %v4438 = vadd.f32 %v4437, 0.0036580483
  %v4439 = vmul.f32 %v4434, %v4438
  %v4440 = vadd.f32 %v4439, 0.05243302
  %v4441 = vmul.f32 %v4434, %v4440
  %v4442 = vadd.f32 %v4441, 0.18741608
  %v4443 = vmul.f32 %v4434, %v4442
  %v4444 = vadd.f32 %v4443, 1.1283791
  %v4445 = vmul.f32 %v3910, %v4444
  %v4446 = vmul.f32 %v4434, 3.8918573e-05
  %v4447 = vadd.f32 %v4446, 0.001143296
  %v4448 = vmul.f32 %v4434, %v4447
  %v4449 = vadd.f32 %v4448, 0.014752088
  %v4450 = vmul.f32 %v4434, %v4449
  %v4451 = vadd.f32 %v4450, 0.112945676
  %v4452 = vmul.f32 %v4434, %v4451
  %v4453 = vadd.f32 %v4452, 0.4994258
  %v4454 = vmul.f32 %v4434, %v4453
  %v4455 = vadd.f32 %v4454, 1.0
  %v4456 = vrcp.pop %v4455
  %v4457 = vmul.f32 %v4455, %v4456
  %v4458 = vsub.f32 1.0, %v4457
  %v4459 = vmul.f32 %v4456, %v4458
  %v4460 = vadd.f32 %v4456, %v4459
  %vm4461 = vweird.f32 %v4455
  %vm4462 = vweird.f32 %v4456
  %vm4463 = vmor %vm4461, %vm4462
  %v4464 = vsel %vm4463, %v4456, %v4460
  %v4465 = vand.u32 2147483647, %v4455
  %vm4466 = vcmp.eq.f32.partialorder %v4465, 8.507059e+37
  %v4467 = vand.u32 %v4455, 2147483648
  %v4468 = vor.u32 1.1754944e-38, %v4467
  %v4469 = vsel %vm4466, %v4468, %v4464
  %v4470 = vmul.f32 %v4445, %v4469
  %v4471 = vmin.f32 %v4470, 1.0
  %v4472 = vmax.f32 %v4471, -1.0
  %v4473 = vmul.f32 %v3911, %v3911
  %v4474 = vmin.f32 16.0, %v4473
  %v4475 = vmul.f32 %v4474, 2.1237322e-06
  %v4476 = vadd.f32 %v4475, 0.00028619796
  %v4477 = vmul.f32 %v4474, %v4476
  %v4478 = vadd.f32 %v4477, 0.0036580483
  %v4479 = vmul.f32 %v4474, %v4478
  %v4480 = vadd.f32 %v4479, 0.05243302
  %v4481 = vmul.f32 %v4474, %v4480
  %v4482 = vadd.f32 %v4481, 0.18741608
  %v4483 = vmul.f32 %v4474, %v4482
  %v4484 = vadd.f32 %v4483, 1.1283791
  %v4485 = vmul.f32 %v3911, %v4484
  %v4486 = vmul.f32 %v4474, 3.8918573e-05
  %v4487 = vadd.f32 %v4486, 0.001143296
  %v4488 = vmul.f32 %v4474, %v4487
  %v4489 = vadd.f32 %v4488, 0.014752088
  %v4490 = vmul.f32 %v4474, %v4489
  %v4491 = vadd.f32 %v4490, 0.112945676
  %v4492 = vmul.f32 %v4474, %v4491
  %v4493 = vadd.f32 %v4492, 0.4994258
  %v4494 = vmul.f32 %v4474, %v4493
  %v4495 = vadd.f32 %v4494, 1.0
  %v4496 = vrcp.pop %v4495
  %v4497 = vmul.f32 %v4495, %v4496
  %v4498 = vsub.f32 1.0, %v4497
  %v4499 = vmul.f32 %v4496, %v4498
  %v4500 = vadd.f32 %v4496, %v4499
  %vm4501 = vweird.f32 %v4495
  %vm4502 = vweird.f32 %v4496
  %vm4503 = vmor %vm4501, %vm4502
  %v4504 = vsel %vm4503, %v4496, %v4500
  %v4505 = vand.u32 2147483647, %v4495
  %vm4506 = vcmp.eq.f32.partialorder %v4505, 8.507059e+37
  %v4507 = vand.u32 %v4495, 2147483648
  %v4508 = vor.u32 1.1754944e-38, %v4507
  %v4509 = vsel %vm4506, %v4508, %v4504
  %v4510 = vmul.f32 %v4485, %v4509
  %v4511 = vmin.f32 %v4510, 1.0
  %v4512 = vmax.f32 %v4511, -1.0
  %v4513 = vmul.f32 %v3912, %v3912
  %v4514 = vmin.f32 16.0, %v4513
  %v4515 = vmul.f32 %v4514, 2.1237322e-06
  %v4516 = vadd.f32 %v4515, 0.00028619796
  %v4517 = vmul.f32 %v4514, %v4516
  %v4518 = vadd.f32 %v4517, 0.0036580483
  %v4519 = vmul.f32 %v4514, %v4518
  %v4520 = vadd.f32 %v4519, 0.05243302
  %v4521 = vmul.f32 %v4514, %v4520
  %v4522 = vadd.f32 %v4521, 0.18741608
  %v4523 = vmul.f32 %v4514, %v4522
  %v4524 = vadd.f32 %v4523, 1.1283791
  %v4525 = vmul.f32 %v3912, %v4524
  %v4526 = vmul.f32 %v4514, 3.8918573e-05
  %v4527 = vadd.f32 %v4526, 0.001143296
  %v4528 = vmul.f32 %v4514, %v4527
  %v4529 = vadd.f32 %v4528, 0.014752088
  %v4530 = vmul.f32 %v4514, %v4529
  %v4531 = vadd.f32 %v4530, 0.112945676
  %v4532 = vmul.f32 %v4514, %v4531
  %v4533 = vadd.f32 %v4532, 0.4994258
  %v4534 = vmul.f32 %v4514, %v4533
  %v4535 = vadd.f32 %v4534, 1.0
  %v4536 = vrcp.pop %v4535
  %v4537 = vmul.f32 %v4535, %v4536
  %v4538 = vsub.f32 1.0, %v4537
  %v4539 = vmul.f32 %v4536, %v4538
  %v4540 = vadd.f32 %v4536, %v4539
  %vm4541 = vweird.f32 %v4535
  %vm4542 = vweird.f32 %v4536
  %vm4543 = vmor %vm4541, %vm4542
  %v4544 = vsel %vm4543, %v4536, %v4540
  %v4545 = vand.u32 2147483647, %v4535
  %vm4546 = vcmp.eq.f32.partialorder %v4545, 8.507059e+37
  %v4547 = vand.u32 %v4535, 2147483648
  %v4548 = vor.u32 1.1754944e-38, %v4547
  %v4549 = vsel %vm4546, %v4548, %v4544
  %v4550 = vmul.f32 %v4525, %v4549
  %v4551 = vmin.f32 %v4550, 1.0
  %v4552 = vmax.f32 %v4551, -1.0
  %v4553 = vadd.f32 %v3952, 1.0
  %v4554 = vadd.f32 %v3992, 1.0
  %v4555 = vadd.f32 %v4032, 1.0
  %v4556 = vadd.f32 %v4072, 1.0
  %v4557 = vadd.f32 %v4112, 1.0
  %v4558 = vadd.f32 %v4152, 1.0
  %v4559 = vadd.f32 %v4192, 1.0
  %v4560 = vadd.f32 %v4232, 1.0
  %v4561 = vadd.f32 %v4272, 1.0
  %v4562 = vadd.f32 %v4312, 1.0
  %v4563 = vadd.f32 %v4352, 1.0
  %v4564 = vadd.f32 %v4392, 1.0
  %v4565 = vadd.f32 %v4432, 1.0
  %v4566 = vadd.f32 %v4472, 1.0
  %v4567 = vadd.f32 %v4512, 1.0
  %v4568 = vadd.f32 %v4552, 1.0
  %v4569 = vmul.f32 %v3881, %v4553
  %v4570 = vmul.f32 %v3882, %v4554
  %v4571 = vmul.f32 %v3883, %v4555
  %v4572 = vmul.f32 %v3884, %v4556
  %v4573 = vmul.f32 %v3885, %v4557
  %v4574 = vmul.f32 %v3886, %v4558
  %v4575 = vmul.f32 %v3887, %v4559
  %v4576 = vmul.f32 %v3888, %v4560
  %v4577 = vmul.f32 %v3889, %v4561
  %v4578 = vmul.f32 %v3890, %v4562
  %v4579 = vmul.f32 %v3891, %v4563
  %v4580 = vmul.f32 %v3892, %v4564
  %v4581 = vmul.f32 %v3893, %v4565
  %v4582 = vmul.f32 %v3894, %v4566
  %v4583 = vmul.f32 %v3895, %v4567
  %v4584 = vmul.f32 %v3896, %v4568
  %v4586 = vsel %vm68, %v4569, 0
  %v4589 = vsel %vm68, %v4570, 0
  %v4592 = vsel %vm68, %v4571, 0
  %v4595 = vsel %vm68, %v4572, 0
  %v4598 = vsel %vm68, %v4573, 0
  %v4601 = vsel %vm68, %v4574, 0
  %v4604 = vsel %vm68, %v4575, 0
  %v4607 = vsel %vm68, %v4576, 0
  %v4610 = vsel %vm68, %v4577, 0
  %v4613 = vsel %vm68, %v4578, 0
  %v4616 = vsel %vm68, %v4579, 0
  %v4619 = vsel %vm68, %v4580, 0
  %v4622 = vsel %vm68, %v4581, 0
  %v4625 = vsel %vm68, %v4582, 0
  %v4628 = vsel %vm68, %v4583, 0
  %v4631 = vsel %vm68, %v4584, 0
  %4633 = vmatpush.msra.mxu0 0.0
  %4634 = vmatpush.msra.mxu0 0.0
  %4635 = vmatpush.msra.mxu0 0.0
  %4636 = vmatpush.msra.mxu0 0.0
  %4637 = vmatpush.msra.mxu0 0.0
  %4638 = vmatpush.msra.mxu0 0.0
  %4639 = vmatpush.msra.mxu0 0.0
  %4640 = vmatpush.msra.mxu0 0.0
  %4641 = vmatpush.msra.mxu0 0.0
  %4642 = vmatpush.msra.mxu0 0.0
  %4643 = vmatpush.msra.mxu0 0.0
  %4644 = vmatpush.msra.mxu0 0.0
  %4645 = vmatpush.msra.mxu0 %v3763
  %4646 = vmatpush.msra.mxu0 %v3762
  %4647 = vmatpush.msra.mxu0 %v3761
  %4648 = vmatpush.msra.mxu0 %v3760
  %4649 = vmatmul.f32.gmra.mxu0 %v4586
  %v4650 = vpop.f32.mrf.mxu0
  %v4651 = vadd.f32 %v3766, %v4650
  %4652 = vmatmul.f32.gmra.mxu0 %v4589
  %v4653 = vpop.f32.mrf.mxu0
  %v4654 = vadd.f32 %v3766, %v4653
  %4655 = vmatmul.f32.gmra.mxu0 %v4592
  %v4656 = vpop.f32.mrf.mxu0
  %v4657 = vadd.f32 %v3766, %v4656
  %4658 = vmatmul.f32.gmra.mxu0 %v4595
  %v4659 = vpop.f32.mrf.mxu0
  %v4660 = vadd.f32 %v3766, %v4659
  %4661 = vmatmul.f32.gmra.mxu0 %v4598
  %v4662 = vpop.f32.mrf.mxu0
  %v4663 = vadd.f32 %v3766, %v4662
  %4664 = vmatmul.f32.gmra.mxu0 %v4601
  %v4665 = vpop.f32.mrf.mxu0
  %v4666 = vadd.f32 %v3766, %v4665
  %4667 = vmatmul.f32.gmra.mxu0 %v4604
  %v4668 = vpop.f32.mrf.mxu0
  %v4669 = vadd.f32 %v3766, %v4668
  %4670 = vmatmul.f32.gmra.mxu0 %v4607
  %v4671 = vpop.f32.mrf.mxu0
  %v4672 = vadd.f32 %v3766, %v4671
  %4673 = vmatmul.f32.gmra.mxu0 %v4610
  %v4674 = vpop.f32.mrf.mxu0
  %v4675 = vadd.f32 %v3766, %v4674
  %4676 = vmatmul.f32.gmra.mxu0 %v4613
  %v4677 = vpop.f32.mrf.mxu0
  %v4678 = vadd.f32 %v3766, %v4677
  %4679 = vmatmul.f32.gmra.mxu0 %v4616
  %v4680 = vpop.f32.mrf.mxu0
  %v4681 = vadd.f32 %v3766, %v4680
  %4682 = vmatmul.f32.gmra.mxu0 %v4619
  %v4683 = vpop.f32.mrf.mxu0
  %v4684 = vadd.f32 %v3766, %v4683
  %4685 = vmatmul.f32.gmra.mxu0 %v4622
  %v4686 = vpop.f32.mrf.mxu0
  %v4687 = vadd.f32 %v3766, %v4686
  %4688 = vmatmul.f32.gmra.mxu0 %v4625
  %v4689 = vpop.f32.mrf.mxu0
  %v4690 = vadd.f32 %v3766, %v4689
  %4691 = vmatmul.f32.gmra.mxu0 %v4628
  %v4692 = vpop.f32.mrf.mxu0
  %v4693 = vadd.f32 %v3766, %v4692
  %4694 = vmatmul.f32.gmra.mxu0 %v4631
  %v4695 = vpop.f32.mrf.mxu0
  %v4696 = vadd.f32 %v3766, %v4695
  %4697 = vdwg.mxu0
  %v4698 = vadd.f32 %v4651, %v3328
  %v4699 = vadd.f32 %v4654, %v3329
  %v4700 = vadd.f32 %v4657, %v3330
  %v4701 = vadd.f32 %v4660, %v3331
  %v4702 = vadd.f32 %v4663, %v3332
  %v4703 = vadd.f32 %v4666, %v3333
  %v4704 = vadd.f32 %v4669, %v3334
  %v4705 = vadd.f32 %v4672, %v3335
  %v4706 = vadd.f32 %v4675, %v3336
  %v4707 = vadd.f32 %v4678, %v3337
  %v4708 = vadd.f32 %v4681, %v3338
  %v4709 = vadd.f32 %v4684, %v3339
  %v4710 = vadd.f32 %v4687, %v3340
  %v4711 = vadd.f32 %v4690, %v3341
  %v4712 = vadd.f32 %v4693, %v3342
  %v4713 = vadd.f32 %v4696, %v3343
  %4714 = vxpose.xlu0.b32.start [1/16] %v4698, 128
  %4715 = vxpose.xlu0.b32.cont [2/16] %v4699, 128
  %4716 = vxpose.xlu0.b32.cont [3/16] %v4700, 128
  %4717 = vxpose.xlu0.b32.cont [4/16] %v4701, 128
  %4718 = vxpose.xlu0.b32.cont [5/16] %v4702, 128
  %4719 = vxpose.xlu0.b32.cont [6/16] %v4703, 128
  %4720 = vxpose.xlu0.b32.cont [7/16] %v4704, 128
  %4721 = vxpose.xlu0.b32.cont [8/16] %v4705, 128
  %4722 = vxpose.xlu0.b32.cont [9/16] 0.0, 128
  %4723 = vxpose.xlu0.b32.cont [10/16] 0.0, 128
  %4724 = vxpose.xlu0.b32.cont [11/16] 0.0, 128
  %4725 = vxpose.xlu0.b32.cont [12/16] 0.0, 128
  %4726 = vxpose.xlu0.b32.cont [13/16] 0.0, 128
  %4727 = vxpose.xlu0.b32.cont [14/16] 0.0, 128
  %4728 = vxpose.xlu0.b32.cont [15/16] 0.0, 128
  %4729 = vxpose.xlu0.b32.end [16/16] 0.0, 128
  %v4730 = vpop.trf.xlu0
  %v4731 = vpop.trf.xlu0
  %v4732 = vpop.trf.xlu0
  %v4733 = vpop.trf.xlu0
  %v4734 = vpop.trf.xlu0
  %v4735 = vpop.trf.xlu0
  %v4736 = vpop.trf.xlu0
  %v4737 = vpop.trf.xlu0
  %v4738 = vpop.trf.xlu0
  %v4739 = vpop.trf.xlu0
  %v4740 = vpop.trf.xlu0
  %v4741 = vpop.trf.xlu0
  %v4742 = vpop.trf.xlu0
  %v4743 = vpop.trf.xlu0
  %v4744 = vpop.trf.xlu0
  %v4745 = vpop.trf.xlu0
  %4746 = vst.msk [vmem:[%s9] sm:$0xff] %vm788, %v4730
  %4747 = vst.msk [vmem:[%s9 + $0x8] sm:$0xff] %vm788, %v4731
  %4748 = vst.msk [vmem:[%s9 + $0x10] sm:$0xff] %vm788, %v4732
  %4749 = vst.msk [vmem:[%s9 + $0x18] sm:$0xff] %vm788, %v4733
  %4750 = vxpose.xlu0.b32.start [1/16] %v4706, 128
  %4751 = vxpose.xlu0.b32.cont [2/16] %v4707, 128
  %4752 = vxpose.xlu0.b32.cont [3/16] %v4708, 128
  %4753 = vxpose.xlu0.b32.cont [4/16] %v4709, 128
  %4754 = vxpose.xlu0.b32.cont [5/16] %v4710, 128
  %4755 = vxpose.xlu0.b32.cont [6/16] %v4711, 128
  %4756 = vxpose.xlu0.b32.cont [7/16] %v4712, 128
  %4757 = vxpose.xlu0.b32.cont [8/16] %v4713, 128
  %4758 = vxpose.xlu0.b32.cont [9/16] 0.0, 128
  %4759 = vxpose.xlu0.b32.cont [10/16] 0.0, 128
  %4760 = vxpose.xlu0.b32.cont [11/16] 0.0, 128
  %4761 = vxpose.xlu0.b32.cont [12/16] 0.0, 128
  %4762 = vxpose.xlu0.b32.cont [13/16] 0.0, 128
  %4763 = vxpose.xlu0.b32.cont [14/16] 0.0, 128
  %4764 = vxpose.xlu0.b32.cont [15/16] 0.0, 128
  %4765 = vxpose.xlu0.b32.end [16/16] 0.0, 128
  %v4766 = vpop.trf.xlu0
  %v4767 = vpop.trf.xlu0
  %v4768 = vpop.trf.xlu0
  %v4769 = vpop.trf.xlu0
  %v4770 = vpop.trf.xlu0
  %v4771 = vpop.trf.xlu0
  %v4772 = vpop.trf.xlu0
  %v4773 = vpop.trf.xlu0
  %v4774 = vpop.trf.xlu0
  %v4775 = vpop.trf.xlu0
  %v4776 = vpop.trf.xlu0
  %v4777 = vpop.trf.xlu0
  %v4778 = vpop.trf.xlu0
  %v4779 = vpop.trf.xlu0
  %v4780 = vpop.trf.xlu0
  %v4781 = vpop.trf.xlu0
  %s4782 = scalar_lea.vmem %s9, 32
  %4783 = vst.msk [vmem:[%s4782] sm:$0xff] %vm788, %v4766
  %4784 = vst.msk [vmem:[%s4782 + $0x8] sm:$0xff] %vm788, %v4767
  %4785 = vst.msk [vmem:[%s4782 + $0x10] sm:$0xff] %vm788, %v4768
  %4786 = vst.msk [vmem:[%s4782 + $0x18] sm:$0xff] %vm788, %v4769
  // Predicated region
  $region38: #{self_attention_pallas.1} parent=0 // pred_check
    _
  $region39: #{self_attention_pallas.1} parent=0 // pred_check_branch
    %4788 = sbr.rel (0) target = $region41
  $region40: #{self_attention_pallas.1} parent=0 // pred_region
    _
  $region41: #{self_attention_pallas.1} parent=0 // pred_fallthru
    _
  // Predicated region
  $region42: #{self_attention_pallas.1} parent=0 // pred_check
    _
  $region43: #{self_attention_pallas.1} parent=0 // pred_check_branch
    %4790 = sbr.rel (0) target = $region45
  $region44: #{self_attention_pallas.1} parent=0 // pred_region
    _
  $region45: #{self_attention_pallas.1} parent=0 // pred_fallthru
    _

</llo_original>
